<compile_context>
chip_gen: v6e
topology: v6e:2x2x1
jax: 0.10.0
libtpu: 0.0.40
codegen_flags: <defaults>
</compile_context>

<pallas_src>
import functools

import jax
import jax.numpy as jnp
import numpy as np
from jax.experimental import pallas as pl
from jax.experimental.pallas import tpu as pltpu


# rows of the packed per-layer small-vector array (all width D, f32)
V_S_BO, V_S_G, V_S_B, V_C_BQ, V_C_BO, V_C_G, V_C_B, V_F_B2, V_F_G, V_F_B = range(10)
NVEC = 10


# --------------------------- in-kernel helpers ------------------------------

def _layer_norm(x, g, b, eps=1e-5):
    # f32 VPU math (matches nn.LayerNorm eps=1e-5); g/b are [1, D]
    mu = jnp.mean(x, axis=-1, keepdims=True)
    c = x - mu
    var = jnp.mean(c * c, axis=-1, keepdims=True)
    return c * jax.lax.rsqrt(var + eps) * g + b


def _mha(q2, k2, v2, add_mask, H):
    """Multi-head attention batched over the batch dim (heads statically unrolled).

    q2: [BB*Lq, H*Dh] f32 (1/sqrt(Dh) already folded into the Q weights)
    k2: [BB*Lk, H*Dh] f32, v2: [BB*Lk, H*Dh] f32
    add_mask: [BB, Lq, Lk] f32 additive mask (0.0 keep / -1e9 blocked)
    Returns the context [BB*Lq, H*Dh] f32 as one lane-dense value (no VMEM
    scratch, no per-head partial stores).
    """
    BB, Lq, Lk = add_mask.shape
    Dh = q2.shape[-1] // H
    ctx_heads = []
    for h in range(H):
        sl = slice(h * Dh, (h + 1) * Dh)
        qh = q2[:, sl].reshape(BB, Lq, Dh).astype(jnp.bfloat16)
        kh = k2[:, sl].reshape(BB, Lk, Dh).astype(jnp.bfloat16)
        vh = v2[:, sl].reshape(BB, Lk, Dh).astype(jnp.bfloat16)
        # scores over ALL batch elements at once (single batched MXU call)
        s = jnp.einsum("bqd,bkd->bqk", qh, kh,
                       preferred_element_type=jnp.float32)           # [BB,Lq,Lk]
        s = s + add_mask
        s = s - jnp.max(s, axis=-1, keepdims=True)                   # stable softmax
        p = jnp.exp(s)
        p = p * pl.reciprocal(jnp.sum(p, axis=-1, keepdims=True), approx=True)
        ctx = jnp.einsum("bqk,bkd->bqd", p.astype(jnp.bfloat16), vh,
                         preferred_element_type=jnp.float32)          # [BB,Lq,Dh]
        ctx_heads.append(ctx.reshape(BB * Lq, Dh))
    return jnp.concatenate(ctx_heads, axis=-1)                        # [BB*Lq, D]


# -------------------- fused whole-stack decoder kernel ----------------------

def _decoder_stack_kernel(
    # constant-block inputs (resident across the layer axis)
    x0_ref, enc_ref, smask_ref, cmask_ref,
    # per-layer parameters (streamed via the layer grid axis)
    s_wqkv_ref, s_bqkv_ref, s_wo_ref,
    c_wq_ref, c_wkv_ref, c_bkv_ref, c_wo_ref,
    f_w1_ref, f_b1_ref, f_w2_ref,
    vec_ref,
    # output (constant block index over layers -> acts as the layer carry)
    o_ref,
    *, H):
    D = o_ref.shape[-1]
    layer = pl.program_id(1)

    @pl.when(layer == 0)
    def _():
        o_ref[...] = x0_ref[...]              # prime the VMEM-resident carry

    x = o_ref[...]                            # [BB*L, D] f32
    vec = vec_ref[...]                        # [NVEC, D] f32 packed small vectors

    def proj(x_bf, w_ref, bias):
        # bf16 MXU matmul, f32 accumulation, f32 bias add
        return jnp.dot(x_bf, w_ref[...], preferred_element_type=jnp.float32) + bias

    # ---------- masked multi-head self-attention + residual + LayerNorm ----------
    qkv = proj(x.astype(jnp.bfloat16), s_wqkv_ref, s_bqkv_ref[...])   # [BB*L, 3D]
    ctx = _mha(qkv[:, :D], qkv[:, D:2 * D], qkv[:, 2 * D:], smask_ref[...], H)
    attn = proj(ctx.astype(jnp.bfloat16), s_wo_ref, vec[V_S_BO:V_S_BO + 1])
    x = _layer_norm(attn + x, vec[V_S_G:V_S_G + 1], vec[V_S_B:V_S_B + 1])

    # ---------- decoder-encoder cross-attention + residual + LayerNorm -----------
    q = proj(x.astype(jnp.bfloat16), c_wq_ref, vec[V_C_BQ:V_C_BQ + 1])
    # enc_ref is already bf16 and flattened [BB*Lk, D] -> ONE fused K|V matmul
    kv = proj(enc_ref[...], c_wkv_ref, c_bkv_ref[...])                # [BB*Lk, 2D]
    ctx = _mha(q, kv[:, :D], kv[:, D:], cmask_ref[...], H)
    attn = proj(ctx.astype(jnp.bfloat16), c_wo_ref, vec[V_C_BO:V_C_BO + 1])
    x = _layer_norm(attn + x, vec[V_C_G:V_C_G + 1], vec[V_C_B:V_C_B + 1])

    # ---------- position-wise FFN + residual + LayerNorm -------------------------
    hdn = jnp.maximum(proj(x.astype(jnp.bfloat16), f_w1_ref, f_b1_ref[...]), 0.0)
    ff = proj(hdn.astype(jnp.bfloat16), f_w2_ref, vec[V_F_B2:V_F_B2 + 1])
    x = _layer_norm(ff + x, vec[V_F_G:V_F_G + 1], vec[V_F_B:V_F_B + 1])

    o_ref[...] = x                            # carry to next layer (VMEM resident)


def decoder_stack(x0, enc_flat, smask_add, cmask_add, params, *,
                  n_heads, batch_blocks=1):
    """x0: [B*L, D] f32, enc_flat: [B*Lk, D] bf16, masks additive f32."""
    M, D = x0.shape
    B, L, Lk = cmask_add.shape
    NL = params["s_wqkv"].shape[0]
    F = params["f_w1"].shape[2]
    NB = batch_blocks                         # set 2 on v7x (2 TensorCores)
    assert B % NB == 0
    BB = B // NB
    if NB > 1:
        # (8,128) rule: split row blocks must stay 8-aligned on the sublane dim
        assert (BB * L) % 8 == 0 and (BB * Lk) % 8 == 0

    def act_spec(rows):
        return pl.BlockSpec((rows, D), lambda nb, l: (nb, 0))

    def mask_spec(lq, lk):
        return pl.BlockSpec((BB, lq, lk), lambda nb, l: (nb, 0, 0))

    def w_spec(r, c):
        return pl.BlockSpec((None, r, c), lambda nb, l: (l, 0, 0))

    in_specs = [
        act_spec(BB * L),                     # x0 (embedded + PE)
        act_spec(BB * Lk),                    # encoder memory (bf16, flattened)
        mask_spec(L, L),                      # additive self-attn mask
        mask_spec(L, Lk),                     # additive dec-enc mask
        w_spec(D, 3 * D), w_spec(1, 3 * D),   # self-attn fused QKV w / b
        w_spec(D, D),                         # self-attn out-proj w
        w_spec(D, D),                         # cross-attn Q w (scale folded in)
        w_spec(D, 2 * D), w_spec(1, 2 * D),   # cross-attn fused K|V w / b
        w_spec(D, D),                         # cross-attn out-proj w
        w_spec(D, F), w_spec(1, F),           # FFN w1 / b1
        w_spec(F, D),                         # FFN w2
        w_spec(NVEC, D),                      # packed biases + LayerNorm g/b
    ]

    kernel = functools.partial(_decoder_stack_kernel, H=n_heads)

    return pl.pallas_call(
        kernel,
        out_shape=jax.ShapeDtypeStruct((M, D), jnp.float32),
        grid_spec=pltpu.PrefetchScalarGridSpec(
            num_scalar_prefetch=0,
            grid=(NB, NL),                    # (batch blocks, layers)
            in_specs=in_specs,
            out_specs=pl.BlockSpec((BB * L, D), lambda nb, l: (nb, 0)),
        ),
        compiler_params=pltpu.CompilerParams(
            dimension_semantics=("parallel", "arbitrary"),
            # headroom above the 32 MiB scoped default but below v7x's 64 MiB
            vmem_limit_bytes=48 * 1024 * 1024,
        ),
        # TODO(synk): at production sizes, mark the constant-index inputs with
        # pipeline_mode=pl.Buffered(1) so they are not double-buffered.
    )(
        x0, enc_flat, smask_add, cmask_add,
        params["s_wqkv"], params["s_bqkv"], params["s_wo"],
        params["c_wq"], params["c_wkv"], params["c_bkv"], params["c_wo"],
        params["f_w1"], params["f_b1"], params["f_w2"],
        params["vecs"],
    )


# ------------------------------ model pieces --------------------------------

def sinusoid_pe(max_len, d_model):
    pos = np.arange(max_len, dtype=np.float32)[:, None]
    div = np.exp(np.arange(0, d_model, 2, dtype=np.float32)
                 * (-np.log(10000.0) / d_model))
    pe = np.zeros((max_len, d_model), np.float32)
    pe[:, 0::2] = np.sin(pos * div)
    pe[:, 1::2] = np.cos(pos * div)
    return jnp.asarray(pe)


def init_params(key, vocab_size, d_model, d_ff, n_layers, n_heads,
                target_pad_idx, max_len):
    D, F, NL = d_model, d_ff, n_layers
    Dh = D // n_heads
    scale = 1.0 / float(np.sqrt(Dh))
    keys = jax.random.split(key, 8)
    s = 0.02

    def w(k, shape):
        return jax.random.normal(k, shape, jnp.float32) * s

    emb = w(keys[0], (vocab_size, D))
    emb = emb.at[target_pad_idx].set(0.0)     # padding_idx row is zero

    # Fold the 1/sqrt(Dh) attention scale into the Q projections (zero runtime
    # cost).  NOTE: a nonzero Q bias would need the same scaling (zero here).
    s_wqkv = w(keys[1], (NL, D, 3 * D)).at[:, :, :D].multiply(scale)
    c_wq = w(keys[3], (NL, D, D)) * scale

    # packed per-layer D-wide vectors: out-proj biases, LN gamma/beta, etc.
    vecs = jnp.zeros((NL, NVEC, D), jnp.float32)
    vecs = vecs.at[:, V_S_G].set(1.0).at[:, V_C_G].set(1.0).at[:, V_F_G].set(1.0)

    bf = jnp.bfloat16
    return dict(
        emb=emb,
        pe=sinusoid_pe(max_len, D),
        s_wqkv=s_wqkv.astype(bf),
        s_bqkv=jnp.zeros((NL, 1, 3 * D), jnp.float32),
        s_wo=w(keys[2], (NL, D, D)).astype(bf),
        c_wq=c_wq.astype(bf),
        c_wkv=w(keys[4], (NL, D, 2 * D)).astype(bf),
        c_bkv=jnp.zeros((NL, 1, 2 * D), jnp.float32),
        c_wo=w(keys[5], (NL, D, D)).astype(bf),
        f_w1=w(keys[6], (NL, D, F)).astype(bf),
        f_b1=jnp.zeros((NL, 1, F), jnp.float32),
        f_w2=w(keys[7], (NL, F, D)).astype(bf),
        vecs=vecs,
    )


def decoder_forward(params, dec_inputs, enc_inputs_node, enc_outputs,
                    target_pad_idx, node_pad_idx, n_heads, batch_blocks=1):
    B, L = dec_inputs.shape
    D = params["emb"].shape[1]

    # ---- glue: embedding + positional encoding (eval mode) ----
    # TODO(synk): dropout inside DecoderPositionalEncoding omitted (eval mode).
    x0 = params["emb"][dec_inputs] + params["pe"][:L][None, :, :]          # [B,L,D]

    # ---- glue: additive attention masks (0.0 keep / -1e9 blocked) ----
    pad_mask = (dec_inputs == target_pad_idx)[:, None, :].astype(jnp.int32)  # [B,1,L]
    subseq = jnp.triu(jnp.ones((L, L), jnp.int32), k=1)[None, :, :]          # [1,L,L]
    smask_add = jnp.where((pad_mask + subseq) > 0, -1e9, 0.0).astype(jnp.float32)

    _, mcl, mpl = enc_inputs_node.shape
    node_len = mpl + 1 - jnp.sum(
        (enc_inputs_node == node_pad_idx).astype(jnp.int32), axis=2)         # [B,mcl]
    enc_blocked = jnp.broadcast_to((node_len == 1)[:, None, :], (B, L, mcl))
    cmask_add = jnp.where(enc_blocked, -1e9, 0.0).astype(jnp.float32)        # [B,L,mcl]

    # pad the key length to a multiple of 8 (sublane alignment); padded keys
    # are masked out so the result is unchanged
    Lk = mcl
    Lk_pad = ((Lk + 7) // 8) * 8
    if Lk_pad != Lk:
        enc_outputs = jnp.pad(enc_outputs, ((0, 0), (0, Lk_pad - Lk), (0, 0)))
        cmask_add = jnp.pad(cmask_add, ((0, 0), (0, 0), (0, Lk_pad - Lk)),
                            constant_values=-1e9)

    # ---- hot path: single fused Pallas kernel over all decoder layers ----
    out = decoder_stack(
        x0.reshape(B * L, D).astype(jnp.float32),
        enc_outputs.reshape(B * Lk_pad, D).astype(jnp.bfloat16),  # bf16 cast ONCE
        smask_add, cmask_add, params,
        n_heads=n_heads, batch_blocks=batch_blocks)
    return out.reshape(B, L, D)


# --------------------------------- main --------------------------------------

if __name__ == "__main__":
    # small, forward-consistent shapes
    B = 2
    tgt_len = 8            # dec_inputs [B, tgt_len]
    d_model = 32
    n_heads = 4
    d_ff = 64
    n_layers = 2
    vocab = 20
    node_vocab = 12
    max_contexts_len = 10
    max_path_len = 5
    max_target_len = 16
    target_pad_idx = 0
    node_pad_idx = 0

    key = jax.random.PRNGKey(0)
    k_par, k_dec, k_node, k_enc = jax.random.split(key, 4)

    params = init_params(k_par, vocab, d_model, d_ff, n_layers, n_heads,
                         target_pad_idx, max_target_len)

    dec_inputs = jax.random.randint(k_dec, (B, tgt_len), 1, vocab, dtype=jnp.int32)
    dec_inputs = dec_inputs.at[:, -2:].set(target_pad_idx)    # exercise pad mask

    enc_inputs_node = jax.random.randint(
        k_node, (B, max_contexts_len, max_path_len), 1, node_vocab, dtype=jnp.int32)
    # a few fully-padded context rows -> node_len == 1 -> masked in dec-enc attn
    enc_inputs_node = enc_inputs_node.at[:, -3:, :].set(node_pad_idx)

    enc_outputs = jax.random.normal(
        k_enc, (B, max_contexts_len, d_model), jnp.float32)

    fwd = jax.jit(functools.partial(
        decoder_forward,
        target_pad_idx=target_pad_idx,
        node_pad_idx=node_pad_idx,
        n_heads=n_heads,
        batch_blocks=1))   # set 2 on v7x (2 TensorCores) when B is even

    out = fwd(params, dec_inputs, enc_inputs_node, enc_outputs)
    out = jax.block_until_ready(out)
    assert out.shape == (B, tgt_len, d_model)
    assert bool(jnp.all(jnp.isfinite(out)))
    print("KERNEL_OK")
</pallas_src>

<mosaic_0001>
module attributes {stable_mosaic.version = 11 : i64} {
  func.func @_decoder_stack_kernel(%arg0: i32, %arg1: i32, %arg2: memref<16x32xf32, #tpu.memory_space<vmem>>, %arg3: memref<32x32xbf16, #tpu.memory_space<vmem>>, %arg4: memref<2x8x8xf32, #tpu.memory_space<vmem>>, %arg5: memref<2x8x16xf32, #tpu.memory_space<vmem>>, %arg6: memref<1x32x96xbf16, #tpu.memory_space<vmem>>, %arg7: memref<1x1x96xf32, #tpu.memory_space<vmem>>, %arg8: memref<1x32x32xbf16, #tpu.memory_space<vmem>>, %arg9: memref<1x32x32xbf16, #tpu.memory_space<vmem>>, %arg10: memref<1x32x64xbf16, #tpu.memory_space<vmem>>, %arg11: memref<1x1x64xf32, #tpu.memory_space<vmem>>, %arg12: memref<1x32x32xbf16, #tpu.memory_space<vmem>>, %arg13: memref<1x32x64xbf16, #tpu.memory_space<vmem>>, %arg14: memref<1x1x64xf32, #tpu.memory_space<vmem>>, %arg15: memref<1x64x32xbf16, #tpu.memory_space<vmem>>, %arg16: memref<1x10x32xf32, #tpu.memory_space<vmem>>, %arg17: memref<16x32xf32, #tpu.memory_space<vmem>>) attributes {dimension_semantics = [#tpu.dimension_semantics<parallel>, #tpu.dimension_semantics<arbitrary>], iteration_bounds = array<i64: 1, 2>, scalar_prefetch = 0 : i64, scratch_operands = 0 : i64, tpu.core_type = #tpu.core_type<tc>, window_params = [{transform_indices = @transform_0, window_bounds = array<i64: 16, 32>}, {transform_indices = @transform_1, window_bounds = array<i64: 32, 32>}, {transform_indices = @transform_2, window_bounds = array<i64: 2, 8, 8>}, {transform_indices = @transform_3, window_bounds = array<i64: 2, 8, 16>}, {transform_indices = @transform_4, window_bounds = array<i64: 1, 32, 96>}, {transform_indices = @transform_5, window_bounds = array<i64: 1, 1, 96>}, {transform_indices = @transform_6, window_bounds = array<i64: 1, 32, 32>}, {transform_indices = @transform_7, window_bounds = array<i64: 1, 32, 32>}, {transform_indices = @transform_8, window_bounds = array<i64: 1, 32, 64>}, {transform_indices = @transform_9, window_bounds = array<i64: 1, 1, 64>}, {transform_indices = @transform_10, window_bounds = array<i64: 1, 32, 32>}, {transform_indices = @transform_11, window_bounds = array<i64: 1, 32, 64>}, {transform_indices = @transform_12, window_bounds = array<i64: 1, 1, 64>}, {transform_indices = @transform_13, window_bounds = array<i64: 1, 64, 32>}, {transform_indices = @transform_14, window_bounds = array<i64: 1, 10, 32>}, {transform_indices = @transform_15, window_bounds = array<i64: 16, 32>}]} {
    %c0_i32 = arith.constant 0 : i32
    %0 = arith.cmpi eq, %arg1, %c0_i32 : i32
    %1 = arith.extui %0 : i1 to i32
    %c0_i32_0 = arith.constant 0 : i32
    %2 = arith.cmpi ne, %1, %c0_i32_0 : i32
    scf.if %2 {
      %c0_99 = arith.constant 0 : index
      %c0_100 = arith.constant 0 : index
      %331 = vector.load %arg2[%c0_99, %c0_100] : memref<16x32xf32, #tpu.memory_space<vmem>>, vector<16x32xf32>
      %c0_101 = arith.constant 0 : index
      %c0_102 = arith.constant 0 : index
      %332 = vector.load %arg17[%c0_101, %c0_102] : memref<16x32xf32, #tpu.memory_space<vmem>>, vector<16x32xf32>
      tpu.vector_store %arg17[%c0_101, %c0_102], %331 {strides = array<i32>} : memref<16x32xf32, #tpu.memory_space<vmem>>, vector<16x32xf32>,
    } else {
    }
    %c0 = arith.constant 0 : index
    %c0_1 = arith.constant 0 : index
    %3 = vector.load %arg17[%c0, %c0_1] : memref<16x32xf32, #tpu.memory_space<vmem>>, vector<16x32xf32>
    %c0_2 = arith.constant 0 : index
    %c0_3 = arith.constant 0 : index
    %c0_4 = arith.constant 0 : index
    %4 = vector.load %arg16[%c0_2, %c0_3, %c0_4] : memref<1x10x32xf32, #tpu.memory_space<vmem>>, vector<1x10x32xf32>
    %5 = vector.shape_cast %4 : vector<1x10x32xf32> to vector<10x32xf32>
    %6 = arith.truncf %3 : vector<16x32xf32> to vector<16x32xbf16>
    %c0_5 = arith.constant 0 : index
    %c0_6 = arith.constant 0 : index
    %c0_7 = arith.constant 0 : index
    %7 = vector.load %arg7[%c0_5, %c0_6, %c0_7] : memref<1x1x96xf32, #tpu.memory_space<vmem>>, vector<1x1x96xf32>
    %8 = vector.shape_cast %7 : vector<1x1x96xf32> to vector<1x96xf32>
    %c0_8 = arith.constant 0 : index
    %c0_9 = arith.constant 0 : index
    %c0_10 = arith.constant 0 : index
    %9 = vector.load %arg6[%c0_8, %c0_9, %c0_10] : memref<1x32x96xbf16, #tpu.memory_space<vmem>>, vector<1x32x96xbf16>
    %10 = vector.shape_cast %9 : vector<1x32x96xbf16> to vector<32x96xbf16>
    %cst = arith.constant dense<0.000000e+00> : vector<16x96xf32>
    %11 = tpu.matmul %6, %10, %cst {dimension_numbers = #tpu.dot_dimension_numbers<[1], [0], [0], [1], [0, 0, 1, 1], [], []>} : vector<16x32xbf16>, vector<32x96xbf16>, vector<16x96xf32> -> vector<16x96xf32>
    %12 = vector.broadcast %8 : vector<1x96xf32> to vector<16x96xf32>
    %13 = arith.addf %11, %12 : vector<16x96xf32>
    %14 = vector.extract_strided_slice %13 {offsets = [0, 0], sizes = [16, 32], strides = [1, 1]} : vector<16x96xf32> to vector<16x32xf32>
    %15 = vector.extract_strided_slice %13 {offsets = [0, 32], sizes = [16, 32], strides = [1, 1]} : vector<16x96xf32> to vector<16x32xf32>
    %16 = vector.extract_strided_slice %13 {offsets = [0, 64], sizes = [16, 32], strides = [1, 1]} : vector<16x96xf32> to vector<16x32xf32>
    %c0_11 = arith.constant 0 : index
    %c0_12 = arith.constant 0 : index
    %c0_13 = arith.constant 0 : index
    %17 = vector.load %arg4[%c0_11, %c0_12, %c0_13] : memref<2x8x8xf32, #tpu.memory_space<vmem>>, vector<2x8x8xf32>
    %18 = vector.extract_strided_slice %14 {offsets = [0, 0], sizes = [16, 8], strides = [1, 1]} : vector<16x32xf32> to vector<16x8xf32>
    %19 = vector.shape_cast %18 : vector<16x8xf32> to vector<2x8x8xf32>
    %20 = arith.truncf %19 : vector<2x8x8xf32> to vector<2x8x8xbf16>
    %21 = vector.extract_strided_slice %15 {offsets = [0, 0], sizes = [16, 8], strides = [1, 1]} : vector<16x32xf32> to vector<16x8xf32>
    %22 = vector.shape_cast %21 : vector<16x8xf32> to vector<2x8x8xf32>
    %23 = arith.truncf %22 : vector<2x8x8xf32> to vector<2x8x8xbf16>
    %24 = vector.extract_strided_slice %16 {offsets = [0, 0], sizes = [16, 8], strides = [1, 1]} : vector<16x32xf32> to vector<16x8xf32>
    %25 = vector.shape_cast %24 : vector<16x8xf32> to vector<2x8x8xf32>
    %26 = arith.truncf %25 : vector<2x8x8xf32> to vector<2x8x8xbf16>
    "tpu.trace_start"() <{level = 10 : i32, message = "bqd,bkd->bqk"}> : () -> ()
    %cst_14 = arith.constant dense<0.000000e+00> : vector<2x8x8xf32>
    %27 = tpu.matmul %20, %23, %cst_14 {dimension_numbers = #tpu.dot_dimension_numbers<[2], [2], [1], [1], [0, 0, 0, 1, 1, 1], [0], [0]>} : vector<2x8x8xbf16>, vector<2x8x8xbf16>, vector<2x8x8xf32> -> vector<2x8x8xf32>
    "tpu.trace_stop"() : () -> ()
    %28 = arith.addf %27, %17 : vector<2x8x8xf32>
    %cst_15 = arith.constant dense<0xFF800000> : vector<2x8xf32>
    %29 = vector.multi_reduction <maximumf>, %28, %cst_15 [2] : vector<2x8x8xf32> to vector<2x8xf32>
    %30 = vector.shape_cast %29 : vector<2x8xf32> to vector<2x8x1xf32>
    %31 = vector.broadcast %30 : vector<2x8x1xf32> to vector<2x8x8xf32>
    %32 = arith.subf %28, %31 : vector<2x8x8xf32>
    %33 = math.exp %32 : vector<2x8x8xf32>
    %cst_16 = arith.constant dense<0.000000e+00> : vector<2x8xf32>
    %34 = vector.multi_reduction <add>, %33, %cst_16 [2] : vector<2x8x8xf32> to vector<2x8xf32>
    %35 = vector.shape_cast %34 : vector<2x8xf32> to vector<2x8x1xf32>
    %36 = tpu.reciprocal %35 {approx = true} : vector<2x8x1xf32> -> vector<2x8x1xf32>
    %37 = vector.broadcast %36 : vector<2x8x1xf32> to vector<2x8x8xf32>
    %38 = arith.mulf %33, %37 : vector<2x8x8xf32>
    %39 = arith.truncf %38 : vector<2x8x8xf32> to vector<2x8x8xbf16>
    "tpu.trace_start"() <{level = 10 : i32, message = "bqk,bkd->bqd"}> : () -> ()
    %cst_17 = arith.constant dense<0.000000e+00> : vector<2x8x8xf32>
    %40 = tpu.matmul %39, %26, %cst_17 {dimension_numbers = #tpu.dot_dimension_numbers<[2], [1], [1], [2], [0, 0, 0, 1, 1, 2], [0], [0]>} : vector<2x8x8xbf16>, vector<2x8x8xbf16>, vector<2x8x8xf32> -> vector<2x8x8xf32>
    "tpu.trace_stop"() : () -> ()
    %41 = vector.shape_cast %40 : vector<2x8x8xf32> to vector<16x8xf32>
    %42 = vector.extract_strided_slice %14 {offsets = [0, 8], sizes = [16, 8], strides = [1, 1]} : vector<16x32xf32> to vector<16x8xf32>
    %43 = vector.shape_cast %42 : vector<16x8xf32> to vector<2x8x8xf32>
    %44 = arith.truncf %43 : vector<2x8x8xf32> to vector<2x8x8xbf16>
    %45 = vector.extract_strided_slice %15 {offsets = [0, 8], sizes = [16, 8], strides = [1, 1]} : vector<16x32xf32> to vector<16x8xf32>
    %46 = vector.shape_cast %45 : vector<16x8xf32> to vector<2x8x8xf32>
    %47 = arith.truncf %46 : vector<2x8x8xf32> to vector<2x8x8xbf16>
    %48 = vector.extract_strided_slice %16 {offsets = [0, 8], sizes = [16, 8], strides = [1, 1]} : vector<16x32xf32> to vector<16x8xf32>
    %49 = vector.shape_cast %48 : vector<16x8xf32> to vector<2x8x8xf32>
    %50 = arith.truncf %49 : vector<2x8x8xf32> to vector<2x8x8xbf16>
    "tpu.trace_start"() <{level = 10 : i32, message = "bqd,bkd->bqk"}> : () -> ()
    %cst_18 = arith.constant dense<0.000000e+00> : vector<2x8x8xf32>
    %51 = tpu.matmul %44, %47, %cst_18 {dimension_numbers = #tpu.dot_dimension_numbers<[2], [2], [1], [1], [0, 0, 0, 1, 1, 1], [0], [0]>} : vector<2x8x8xbf16>, vector<2x8x8xbf16>, vector<2x8x8xf32> -> vector<2x8x8xf32>
    "tpu.trace_stop"() : () -> ()
    %52 = arith.addf %51, %17 : vector<2x8x8xf32>
    %cst_19 = arith.constant dense<0xFF800000> : vector<2x8xf32>
    %53 = vector.multi_reduction <maximumf>, %52, %cst_19 [2] : vector<2x8x8xf32> to vector<2x8xf32>
    %54 = vector.shape_cast %53 : vector<2x8xf32> to vector<2x8x1xf32>
    %55 = vector.broadcast %54 : vector<2x8x1xf32> to vector<2x8x8xf32>
    %56 = arith.subf %52, %55 : vector<2x8x8xf32>
    %57 = math.exp %56 : vector<2x8x8xf32>
    %cst_20 = arith.constant dense<0.000000e+00> : vector<2x8xf32>
    %58 = vector.multi_reduction <add>, %57, %cst_20 [2] : vector<2x8x8xf32> to vector<2x8xf32>
    %59 = vector.shape_cast %58 : vector<2x8xf32> to vector<2x8x1xf32>
    %60 = tpu.reciprocal %59 {approx = true} : vector<2x8x1xf32> -> vector<2x8x1xf32>
    %61 = vector.broadcast %60 : vector<2x8x1xf32> to vector<2x8x8xf32>
    %62 = arith.mulf %57, %61 : vector<2x8x8xf32>
    %63 = arith.truncf %62 : vector<2x8x8xf32> to vector<2x8x8xbf16>
    "tpu.trace_start"() <{level = 10 : i32, message = "bqk,bkd->bqd"}> : () -> ()
    %cst_21 = arith.constant dense<0.000000e+00> : vector<2x8x8xf32>
    %64 = tpu.matmul %63, %50, %cst_21 {dimension_numbers = #tpu.dot_dimension_numbers<[2], [1], [1], [2], [0, 0, 0, 1, 1, 2], [0], [0]>} : vector<2x8x8xbf16>, vector<2x8x8xbf16>, vector<2x8x8xf32> -> vector<2x8x8xf32>
    "tpu.trace_stop"() : () -> ()
    %65 = vector.shape_cast %64 : vector<2x8x8xf32> to vector<16x8xf32>
    %66 = vector.extract_strided_slice %14 {offsets = [0, 16], sizes = [16, 8], strides = [1, 1]} : vector<16x32xf32> to vector<16x8xf32>
    %67 = vector.shape_cast %66 : vector<16x8xf32> to vector<2x8x8xf32>
    %68 = arith.truncf %67 : vector<2x8x8xf32> to vector<2x8x8xbf16>
    %69 = vector.extract_strided_slice %15 {offsets = [0, 16], sizes = [16, 8], strides = [1, 1]} : vector<16x32xf32> to vector<16x8xf32>
    %70 = vector.shape_cast %69 : vector<16x8xf32> to vector<2x8x8xf32>
    %71 = arith.truncf %70 : vector<2x8x8xf32> to vector<2x8x8xbf16>
    %72 = vector.extract_strided_slice %16 {offsets = [0, 16], sizes = [16, 8], strides = [1, 1]} : vector<16x32xf32> to vector<16x8xf32>
    %73 = vector.shape_cast %72 : vector<16x8xf32> to vector<2x8x8xf32>
    %74 = arith.truncf %73 : vector<2x8x8xf32> to vector<2x8x8xbf16>
    "tpu.trace_start"() <{level = 10 : i32, message = "bqd,bkd->bqk"}> : () -> ()
    %cst_22 = arith.constant dense<0.000000e+00> : vector<2x8x8xf32>
    %75 = tpu.matmul %68, %71, %cst_22 {dimension_numbers = #tpu.dot_dimension_numbers<[2], [2], [1], [1], [0, 0, 0, 1, 1, 1], [0], [0]>} : vector<2x8x8xbf16>, vector<2x8x8xbf16>, vector<2x8x8xf32> -> vector<2x8x8xf32>
    "tpu.trace_stop"() : () -> ()
    %76 = arith.addf %75, %17 : vector<2x8x8xf32>
    %cst_23 = arith.constant dense<0xFF800000> : vector<2x8xf32>
    %77 = vector.multi_reduction <maximumf>, %76, %cst_23 [2] : vector<2x8x8xf32> to vector<2x8xf32>
    %78 = vector.shape_cast %77 : vector<2x8xf32> to vector<2x8x1xf32>
    %79 = vector.broadcast %78 : vector<2x8x1xf32> to vector<2x8x8xf32>
    %80 = arith.subf %76, %79 : vector<2x8x8xf32>
    %81 = math.exp %80 : vector<2x8x8xf32>
    %cst_24 = arith.constant dense<0.000000e+00> : vector<2x8xf32>
    %82 = vector.multi_reduction <add>, %81, %cst_24 [2] : vector<2x8x8xf32> to vector<2x8xf32>
    %83 = vector.shape_cast %82 : vector<2x8xf32> to vector<2x8x1xf32>
    %84 = tpu.reciprocal %83 {approx = true} : vector<2x8x1xf32> -> vector<2x8x1xf32>
    %85 = vector.broadcast %84 : vector<2x8x1xf32> to vector<2x8x8xf32>
    %86 = arith.mulf %81, %85 : vector<2x8x8xf32>
    %87 = arith.truncf %86 : vector<2x8x8xf32> to vector<2x8x8xbf16>
    "tpu.trace_start"() <{level = 10 : i32, message = "bqk,bkd->bqd"}> : () -> ()
    %cst_25 = arith.constant dense<0.000000e+00> : vector<2x8x8xf32>
    %88 = tpu.matmul %87, %74, %cst_25 {dimension_numbers = #tpu.dot_dimension_numbers<[2], [1], [1], [2], [0, 0, 0, 1, 1, 2], [0], [0]>} : vector<2x8x8xbf16>, vector<2x8x8xbf16>, vector<2x8x8xf32> -> vector<2x8x8xf32>
    "tpu.trace_stop"() : () -> ()
    %89 = vector.shape_cast %88 : vector<2x8x8xf32> to vector<16x8xf32>
    %90 = vector.extract_strided_slice %14 {offsets = [0, 24], sizes = [16, 8], strides = [1, 1]} : vector<16x32xf32> to vector<16x8xf32>
    %91 = vector.shape_cast %90 : vector<16x8xf32> to vector<2x8x8xf32>
    %92 = arith.truncf %91 : vector<2x8x8xf32> to vector<2x8x8xbf16>
    %93 = vector.extract_strided_slice %15 {offsets = [0, 24], sizes = [16, 8], strides = [1, 1]} : vector<16x32xf32> to vector<16x8xf32>
    %94 = vector.shape_cast %93 : vector<16x8xf32> to vector<2x8x8xf32>
    %95 = arith.truncf %94 : vector<2x8x8xf32> to vector<2x8x8xbf16>
    %96 = vector.extract_strided_slice %16 {offsets = [0, 24], sizes = [16, 8], strides = [1, 1]} : vector<16x32xf32> to vector<16x8xf32>
    %97 = vector.shape_cast %96 : vector<16x8xf32> to vector<2x8x8xf32>
    %98 = arith.truncf %97 : vector<2x8x8xf32> to vector<2x8x8xbf16>
    "tpu.trace_start"() <{level = 10 : i32, message = "bqd,bkd->bqk"}> : () -> ()
    %cst_26 = arith.constant dense<0.000000e+00> : vector<2x8x8xf32>
    %99 = tpu.matmul %92, %95, %cst_26 {dimension_numbers = #tpu.dot_dimension_numbers<[2], [2], [1], [1], [0, 0, 0, 1, 1, 1], [0], [0]>} : vector<2x8x8xbf16>, vector<2x8x8xbf16>, vector<2x8x8xf32> -> vector<2x8x8xf32>
    "tpu.trace_stop"() : () -> ()
    %100 = arith.addf %99, %17 : vector<2x8x8xf32>
    %cst_27 = arith.constant dense<0xFF800000> : vector<2x8xf32>
    %101 = vector.multi_reduction <maximumf>, %100, %cst_27 [2] : vector<2x8x8xf32> to vector<2x8xf32>
    %102 = vector.shape_cast %101 : vector<2x8xf32> to vector<2x8x1xf32>
    %103 = vector.broadcast %102 : vector<2x8x1xf32> to vector<2x8x8xf32>
    %104 = arith.subf %100, %103 : vector<2x8x8xf32>
    %105 = math.exp %104 : vector<2x8x8xf32>
    %cst_28 = arith.constant dense<0.000000e+00> : vector<2x8xf32>
    %106 = vector.multi_reduction <add>, %105, %cst_28 [2] : vector<2x8x8xf32> to vector<2x8xf32>
    %107 = vector.shape_cast %106 : vector<2x8xf32> to vector<2x8x1xf32>
    %108 = tpu.reciprocal %107 {approx = true} : vector<2x8x1xf32> -> vector<2x8x1xf32>
    %109 = vector.broadcast %108 : vector<2x8x1xf32> to vector<2x8x8xf32>
    %110 = arith.mulf %105, %109 : vector<2x8x8xf32>
    %111 = arith.truncf %110 : vector<2x8x8xf32> to vector<2x8x8xbf16>
    "tpu.trace_start"() <{level = 10 : i32, message = "bqk,bkd->bqd"}> : () -> ()
    %cst_29 = arith.constant dense<0.000000e+00> : vector<2x8x8xf32>
    %112 = tpu.matmul %111, %98, %cst_29 {dimension_numbers = #tpu.dot_dimension_numbers<[2], [1], [1], [2], [0, 0, 0, 1, 1, 2], [0], [0]>} : vector<2x8x8xbf16>, vector<2x8x8xbf16>, vector<2x8x8xf32> -> vector<2x8x8xf32>
    "tpu.trace_stop"() : () -> ()
    %113 = vector.shape_cast %112 : vector<2x8x8xf32> to vector<16x8xf32>
    %114 = tpu.concatenate %41, %65, %89, %113 in 1 : vector<16x8xf32>, vector<16x8xf32>, vector<16x8xf32>, vector<16x8xf32> -> vector<16x32xf32>
    %115 = arith.truncf %114 : vector<16x32xf32> to vector<16x32xbf16>
    %116 = vector.extract_strided_slice %5 {offsets = [0, 0], sizes = [1, 32], strides = [1, 1]} : vector<10x32xf32> to vector<1x32xf32>
    %c0_30 = arith.constant 0 : index
    %c0_31 = arith.constant 0 : index
    %c0_32 = arith.constant 0 : index
    %117 = vector.load %arg8[%c0_30, %c0_31, %c0_32] : memref<1x32x32xbf16, #tpu.memory_space<vmem>>, vector<1x32x32xbf16>
    %118 = vector.shape_cast %117 : vector<1x32x32xbf16> to vector<32x32xbf16>
    %cst_33 = arith.constant dense<0.000000e+00> : vector<16x32xf32>
    %119 = tpu.matmul %115, %118, %cst_33 {dimension_numbers = #tpu.dot_dimension_numbers<[1], [0], [0], [1], [0, 0, 1, 1], [], []>} : vector<16x32xbf16>, vector<32x32xbf16>, vector<16x32xf32> -> vector<16x32xf32>
    %120 = vector.broadcast %116 : vector<1x32xf32> to vector<16x32xf32>
    %121 = arith.addf %119, %120 : vector<16x32xf32>
    %122 = arith.addf %121, %3 : vector<16x32xf32>
    %123 = vector.extract_strided_slice %5 {offsets = [1, 0], sizes = [1, 32], strides = [1, 1]} : vector<10x32xf32> to vector<1x32xf32>
    %124 = vector.extract_strided_slice %5 {offsets = [2, 0], sizes = [1, 32], strides = [1, 1]} : vector<10x32xf32> to vector<1x32xf32>
    %cst_34 = arith.constant dense<0.000000e+00> : vector<16xf32>
    %125 = vector.multi_reduction <add>, %122, %cst_34 [1] : vector<16x32xf32> to vector<16xf32>
    %126 = vector.shape_cast %125 : vector<16xf32> to vector<16x1xf32>
    %cst_35 = arith.constant 3.200000e+01 : f32
    %127 = vector.broadcast %cst_35 : f32 to vector<16x1xf32>
    %128 = arith.divf %126, %127 : vector<16x1xf32>
    %129 = vector.broadcast %128 : vector<16x1xf32> to vector<16x32xf32>
    %130 = arith.subf %122, %129 : vector<16x32xf32>
    %131 = arith.mulf %130, %130 : vector<16x32xf32>
    %cst_36 = arith.constant dense<0.000000e+00> : vector<16xf32>
    %132 = vector.multi_reduction <add>, %131, %cst_36 [1] : vector<16x32xf32> to vector<16xf32>
    %133 = vector.shape_cast %132 : vector<16xf32> to vector<16x1xf32>
    %cst_37 = arith.constant 3.200000e+01 : f32
    %134 = vector.broadcast %cst_37 : f32 to vector<16x1xf32>
    %135 = arith.divf %133, %134 : vector<16x1xf32>
    %cst_38 = arith.constant 9.99999974E-6 : f32
    %136 = vector.broadcast %cst_38 : f32 to vector<16x1xf32>
    %137 = arith.addf %135, %136 : vector<16x1xf32>
    %138 = math.rsqrt %137 : vector<16x1xf32>
    %139 = vector.broadcast %138 : vector<16x1xf32> to vector<16x32xf32>
    %140 = arith.mulf %130, %139 : vector<16x32xf32>
    %141 = vector.broadcast %123 : vector<1x32xf32> to vector<16x32xf32>
    %142 = arith.mulf %140, %141 : vector<16x32xf32>
    %143 = vector.broadcast %124 : vector<1x32xf32> to vector<16x32xf32>
    %144 = arith.addf %142, %143 : vector<16x32xf32>
    %145 = arith.truncf %144 : vector<16x32xf32> to vector<16x32xbf16>
    %146 = vector.extract_strided_slice %5 {offsets = [3, 0], sizes = [1, 32], strides = [1, 1]} : vector<10x32xf32> to vector<1x32xf32>
    %c0_39 = arith.constant 0 : index
    %c0_40 = arith.constant 0 : index
    %c0_41 = arith.constant 0 : index
    %147 = vector.load %arg9[%c0_39, %c0_40, %c0_41] : memref<1x32x32xbf16, #tpu.memory_space<vmem>>, vector<1x32x32xbf16>
    %148 = vector.shape_cast %147 : vector<1x32x32xbf16> to vector<32x32xbf16>
    %cst_42 = arith.constant dense<0.000000e+00> : vector<16x32xf32>
    %149 = tpu.matmul %145, %148, %cst_42 {dimension_numbers = #tpu.dot_dimension_numbers<[1], [0], [0], [1], [0, 0, 1, 1], [], []>} : vector<16x32xbf16>, vector<32x32xbf16>, vector<16x32xf32> -> vector<16x32xf32>
    %150 = vector.broadcast %146 : vector<1x32xf32> to vector<16x32xf32>
    %151 = arith.addf %149, %150 : vector<16x32xf32>
    %c0_43 = arith.constant 0 : index
    %c0_44 = arith.constant 0 : index
    %152 = vector.load %arg3[%c0_43, %c0_44] : memref<32x32xbf16, #tpu.memory_space<vmem>>, vector<32x32xbf16>
    %c0_45 = arith.constant 0 : index
    %c0_46 = arith.constant 0 : index
    %c0_47 = arith.constant 0 : index
    %153 = vector.load %arg11[%c0_45, %c0_46, %c0_47] : memref<1x1x64xf32, #tpu.memory_space<vmem>>, vector<1x1x64xf32>
    %154 = vector.shape_cast %153 : vector<1x1x64xf32> to vector<1x64xf32>
    %c0_48 = arith.constant 0 : index
    %c0_49 = arith.constant 0 : index
    %c0_50 = arith.constant 0 : index
    %155 = vector.load %arg10[%c0_48, %c0_49, %c0_50] : memref<1x32x64xbf16, #tpu.memory_space<vmem>>, vector<1x32x64xbf16>
    %156 = vector.shape_cast %155 : vector<1x32x64xbf16> to vector<32x64xbf16>
    %cst_51 = arith.constant dense<0.000000e+00> : vector<32x64xf32>
    %157 = tpu.matmul %152, %156, %cst_51 {dimension_numbers = #tpu.dot_dimension_numbers<[1], [0], [0], [1], [0, 0, 1, 1], [], []>} : vector<32x32xbf16>, vector<32x64xbf16>, vector<32x64xf32> -> vector<32x64xf32>
    %158 = vector.broadcast %154 : vector<1x64xf32> to vector<32x64xf32>
    %159 = arith.addf %157, %158 : vector<32x64xf32>
    %160 = vector.extract_strided_slice %159 {offsets = [0, 0], sizes = [32, 32], strides = [1, 1]} : vector<32x64xf32> to vector<32x32xf32>
    %161 = vector.extract_strided_slice %159 {offsets = [0, 32], sizes = [32, 32], strides = [1, 1]} : vector<32x64xf32> to vector<32x32xf32>
    %c0_52 = arith.constant 0 : index
    %c0_53 = arith.constant 0 : index
    %c0_54 = arith.constant 0 : index
    %162 = vector.load %arg5[%c0_52, %c0_53, %c0_54] : memref<2x8x16xf32, #tpu.memory_space<vmem>>, vector<2x8x16xf32>
    %163 = vector.extract_strided_slice %151 {offsets = [0, 0], sizes = [16, 8], strides = [1, 1]} : vector<16x32xf32> to vector<16x8xf32>
    %164 = vector.shape_cast %163 : vector<16x8xf32> to vector<2x8x8xf32>
    %165 = arith.truncf %164 : vector<2x8x8xf32> to vector<2x8x8xbf16>
    %166 = vector.extract_strided_slice %160 {offsets = [0, 0], sizes = [32, 8], strides = [1, 1]} : vector<32x32xf32> to vector<32x8xf32>
    %167 = vector.shape_cast %166 : vector<32x8xf32> to vector<2x16x8xf32>
    %168 = arith.truncf %167 : vector<2x16x8xf32> to vector<2x16x8xbf16>
    %169 = vector.extract_strided_slice %161 {offsets = [0, 0], sizes = [32, 8], strides = [1, 1]} : vector<32x32xf32> to vector<32x8xf32>
    %170 = vector.shape_cast %169 : vector<32x8xf32> to vector<2x16x8xf32>
    %171 = arith.truncf %170 : vector<2x16x8xf32> to vector<2x16x8xbf16>
    "tpu.trace_start"() <{level = 10 : i32, message = "bqd,bkd->bqk"}> : () -> ()
    %cst_55 = arith.constant dense<0.000000e+00> : vector<2x8x16xf32>
    %172 = tpu.matmul %165, %168, %cst_55 {dimension_numbers = #tpu.dot_dimension_numbers<[2], [2], [1], [1], [0, 0, 0, 1, 1, 1], [0], [0]>} : vector<2x8x8xbf16>, vector<2x16x8xbf16>, vector<2x8x16xf32> -> vector<2x8x16xf32>
    "tpu.trace_stop"() : () -> ()
    %173 = arith.addf %172, %162 : vector<2x8x16xf32>
    %cst_56 = arith.constant dense<0xFF800000> : vector<2x8xf32>
    %174 = vector.multi_reduction <maximumf>, %173, %cst_56 [2] : vector<2x8x16xf32> to vector<2x8xf32>
    %175 = vector.shape_cast %174 : vector<2x8xf32> to vector<2x8x1xf32>
    %176 = vector.broadcast %175 : vector<2x8x1xf32> to vector<2x8x16xf32>
    %177 = arith.subf %173, %176 : vector<2x8x16xf32>
    %178 = math.exp %177 : vector<2x8x16xf32>
    %cst_57 = arith.constant dense<0.000000e+00> : vector<2x8xf32>
    %179 = vector.multi_reduction <add>, %178, %cst_57 [2] : vector<2x8x16xf32> to vector<2x8xf32>
    %180 = vector.shape_cast %179 : vector<2x8xf32> to vector<2x8x1xf32>
    %181 = tpu.reciprocal %180 {approx = true} : vector<2x8x1xf32> -> vector<2x8x1xf32>
    %182 = vector.broadcast %181 : vector<2x8x1xf32> to vector<2x8x16xf32>
    %183 = arith.mulf %178, %182 : vector<2x8x16xf32>
    %184 = arith.truncf %183 : vector<2x8x16xf32> to vector<2x8x16xbf16>
    "tpu.trace_start"() <{level = 10 : i32, message = "bqk,bkd->bqd"}> : () -> ()
    %cst_58 = arith.constant dense<0.000000e+00> : vector<2x8x8xf32>
    %185 = tpu.matmul %184, %171, %cst_58 {dimension_numbers = #tpu.dot_dimension_numbers<[2], [1], [1], [2], [0, 0, 0, 1, 1, 2], [0], [0]>} : vector<2x8x16xbf16>, vector<2x16x8xbf16>, vector<2x8x8xf32> -> vector<2x8x8xf32>
    "tpu.trace_stop"() : () -> ()
    %186 = vector.shape_cast %185 : vector<2x8x8xf32> to vector<16x8xf32>
    %187 = vector.extract_strided_slice %151 {offsets = [0, 8], sizes = [16, 8], strides = [1, 1]} : vector<16x32xf32> to vector<16x8xf32>
    %188 = vector.shape_cast %187 : vector<16x8xf32> to vector<2x8x8xf32>
    %189 = arith.truncf %188 : vector<2x8x8xf32> to vector<2x8x8xbf16>
    %190 = vector.extract_strided_slice %160 {offsets = [0, 8], sizes = [32, 8], strides = [1, 1]} : vector<32x32xf32> to vector<32x8xf32>
    %191 = vector.shape_cast %190 : vector<32x8xf32> to vector<2x16x8xf32>
    %192 = arith.truncf %191 : vector<2x16x8xf32> to vector<2x16x8xbf16>
    %193 = vector.extract_strided_slice %161 {offsets = [0, 8], sizes = [32, 8], strides = [1, 1]} : vector<32x32xf32> to vector<32x8xf32>
    %194 = vector.shape_cast %193 : vector<32x8xf32> to vector<2x16x8xf32>
    %195 = arith.truncf %194 : vector<2x16x8xf32> to vector<2x16x8xbf16>
    "tpu.trace_start"() <{level = 10 : i32, message = "bqd,bkd->bqk"}> : () -> ()
    %cst_59 = arith.constant dense<0.000000e+00> : vector<2x8x16xf32>
    %196 = tpu.matmul %189, %192, %cst_59 {dimension_numbers = #tpu.dot_dimension_numbers<[2], [2], [1], [1], [0, 0, 0, 1, 1, 1], [0], [0]>} : vector<2x8x8xbf16>, vector<2x16x8xbf16>, vector<2x8x16xf32> -> vector<2x8x16xf32>
    "tpu.trace_stop"() : () -> ()
    %197 = arith.addf %196, %162 : vector<2x8x16xf32>
    %cst_60 = arith.constant dense<0xFF800000> : vector<2x8xf32>
    %198 = vector.multi_reduction <maximumf>, %197, %cst_60 [2] : vector<2x8x16xf32> to vector<2x8xf32>
    %199 = vector.shape_cast %198 : vector<2x8xf32> to vector<2x8x1xf32>
    %200 = vector.broadcast %199 : vector<2x8x1xf32> to vector<2x8x16xf32>
    %201 = arith.subf %197, %200 : vector<2x8x16xf32>
    %202 = math.exp %201 : vector<2x8x16xf32>
    %cst_61 = arith.constant dense<0.000000e+00> : vector<2x8xf32>
    %203 = vector.multi_reduction <add>, %202, %cst_61 [2] : vector<2x8x16xf32> to vector<2x8xf32>
    %204 = vector.shape_cast %203 : vector<2x8xf32> to vector<2x8x1xf32>
    %205 = tpu.reciprocal %204 {approx = true} : vector<2x8x1xf32> -> vector<2x8x1xf32>
    %206 = vector.broadcast %205 : vector<2x8x1xf32> to vector<2x8x16xf32>
    %207 = arith.mulf %202, %206 : vector<2x8x16xf32>
    %208 = arith.truncf %207 : vector<2x8x16xf32> to vector<2x8x16xbf16>
    "tpu.trace_start"() <{level = 10 : i32, message = "bqk,bkd->bqd"}> : () -> ()
    %cst_62 = arith.constant dense<0.000000e+00> : vector<2x8x8xf32>
    %209 = tpu.matmul %208, %195, %cst_62 {dimension_numbers = #tpu.dot_dimension_numbers<[2], [1], [1], [2], [0, 0, 0, 1, 1, 2], [0], [0]>} : vector<2x8x16xbf16>, vector<2x16x8xbf16>, vector<2x8x8xf32> -> vector<2x8x8xf32>
    "tpu.trace_stop"() : () -> ()
    %210 = vector.shape_cast %209 : vector<2x8x8xf32> to vector<16x8xf32>
    %211 = vector.extract_strided_slice %151 {offsets = [0, 16], sizes = [16, 8], strides = [1, 1]} : vector<16x32xf32> to vector<16x8xf32>
    %212 = vector.shape_cast %211 : vector<16x8xf32> to vector<2x8x8xf32>
    %213 = arith.truncf %212 : vector<2x8x8xf32> to vector<2x8x8xbf16>
    %214 = vector.extract_strided_slice %160 {offsets = [0, 16], sizes = [32, 8], strides = [1, 1]} : vector<32x32xf32> to vector<32x8xf32>
    %215 = vector.shape_cast %214 : vector<32x8xf32> to vector<2x16x8xf32>
    %216 = arith.truncf %215 : vector<2x16x8xf32> to vector<2x16x8xbf16>
    %217 = vector.extract_strided_slice %161 {offsets = [0, 16], sizes = [32, 8], strides = [1, 1]} : vector<32x32xf32> to vector<32x8xf32>
    %218 = vector.shape_cast %217 : vector<32x8xf32> to vector<2x16x8xf32>
    %219 = arith.truncf %218 : vector<2x16x8xf32> to vector<2x16x8xbf16>
    "tpu.trace_start"() <{level = 10 : i32, message = "bqd,bkd->bqk"}> : () -> ()
    %cst_63 = arith.constant dense<0.000000e+00> : vector<2x8x16xf32>
    %220 = tpu.matmul %213, %216, %cst_63 {dimension_numbers = #tpu.dot_dimension_numbers<[2], [2], [1], [1], [0, 0, 0, 1, 1, 1], [0], [0]>} : vector<2x8x8xbf16>, vector<2x16x8xbf16>, vector<2x8x16xf32> -> vector<2x8x16xf32>
    "tpu.trace_stop"() : () -> ()
    %221 = arith.addf %220, %162 : vector<2x8x16xf32>
    %cst_64 = arith.constant dense<0xFF800000> : vector<2x8xf32>
    %222 = vector.multi_reduction <maximumf>, %221, %cst_64 [2] : vector<2x8x16xf32> to vector<2x8xf32>
    %223 = vector.shape_cast %222 : vector<2x8xf32> to vector<2x8x1xf32>
    %224 = vector.broadcast %223 : vector<2x8x1xf32> to vector<2x8x16xf32>
    %225 = arith.subf %221, %224 : vector<2x8x16xf32>
    %226 = math.exp %225 : vector<2x8x16xf32>
    %cst_65 = arith.constant dense<0.000000e+00> : vector<2x8xf32>
    %227 = vector.multi_reduction <add>, %226, %cst_65 [2] : vector<2x8x16xf32> to vector<2x8xf32>
    %228 = vector.shape_cast %227 : vector<2x8xf32> to vector<2x8x1xf32>
    %229 = tpu.reciprocal %228 {approx = true} : vector<2x8x1xf32> -> vector<2x8x1xf32>
    %230 = vector.broadcast %229 : vector<2x8x1xf32> to vector<2x8x16xf32>
    %231 = arith.mulf %226, %230 : vector<2x8x16xf32>
    %232 = arith.truncf %231 : vector<2x8x16xf32> to vector<2x8x16xbf16>
    "tpu.trace_start"() <{level = 10 : i32, message = "bqk,bkd->bqd"}> : () -> ()
    %cst_66 = arith.constant dense<0.000000e+00> : vector<2x8x8xf32>
    %233 = tpu.matmul %232, %219, %cst_66 {dimension_numbers = #tpu.dot_dimension_numbers<[2], [1], [1], [2], [0, 0, 0, 1, 1, 2], [0], [0]>} : vector<2x8x16xbf16>, vector<2x16x8xbf16>, vector<2x8x8xf32> -> vector<2x8x8xf32>
    "tpu.trace_stop"() : () -> ()
    %234 = vector.shape_cast %233 : vector<2x8x8xf32> to vector<16x8xf32>
    %235 = vector.extract_strided_slice %151 {offsets = [0, 24], sizes = [16, 8], strides = [1, 1]} : vector<16x32xf32> to vector<16x8xf32>
    %236 = vector.shape_cast %235 : vector<16x8xf32> to vector<2x8x8xf32>
    %237 = arith.truncf %236 : vector<2x8x8xf32> to vector<2x8x8xbf16>
    %238 = vector.extract_strided_slice %160 {offsets = [0, 24], sizes = [32, 8], strides = [1, 1]} : vector<32x32xf32> to vector<32x8xf32>
    %239 = vector.shape_cast %238 : vector<32x8xf32> to vector<2x16x8xf32>
    %240 = arith.truncf %239 : vector<2x16x8xf32> to vector<2x16x8xbf16>
    %241 = vector.extract_strided_slice %161 {offsets = [0, 24], sizes = [32, 8], strides = [1, 1]} : vector<32x32xf32> to vector<32x8xf32>
    %242 = vector.shape_cast %241 : vector<32x8xf32> to vector<2x16x8xf32>
    %243 = arith.truncf %242 : vector<2x16x8xf32> to vector<2x16x8xbf16>
    "tpu.trace_start"() <{level = 10 : i32, message = "bqd,bkd->bqk"}> : () -> ()
    %cst_67 = arith.constant dense<0.000000e+00> : vector<2x8x16xf32>
    %244 = tpu.matmul %237, %240, %cst_67 {dimension_numbers = #tpu.dot_dimension_numbers<[2], [2], [1], [1], [0, 0, 0, 1, 1, 1], [0], [0]>} : vector<2x8x8xbf16>, vector<2x16x8xbf16>, vector<2x8x16xf32> -> vector<2x8x16xf32>
    "tpu.trace_stop"() : () -> ()
    %245 = arith.addf %244, %162 : vector<2x8x16xf32>
    %cst_68 = arith.constant dense<0xFF800000> : vector<2x8xf32>
    %246 = vector.multi_reduction <maximumf>, %245, %cst_68 [2] : vector<2x8x16xf32> to vector<2x8xf32>
    %247 = vector.shape_cast %246 : vector<2x8xf32> to vector<2x8x1xf32>
    %248 = vector.broadcast %247 : vector<2x8x1xf32> to vector<2x8x16xf32>
    %249 = arith.subf %245, %248 : vector<2x8x16xf32>
    %250 = math.exp %249 : vector<2x8x16xf32>
    %cst_69 = arith.constant dense<0.000000e+00> : vector<2x8xf32>
    %251 = vector.multi_reduction <add>, %250, %cst_69 [2] : vector<2x8x16xf32> to vector<2x8xf32>
    %252 = vector.shape_cast %251 : vector<2x8xf32> to vector<2x8x1xf32>
    %253 = tpu.reciprocal %252 {approx = true} : vector<2x8x1xf32> -> vector<2x8x1xf32>
    %254 = vector.broadcast %253 : vector<2x8x1xf32> to vector<2x8x16xf32>
    %255 = arith.mulf %250, %254 : vector<2x8x16xf32>
    %256 = arith.truncf %255 : vector<2x8x16xf32> to vector<2x8x16xbf16>
    "tpu.trace_start"() <{level = 10 : i32, message = "bqk,bkd->bqd"}> : () -> ()
    %cst_70 = arith.constant dense<0.000000e+00> : vector<2x8x8xf32>
    %257 = tpu.matmul %256, %243, %cst_70 {dimension_numbers = #tpu.dot_dimension_numbers<[2], [1], [1], [2], [0, 0, 0, 1, 1, 2], [0], [0]>} : vector<2x8x16xbf16>, vector<2x16x8xbf16>, vector<2x8x8xf32> -> vector<2x8x8xf32>
    "tpu.trace_stop"() : () -> ()
    %258 = vector.shape_cast %257 : vector<2x8x8xf32> to vector<16x8xf32>
    %259 = tpu.concatenate %186, %210, %234, %258 in 1 : vector<16x8xf32>, vector<16x8xf32>, vector<16x8xf32>, vector<16x8xf32> -> vector<16x32xf32>
    %260 = arith.truncf %259 : vector<16x32xf32> to vector<16x32xbf16>
    %261 = vector.extract_strided_slice %5 {offsets = [4, 0], sizes = [1, 32], strides = [1, 1]} : vector<10x32xf32> to vector<1x32xf32>
    %c0_71 = arith.constant 0 : index
    %c0_72 = arith.constant 0 : index
    %c0_73 = arith.constant 0 : index
    %262 = vector.load %arg12[%c0_71, %c0_72, %c0_73] : memref<1x32x32xbf16, #tpu.memory_space<vmem>>, vector<1x32x32xbf16>
    %263 = vector.shape_cast %262 : vector<1x32x32xbf16> to vector<32x32xbf16>
    %cst_74 = arith.constant dense<0.000000e+00> : vector<16x32xf32>
    %264 = tpu.matmul %260, %263, %cst_74 {dimension_numbers = #tpu.dot_dimension_numbers<[1], [0], [0], [1], [0, 0, 1, 1], [], []>} : vector<16x32xbf16>, vector<32x32xbf16>, vector<16x32xf32> -> vector<16x32xf32>
    %265 = vector.broadcast %261 : vector<1x32xf32> to vector<16x32xf32>
    %266 = arith.addf %264, %265 : vector<16x32xf32>
    %267 = arith.addf %266, %144 : vector<16x32xf32>
    %268 = vector.extract_strided_slice %5 {offsets = [5, 0], sizes = [1, 32], strides = [1, 1]} : vector<10x32xf32> to vector<1x32xf32>
    %269 = vector.extract_strided_slice %5 {offsets = [6, 0], sizes = [1, 32], strides = [1, 1]} : vector<10x32xf32> to vector<1x32xf32>
    %cst_75 = arith.constant dense<0.000000e+00> : vector<16xf32>
    %270 = vector.multi_reduction <add>, %267, %cst_75 [1] : vector<16x32xf32> to vector<16xf32>
    %271 = vector.shape_cast %270 : vector<16xf32> to vector<16x1xf32>
    %cst_76 = arith.constant 3.200000e+01 : f32
    %272 = vector.broadcast %cst_76 : f32 to vector<16x1xf32>
    %273 = arith.divf %271, %272 : vector<16x1xf32>
    %274 = vector.broadcast %273 : vector<16x1xf32> to vector<16x32xf32>
    %275 = arith.subf %267, %274 : vector<16x32xf32>
    %276 = arith.mulf %275, %275 : vector<16x32xf32>
    %cst_77 = arith.constant dense<0.000000e+00> : vector<16xf32>
    %277 = vector.multi_reduction <add>, %276, %cst_77 [1] : vector<16x32xf32> to vector<16xf32>
    %278 = vector.shape_cast %277 : vector<16xf32> to vector<16x1xf32>
    %cst_78 = arith.constant 3.200000e+01 : f32
    %279 = vector.broadcast %cst_78 : f32 to vector<16x1xf32>
    %280 = arith.divf %278, %279 : vector<16x1xf32>
    %cst_79 = arith.constant 9.99999974E-6 : f32
    %281 = vector.broadcast %cst_79 : f32 to vector<16x1xf32>
    %282 = arith.addf %280, %281 : vector<16x1xf32>
    %283 = math.rsqrt %282 : vector<16x1xf32>
    %284 = vector.broadcast %283 : vector<16x1xf32> to vector<16x32xf32>
    %285 = arith.mulf %275, %284 : vector<16x32xf32>
    %286 = vector.broadcast %268 : vector<1x32xf32> to vector<16x32xf32>
    %287 = arith.mulf %285, %286 : vector<16x32xf32>
    %288 = vector.broadcast %269 : vector<1x32xf32> to vector<16x32xf32>
    %289 = arith.addf %287, %288 : vector<16x32xf32>
    %290 = arith.truncf %289 : vector<16x32xf32> to vector<16x32xbf16>
    %c0_80 = arith.constant 0 : index
    %c0_81 = arith.constant 0 : index
    %c0_82 = arith.constant 0 : index
    %291 = vector.load %arg14[%c0_80, %c0_81, %c0_82] : memref<1x1x64xf32, #tpu.memory_space<vmem>>, vector<1x1x64xf32>
    %292 = vector.shape_cast %291 : vector<1x1x64xf32> to vector<1x64xf32>
    %c0_83 = arith.constant 0 : index
    %c0_84 = arith.constant 0 : index
    %c0_85 = arith.constant 0 : index
    %293 = vector.load %arg13[%c0_83, %c0_84, %c0_85] : memref<1x32x64xbf16, #tpu.memory_space<vmem>>, vector<1x32x64xbf16>
    %294 = vector.shape_cast %293 : vector<1x32x64xbf16> to vector<32x64xbf16>
    %cst_86 = arith.constant dense<0.000000e+00> : vector<16x64xf32>
    %295 = tpu.matmul %290, %294, %cst_86 {dimension_numbers = #tpu.dot_dimension_numbers<[1], [0], [0], [1], [0, 0, 1, 1], [], []>} : vector<16x32xbf16>, vector<32x64xbf16>, vector<16x64xf32> -> vector<16x64xf32>
    %296 = vector.broadcast %292 : vector<1x64xf32> to vector<16x64xf32>
    %297 = arith.addf %295, %296 : vector<16x64xf32>
    %cst_87 = arith.constant 0.000000e+00 : f32
    %298 = vector.broadcast %cst_87 : f32 to vector<16x64xf32>
    %299 = arith.maximumf %297, %298 : vector<16x64xf32>
    %300 = arith.truncf %299 : vector<16x64xf32> to vector<16x64xbf16>
    %301 = vector.extract_strided_slice %5 {offsets = [7, 0], sizes = [1, 32], strides = [1, 1]} : vector<10x32xf32> to vector<1x32xf32>
    %c0_88 = arith.constant 0 : index
    %c0_89 = arith.constant 0 : index
    %c0_90 = arith.constant 0 : index
    %302 = vector.load %arg15[%c0_88, %c0_89, %c0_90] : memref<1x64x32xbf16, #tpu.memory_space<vmem>>, vector<1x64x32xbf16>
    %303 = vector.shape_cast %302 : vector<1x64x32xbf16> to vector<64x32xbf16>
    %cst_91 = arith.constant dense<0.000000e+00> : vector<16x32xf32>
    %304 = tpu.matmul %300, %303, %cst_91 {dimension_numbers = #tpu.dot_dimension_numbers<[1], [0], [0], [1], [0, 0, 1, 1], [], []>} : vector<16x64xbf16>, vector<64x32xbf16>, vector<16x32xf32> -> vector<16x32xf32>
    %305 = vector.broadcast %301 : vector<1x32xf32> to vector<16x32xf32>
    %306 = arith.addf %304, %305 : vector<16x32xf32>
    %307 = arith.addf %306, %289 : vector<16x32xf32>
    %308 = vector.extract_strided_slice %5 {offsets = [8, 0], sizes = [1, 32], strides = [1, 1]} : vector<10x32xf32> to vector<1x32xf32>
    %309 = vector.extract_strided_slice %5 {offsets = [9, 0], sizes = [1, 32], strides = [1, 1]} : vector<10x32xf32> to vector<1x32xf32>
    %cst_92 = arith.constant dense<0.000000e+00> : vector<16xf32>
    %310 = vector.multi_reduction <add>, %307, %cst_92 [1] : vector<16x32xf32> to vector<16xf32>
    %311 = vector.shape_cast %310 : vector<16xf32> to vector<16x1xf32>
    %cst_93 = arith.constant 3.200000e+01 : f32
    %312 = vector.broadcast %cst_93 : f32 to vector<16x1xf32>
    %313 = arith.divf %311, %312 : vector<16x1xf32>
    %314 = vector.broadcast %313 : vector<16x1xf32> to vector<16x32xf32>
    %315 = arith.subf %307, %314 : vector<16x32xf32>
    %316 = arith.mulf %315, %315 : vector<16x32xf32>
    %cst_94 = arith.constant dense<0.000000e+00> : vector<16xf32>
    %317 = vector.multi_reduction <add>, %316, %cst_94 [1] : vector<16x32xf32> to vector<16xf32>
    %318 = vector.shape_cast %317 : vector<16xf32> to vector<16x1xf32>
    %cst_95 = arith.constant 3.200000e+01 : f32
    %319 = vector.broadcast %cst_95 : f32 to vector<16x1xf32>
    %320 = arith.divf %318, %319 : vector<16x1xf32>
    %cst_96 = arith.constant 9.99999974E-6 : f32
    %321 = vector.broadcast %cst_96 : f32 to vector<16x1xf32>
    %322 = arith.addf %320, %321 : vector<16x1xf32>
    %323 = math.rsqrt %322 : vector<16x1xf32>
    %324 = vector.broadcast %323 : vector<16x1xf32> to vector<16x32xf32>
    %325 = arith.mulf %315, %324 : vector<16x32xf32>
    %326 = vector.broadcast %308 : vector<1x32xf32> to vector<16x32xf32>
    %327 = arith.mulf %325, %326 : vector<16x32xf32>
    %328 = vector.broadcast %309 : vector<1x32xf32> to vector<16x32xf32>
    %329 = arith.addf %327, %328 : vector<16x32xf32>
    %c0_97 = arith.constant 0 : index
    %c0_98 = arith.constant 0 : index
    %330 = vector.load %arg17[%c0_97, %c0_98] : memref<16x32xf32, #tpu.memory_space<vmem>>, vector<16x32xf32>
    tpu.vector_store %arg17[%c0_97, %c0_98], %329 {strides = array<i32>} : memref<16x32xf32, #tpu.memory_space<vmem>>, vector<16x32xf32>,
    return
  }
  func.func @transform_0(%arg0: i32, %arg1: i32) -> (i32, i32) {
    %c0_i32 = arith.constant 0 : i32
    %c0_i32_0 = arith.constant 0 : i32
    return %arg0, %c0_i32 : i32, i32
  }
  func.func @transform_1(%arg0: i32, %arg1: i32) -> (i32, i32) {
    %c0_i32 = arith.constant 0 : i32
    %c0_i32_0 = arith.constant 0 : i32
    return %arg0, %c0_i32 : i32, i32
  }
  func.func @transform_2(%arg0: i32, %arg1: i32) -> (i32, i32, i32) {
    %c0_i32 = arith.constant 0 : i32
    %c0_i32_0 = arith.constant 0 : i32
    %c0_i32_1 = arith.constant 0 : i32
    return %arg0, %c0_i32, %c0_i32_0 : i32, i32, i32
  }
  func.func @transform_3(%arg0: i32, %arg1: i32) -> (i32, i32, i32) {
    %c0_i32 = arith.constant 0 : i32
    %c0_i32_0 = arith.constant 0 : i32
    %c0_i32_1 = arith.constant 0 : i32
    return %arg0, %c0_i32, %c0_i32_0 : i32, i32, i32
  }
  func.func @transform_4(%arg0: i32, %arg1: i32) -> (i32, i32, i32) {
    %c0_i32 = arith.constant 0 : i32
    %c0_i32_0 = arith.constant 0 : i32
    %c0_i32_1 = arith.constant 0 : i32
    return %arg1, %c0_i32, %c0_i32_0 : i32, i32, i32
  }
  func.func @transform_5(%arg0: i32, %arg1: i32) -> (i32, i32, i32) {
    %c0_i32 = arith.constant 0 : i32
    %c0_i32_0 = arith.constant 0 : i32
    %c0_i32_1 = arith.constant 0 : i32
    return %arg1, %c0_i32, %c0_i32_0 : i32, i32, i32
  }
  func.func @transform_6(%arg0: i32, %arg1: i32) -> (i32, i32, i32) {
    %c0_i32 = arith.constant 0 : i32
    %c0_i32_0 = arith.constant 0 : i32
    %c0_i32_1 = arith.constant 0 : i32
    return %arg1, %c0_i32, %c0_i32_0 : i32, i32, i32
  }
  func.func @transform_7(%arg0: i32, %arg1: i32) -> (i32, i32, i32) {
    %c0_i32 = arith.constant 0 : i32
    %c0_i32_0 = arith.constant 0 : i32
    %c0_i32_1 = arith.constant 0 : i32
    return %arg1, %c0_i32, %c0_i32_0 : i32, i32, i32
  }
  func.func @transform_8(%arg0: i32, %arg1: i32) -> (i32, i32, i32) {
    %c0_i32 = arith.constant 0 : i32
    %c0_i32_0 = arith.constant 0 : i32
    %c0_i32_1 = arith.constant 0 : i32
    return %arg1, %c0_i32, %c0_i32_0 : i32, i32, i32
  }
  func.func @transform_9(%arg0: i32, %arg1: i32) -> (i32, i32, i32) {
    %c0_i32 = arith.constant 0 : i32
    %c0_i32_0 = arith.constant 0 : i32
    %c0_i32_1 = arith.constant 0 : i32
    return %arg1, %c0_i32, %c0_i32_0 : i32, i32, i32
  }
  func.func @transform_10(%arg0: i32, %arg1: i32) -> (i32, i32, i32) {
    %c0_i32 = arith.constant 0 : i32
    %c0_i32_0 = arith.constant 0 : i32
    %c0_i32_1 = arith.constant 0 : i32
    return %arg1, %c0_i32, %c0_i32_0 : i32, i32, i32
  }
  func.func @transform_11(%arg0: i32, %arg1: i32) -> (i32, i32, i32) {
    %c0_i32 = arith.constant 0 : i32
    %c0_i32_0 = arith.constant 0 : i32
    %c0_i32_1 = arith.constant 0 : i32
    return %arg1, %c0_i32, %c0_i32_0 : i32, i32, i32
  }
  func.func @transform_12(%arg0: i32, %arg1: i32) -> (i32, i32, i32) {
    %c0_i32 = arith.constant 0 : i32
    %c0_i32_0 = arith.constant 0 : i32
    %c0_i32_1 = arith.constant 0 : i32
    return %arg1, %c0_i32, %c0_i32_0 : i32, i32, i32
  }
  func.func @transform_13(%arg0: i32, %arg1: i32) -> (i32, i32, i32) {
    %c0_i32 = arith.constant 0 : i32
    %c0_i32_0 = arith.constant 0 : i32
    %c0_i32_1 = arith.constant 0 : i32
    return %arg1, %c0_i32, %c0_i32_0 : i32, i32, i32
  }
  func.func @transform_14(%arg0: i32, %arg1: i32) -> (i32, i32, i32) {
    %c0_i32 = arith.constant 0 : i32
    %c0_i32_0 = arith.constant 0 : i32
    %c0_i32_1 = arith.constant 0 : i32
    return %arg1, %c0_i32, %c0_i32_0 : i32, i32, i32
  }
  func.func @transform_15(%arg0: i32, %arg1: i32) -> (i32, i32) {
    %c0_i32 = arith.constant 0 : i32
    %c0_i32_0 = arith.constant 0 : i32
    return %arg0, %c0_i32 : i32, i32
  }
}

</mosaic_0001>

<llo_original>
// kernel: decoder_forward.1
$region0: #{decoder_forward.1}
  #allocation0 [shape = 'u32[]', space=smem, size = 0x4, offset = 0x4, fixed_abs, tag = 'smem constant byte address 0x4 - core index']
  #allocation1 [shape = 'u32[144,128]{1,0:T(1,128)}', space=vmem, size = 0x12000, scoped, tag = 'internal scratch']
  %s0 = inlined_call_operand.vmem [shape: f32[16,32], index: 0, kind: input, shape index: {}]
  %s1 = inlined_call_operand.vmem [shape: bf16[32,32], index: 1, kind: input, shape index: {}]
  %s2 = inlined_call_operand.vmem [shape: f32[2,8,8], index: 2, kind: input, shape index: {}]
  %s3 = inlined_call_operand.vmem [shape: f32[2,8,16], index: 3, kind: input, shape index: {}]
  %s4 = inlined_call_operand.vmem [shape: bf16[2,32,96], index: 4, kind: input, shape index: {}]
  %s5 = inlined_call_operand.vmem [shape: f32[2,1,96], index: 5, kind: input, shape index: {}]
  %s6 = inlined_call_operand.vmem [shape: bf16[2,32,32], index: 6, kind: input, shape index: {}]
  %s7 = inlined_call_operand.vmem [shape: bf16[2,32,32], index: 7, kind: input, shape index: {}]
  %s8 = inlined_call_operand.vmem [shape: bf16[2,32,64], index: 8, kind: input, shape index: {}]
  %s9 = inlined_call_operand.vmem [shape: f32[2,1,64], index: 9, kind: input, shape index: {}]
  %s10 = inlined_call_operand.vmem [shape: bf16[2,32,32], index: 10, kind: input, shape index: {}]
  %s11 = inlined_call_operand.vmem [shape: bf16[2,32,64], index: 11, kind: input, shape index: {}]
  %s12 = inlined_call_operand.vmem [shape: f32[2,1,64], index: 12, kind: input, shape index: {}]
  %s13 = inlined_call_operand.vmem [shape: bf16[2,64,32], index: 13, kind: input, shape index: {}]
  %s14 = inlined_call_operand.vmem [shape: f32[2,10,32], index: 14, kind: input, shape index: {}]
  %s15 = inlined_call_operand.hbm [shape: f32[16,32], index: 15, kind: output, shape index: {}]
  %s16 = sld [smem:[#allocation0]]
  $region97: #{decoder_forward.1} parent=0
    _
  %s18 = ssub.s32 1, %s16
  %s19 = scalar_select 0, %s18, %s16
  $region1: #{decoder_forward.1} parent=0
    #allocation2 [shape = 'u8[8192]{0}', space=vmem, size = 0x2000, scoped, tag = 'output window, operand 0, single buffered']
    #allocation3 [shape = 's32[2]{0}', space=sflag, size = 0x8, scoped, tag = 'scoped memory for decoder_forward.1']
    %20 = vsyncpa [#allocation3], 0
    loop: start=0, step=1, limit=4
    $region2: #{decoder_forward.1} parent=1 // loop_pre_header
      _
    $region3: #{decoder_forward.1} parent=1 // loop_header
      %s22 = sphi 0, %s26
      %p23 = scmp.ge.s32.totalorder %s22, 4
      %s29 = sphi 0, %s41
      %s30 = sphi 0, %s37
      %s31 = sphi 0, %s29
      %s32 = sphi 0, %s30
      %s33 = sphi 0, %s31
      %s34 = sphi 0, %s32
      %s44 = sphi 0, %s46
      %s47 = sphi 0, %s44
      %s48 = sphi 0, %s47
      %s64 = sphi 0, %s48
      %s70 = sphi 0, %s72
      %s73 = sphi 0, %s70
      %s74 = sphi 0, %s73
      %s90 = sphi 0, %s74
      %s96 = sphi 0, %s98
      %s99 = sphi 0, %s96
      %s100 = sphi 0, %s99
      %s116 = sphi 0, %s100
      %s122 = sphi 0, %s124
      %s125 = sphi 0, %s122
      %s126 = sphi 0, %s125
      %s142 = sphi 0, %s126
      %s148 = sphi 0, %s150
      %s151 = sphi 0, %s148
      %s152 = sphi 0, %s151
      %s168 = sphi 0, %s152
      %s174 = sphi 0, %s176
      %s177 = sphi 0, %s174
      %s178 = sphi 0, %s177
      %s194 = sphi 0, %s178
      %s200 = sphi 0, %s202
      %s203 = sphi 0, %s200
      %s204 = sphi 0, %s203
      %s220 = sphi 0, %s204
      %s226 = sphi 0, %s228
      %s229 = sphi 0, %s226
      %s230 = sphi 0, %s229
      %s246 = sphi 0, %s230
      %s252 = sphi 0, %s254
      %s255 = sphi 0, %s252
      %s256 = sphi 0, %s255
      %s272 = sphi 0, %s256
      %s278 = sphi 0, %s280
      %s281 = sphi 0, %s278
      %s282 = sphi 0, %s281
      %s298 = sphi 0, %s282
      %s304 = sphi 0, %s306
      %s307 = sphi 0, %s304
      %s308 = sphi 0, %s307
      %s324 = sphi 0, %s308
      %s330 = sphi 0, %s332
      %s333 = sphi 0, %s330
      %s334 = sphi 0, %s333
      %s350 = sphi 0, %s334
      %s356 = sphi 0, %s358
      %s359 = sphi 0, %s356
      %s360 = sphi 0, %s359
      %s376 = sphi 0, %s360
      %s382 = sphi 0, %s384
      %s385 = sphi 0, %s382
      %s386 = sphi 0, %s385
      %s402 = sphi 0, %s386
      %s408 = sphi 0, %s410
      %s411 = sphi 0, %s408
      %s412 = sphi 0, %s411
      %s428 = sphi 0, %s412
      %s434 = sphi 0, %s436
      %s437 = sphi 0, %s434
      %s438 = sphi 0, %s437
      %s454 = sphi 0, %s438
    $region4: #{decoder_forward.1} parent=1 // loop_header_branch
      %25 = sbr.rel (%p23) target = $region8
    $region5: #{decoder_forward.1} parent=1 // loop_body
      %s27 = ssub.s32 %s22, 1
      %s28 = ssub.s32 %s22, 2
      %s35 = sadd.s32 1, %s30
      %p36 = scmp.ge.s32.totalorder %s35, 2
      %s37 = scalar_select %p36, 0, %s35
      %s38 = sadd.s32 1, %s29
      %s39 = scalar_select %p36, %s38, %s29
      %p40 = scmp.ge.s32.totalorder %s39, 1
      %s41 = scalar_select %p40, 0, %s39
      %s42 = ssub.s32 %s29, %s41
      %p43 = scmp.eq.s32.totalorder %s42, 0
      %s45 = sadd.s32 %s44, 1
      %s46 = scalar_select %p43, %s44, %s45
      %p49 = pneg %p43
      %p50 = scmp.eq.s32.totalorder %s22, 1
      %p51 = por %p49, %p50
      %p52 = scmp.ne.s32.totalorder %s44, %s47
      %p53 = scmp.eq.s32.totalorder %s22, 0
      %p54 = por %p52, %p53
      %p55 = scmp.ne.s32.totalorder %s44, %s47
      %p56 = scmp.eq.s32.totalorder %s27, 1
      %p57 = por %p55, %p56
      %p58 = scmp.ne.s32.totalorder %s47, %s48
      %p59 = scmp.eq.s32.totalorder %s27, 0
      %p60 = por %p58, %p59
      %p61 = scmp.ne.s32.totalorder %s47, %s48
      %p62 = scmp.eq.s32.totalorder %s28, 1
      %p63 = por %p61, %p62
      %p65 = scmp.ne.s32.totalorder %s48, %s64
      %p66 = scmp.eq.s32.totalorder %s28, 0
      %p67 = por %p65, %p66
      %s68 = ssub.s32 %s29, %s41
      %p69 = scmp.eq.s32.totalorder %s68, 0
      %s71 = sadd.s32 %s70, 1
      %s72 = scalar_select %p69, %s70, %s71
      %p75 = pneg %p69
      %p76 = scmp.eq.s32.totalorder %s22, 1
      %p77 = por %p75, %p76
      %p78 = scmp.ne.s32.totalorder %s70, %s73
      %p79 = scmp.eq.s32.totalorder %s22, 0
      %p80 = por %p78, %p79
      %p81 = scmp.ne.s32.totalorder %s70, %s73
      %p82 = scmp.eq.s32.totalorder %s27, 1
      %p83 = por %p81, %p82
      %p84 = scmp.ne.s32.totalorder %s73, %s74
      %p85 = scmp.eq.s32.totalorder %s27, 0
      %p86 = por %p84, %p85
      %p87 = scmp.ne.s32.totalorder %s73, %s74
      %p88 = scmp.eq.s32.totalorder %s28, 1
      %p89 = por %p87, %p88
      %p91 = scmp.ne.s32.totalorder %s74, %s90
      %p92 = scmp.eq.s32.totalorder %s28, 0
      %p93 = por %p91, %p92
      %s94 = ssub.s32 %s29, %s41
      %p95 = scmp.eq.s32.totalorder %s94, 0
      %s97 = sadd.s32 %s96, 1
      %s98 = scalar_select %p95, %s96, %s97
      %p101 = pneg %p95
      %p102 = scmp.eq.s32.totalorder %s22, 1
      %p103 = por %p101, %p102
      %p104 = scmp.ne.s32.totalorder %s96, %s99
      %p105 = scmp.eq.s32.totalorder %s22, 0
      %p106 = por %p104, %p105
      %p107 = scmp.ne.s32.totalorder %s96, %s99
      %p108 = scmp.eq.s32.totalorder %s27, 1
      %p109 = por %p107, %p108
      %p110 = scmp.ne.s32.totalorder %s99, %s100
      %p111 = scmp.eq.s32.totalorder %s27, 0
      %p112 = por %p110, %p111
      %p113 = scmp.ne.s32.totalorder %s99, %s100
      %p114 = scmp.eq.s32.totalorder %s28, 1
      %p115 = por %p113, %p114
      %p117 = scmp.ne.s32.totalorder %s100, %s116
      %p118 = scmp.eq.s32.totalorder %s28, 0
      %p119 = por %p117, %p118
      %s120 = ssub.s32 %s29, %s41
      %p121 = scmp.eq.s32.totalorder %s120, 0
      %s123 = sadd.s32 %s122, 1
      %s124 = scalar_select %p121, %s122, %s123
      %p127 = pneg %p121
      %p128 = scmp.eq.s32.totalorder %s22, 1
      %p129 = por %p127, %p128
      %p130 = scmp.ne.s32.totalorder %s122, %s125
      %p131 = scmp.eq.s32.totalorder %s22, 0
      %p132 = por %p130, %p131
      %p133 = scmp.ne.s32.totalorder %s122, %s125
      %p134 = scmp.eq.s32.totalorder %s27, 1
      %p135 = por %p133, %p134
      %p136 = scmp.ne.s32.totalorder %s125, %s126
      %p137 = scmp.eq.s32.totalorder %s27, 0
      %p138 = por %p136, %p137
      %p139 = scmp.ne.s32.totalorder %s125, %s126
      %p140 = scmp.eq.s32.totalorder %s28, 1
      %p141 = por %p139, %p140
      %p143 = scmp.ne.s32.totalorder %s126, %s142
      %p144 = scmp.eq.s32.totalorder %s28, 0
      %p145 = por %p143, %p144
      %s146 = ssub.s32 %s30, %s37
      %p147 = scmp.eq.s32.totalorder %s146, 0
      %s149 = sadd.s32 %s148, 1
      %s150 = scalar_select %p147, %s148, %s149
      %p153 = pneg %p147
      %p154 = scmp.eq.s32.totalorder %s22, 1
      %p155 = por %p153, %p154
      %p156 = scmp.ne.s32.totalorder %s148, %s151
      %p157 = scmp.eq.s32.totalorder %s22, 0
      %p158 = por %p156, %p157
      %p159 = scmp.ne.s32.totalorder %s148, %s151
      %p160 = scmp.eq.s32.totalorder %s27, 1
      %p161 = por %p159, %p160
      %p162 = scmp.ne.s32.totalorder %s151, %s152
      %p163 = scmp.eq.s32.totalorder %s27, 0
      %p164 = por %p162, %p163
      %p165 = scmp.ne.s32.totalorder %s151, %s152
      %p166 = scmp.eq.s32.totalorder %s28, 1
      %p167 = por %p165, %p166
      %p169 = scmp.ne.s32.totalorder %s152, %s168
      %p170 = scmp.eq.s32.totalorder %s28, 0
      %p171 = por %p169, %p170
      %s172 = ssub.s32 %s30, %s37
      %p173 = scmp.eq.s32.totalorder %s172, 0
      %s175 = sadd.s32 %s174, 1
      %s176 = scalar_select %p173, %s174, %s175
      %p179 = pneg %p173
      %p180 = scmp.eq.s32.totalorder %s22, 1
      %p181 = por %p179, %p180
      %p182 = scmp.ne.s32.totalorder %s174, %s177
      %p183 = scmp.eq.s32.totalorder %s22, 0
      %p184 = por %p182, %p183
      %p185 = scmp.ne.s32.totalorder %s174, %s177
      %p186 = scmp.eq.s32.totalorder %s27, 1
      %p187 = por %p185, %p186
      %p188 = scmp.ne.s32.totalorder %s177, %s178
      %p189 = scmp.eq.s32.totalorder %s27, 0
      %p190 = por %p188, %p189
      %p191 = scmp.ne.s32.totalorder %s177, %s178
      %p192 = scmp.eq.s32.totalorder %s28, 1
      %p193 = por %p191, %p192
      %p195 = scmp.ne.s32.totalorder %s178, %s194
      %p196 = scmp.eq.s32.totalorder %s28, 0
      %p197 = por %p195, %p196
      %s198 = ssub.s32 %s30, %s37
      %p199 = scmp.eq.s32.totalorder %s198, 0
      %s201 = sadd.s32 %s200, 1
      %s202 = scalar_select %p199, %s200, %s201
      %p205 = pneg %p199
      %p206 = scmp.eq.s32.totalorder %s22, 1
      %p207 = por %p205, %p206
      %p208 = scmp.ne.s32.totalorder %s200, %s203
      %p209 = scmp.eq.s32.totalorder %s22, 0
      %p210 = por %p208, %p209
      %p211 = scmp.ne.s32.totalorder %s200, %s203
      %p212 = scmp.eq.s32.totalorder %s27, 1
      %p213 = por %p211, %p212
      %p214 = scmp.ne.s32.totalorder %s203, %s204
      %p215 = scmp.eq.s32.totalorder %s27, 0
      %p216 = por %p214, %p215
      %p217 = scmp.ne.s32.totalorder %s203, %s204
      %p218 = scmp.eq.s32.totalorder %s28, 1
      %p219 = por %p217, %p218
      %p221 = scmp.ne.s32.totalorder %s204, %s220
      %p222 = scmp.eq.s32.totalorder %s28, 0
      %p223 = por %p221, %p222
      %s224 = ssub.s32 %s30, %s37
      %p225 = scmp.eq.s32.totalorder %s224, 0
      %s227 = sadd.s32 %s226, 1
      %s228 = scalar_select %p225, %s226, %s227
      %p231 = pneg %p225
      %p232 = scmp.eq.s32.totalorder %s22, 1
      %p233 = por %p231, %p232
      %p234 = scmp.ne.s32.totalorder %s226, %s229
      %p235 = scmp.eq.s32.totalorder %s22, 0
      %p236 = por %p234, %p235
      %p237 = scmp.ne.s32.totalorder %s226, %s229
      %p238 = scmp.eq.s32.totalorder %s27, 1
      %p239 = por %p237, %p238
      %p240 = scmp.ne.s32.totalorder %s229, %s230
      %p241 = scmp.eq.s32.totalorder %s27, 0
      %p242 = por %p240, %p241
      %p243 = scmp.ne.s32.totalorder %s229, %s230
      %p244 = scmp.eq.s32.totalorder %s28, 1
      %p245 = por %p243, %p244
      %p247 = scmp.ne.s32.totalorder %s230, %s246
      %p248 = scmp.eq.s32.totalorder %s28, 0
      %p249 = por %p247, %p248
      %s250 = ssub.s32 %s30, %s37
      %p251 = scmp.eq.s32.totalorder %s250, 0
      %s253 = sadd.s32 %s252, 1
      %s254 = scalar_select %p251, %s252, %s253
      %p257 = pneg %p251
      %p258 = scmp.eq.s32.totalorder %s22, 1
      %p259 = por %p257, %p258
      %p260 = scmp.ne.s32.totalorder %s252, %s255
      %p261 = scmp.eq.s32.totalorder %s22, 0
      %p262 = por %p260, %p261
      %p263 = scmp.ne.s32.totalorder %s252, %s255
      %p264 = scmp.eq.s32.totalorder %s27, 1
      %p265 = por %p263, %p264
      %p266 = scmp.ne.s32.totalorder %s255, %s256
      %p267 = scmp.eq.s32.totalorder %s27, 0
      %p268 = por %p266, %p267
      %p269 = scmp.ne.s32.totalorder %s255, %s256
      %p270 = scmp.eq.s32.totalorder %s28, 1
      %p271 = por %p269, %p270
      %p273 = scmp.ne.s32.totalorder %s256, %s272
      %p274 = scmp.eq.s32.totalorder %s28, 0
      %p275 = por %p273, %p274
      %s276 = ssub.s32 %s30, %s37
      %p277 = scmp.eq.s32.totalorder %s276, 0
      %s279 = sadd.s32 %s278, 1
      %s280 = scalar_select %p277, %s278, %s279
      %p283 = pneg %p277
      %p284 = scmp.eq.s32.totalorder %s22, 1
      %p285 = por %p283, %p284
      %p286 = scmp.ne.s32.totalorder %s278, %s281
      %p287 = scmp.eq.s32.totalorder %s22, 0
      %p288 = por %p286, %p287
      %p289 = scmp.ne.s32.totalorder %s278, %s281
      %p290 = scmp.eq.s32.totalorder %s27, 1
      %p291 = por %p289, %p290
      %p292 = scmp.ne.s32.totalorder %s281, %s282
      %p293 = scmp.eq.s32.totalorder %s27, 0
      %p294 = por %p292, %p293
      %p295 = scmp.ne.s32.totalorder %s281, %s282
      %p296 = scmp.eq.s32.totalorder %s28, 1
      %p297 = por %p295, %p296
      %p299 = scmp.ne.s32.totalorder %s282, %s298
      %p300 = scmp.eq.s32.totalorder %s28, 0
      %p301 = por %p299, %p300
      %s302 = ssub.s32 %s30, %s37
      %p303 = scmp.eq.s32.totalorder %s302, 0
      %s305 = sadd.s32 %s304, 1
      %s306 = scalar_select %p303, %s304, %s305
      %p309 = pneg %p303
      %p310 = scmp.eq.s32.totalorder %s22, 1
      %p311 = por %p309, %p310
      %p312 = scmp.ne.s32.totalorder %s304, %s307
      %p313 = scmp.eq.s32.totalorder %s22, 0
      %p314 = por %p312, %p313
      %p315 = scmp.ne.s32.totalorder %s304, %s307
      %p316 = scmp.eq.s32.totalorder %s27, 1
      %p317 = por %p315, %p316
      %p318 = scmp.ne.s32.totalorder %s307, %s308
      %p319 = scmp.eq.s32.totalorder %s27, 0
      %p320 = por %p318, %p319
      %p321 = scmp.ne.s32.totalorder %s307, %s308
      %p322 = scmp.eq.s32.totalorder %s28, 1
      %p323 = por %p321, %p322
      %p325 = scmp.ne.s32.totalorder %s308, %s324
      %p326 = scmp.eq.s32.totalorder %s28, 0
      %p327 = por %p325, %p326
      %s328 = ssub.s32 %s30, %s37
      %p329 = scmp.eq.s32.totalorder %s328, 0
      %s331 = sadd.s32 %s330, 1
      %s332 = scalar_select %p329, %s330, %s331
      %p335 = pneg %p329
      %p336 = scmp.eq.s32.totalorder %s22, 1
      %p337 = por %p335, %p336
      %p338 = scmp.ne.s32.totalorder %s330, %s333
      %p339 = scmp.eq.s32.totalorder %s22, 0
      %p340 = por %p338, %p339
      %p341 = scmp.ne.s32.totalorder %s330, %s333
      %p342 = scmp.eq.s32.totalorder %s27, 1
      %p343 = por %p341, %p342
      %p344 = scmp.ne.s32.totalorder %s333, %s334
      %p345 = scmp.eq.s32.totalorder %s27, 0
      %p346 = por %p344, %p345
      %p347 = scmp.ne.s32.totalorder %s333, %s334
      %p348 = scmp.eq.s32.totalorder %s28, 1
      %p349 = por %p347, %p348
      %p351 = scmp.ne.s32.totalorder %s334, %s350
      %p352 = scmp.eq.s32.totalorder %s28, 0
      %p353 = por %p351, %p352
      %s354 = ssub.s32 %s30, %s37
      %p355 = scmp.eq.s32.totalorder %s354, 0
      %s357 = sadd.s32 %s356, 1
      %s358 = scalar_select %p355, %s356, %s357
      %p361 = pneg %p355
      %p362 = scmp.eq.s32.totalorder %s22, 1
      %p363 = por %p361, %p362
      %p364 = scmp.ne.s32.totalorder %s356, %s359
      %p365 = scmp.eq.s32.totalorder %s22, 0
      %p366 = por %p364, %p365
      %p367 = scmp.ne.s32.totalorder %s356, %s359
      %p368 = scmp.eq.s32.totalorder %s27, 1
      %p369 = por %p367, %p368
      %p370 = scmp.ne.s32.totalorder %s359, %s360
      %p371 = scmp.eq.s32.totalorder %s27, 0
      %p372 = por %p370, %p371
      %p373 = scmp.ne.s32.totalorder %s359, %s360
      %p374 = scmp.eq.s32.totalorder %s28, 1
      %p375 = por %p373, %p374
      %p377 = scmp.ne.s32.totalorder %s360, %s376
      %p378 = scmp.eq.s32.totalorder %s28, 0
      %p379 = por %p377, %p378
      %s380 = ssub.s32 %s30, %s37
      %p381 = scmp.eq.s32.totalorder %s380, 0
      %s383 = sadd.s32 %s382, 1
      %s384 = scalar_select %p381, %s382, %s383
      %p387 = pneg %p381
      %p388 = scmp.eq.s32.totalorder %s22, 1
      %p389 = por %p387, %p388
      %p390 = scmp.ne.s32.totalorder %s382, %s385
      %p391 = scmp.eq.s32.totalorder %s22, 0
      %p392 = por %p390, %p391
      %p393 = scmp.ne.s32.totalorder %s382, %s385
      %p394 = scmp.eq.s32.totalorder %s27, 1
      %p395 = por %p393, %p394
      %p396 = scmp.ne.s32.totalorder %s385, %s386
      %p397 = scmp.eq.s32.totalorder %s27, 0
      %p398 = por %p396, %p397
      %p399 = scmp.ne.s32.totalorder %s385, %s386
      %p400 = scmp.eq.s32.totalorder %s28, 1
      %p401 = por %p399, %p400
      %p403 = scmp.ne.s32.totalorder %s386, %s402
      %p404 = scmp.eq.s32.totalorder %s28, 0
      %p405 = por %p403, %p404
      %s406 = ssub.s32 %s30, %s37
      %p407 = scmp.eq.s32.totalorder %s406, 0
      %s409 = sadd.s32 %s408, 1
      %s410 = scalar_select %p407, %s408, %s409
      %p413 = pneg %p407
      %p414 = scmp.eq.s32.totalorder %s22, 1
      %p415 = por %p413, %p414
      %p416 = scmp.ne.s32.totalorder %s408, %s411
      %p417 = scmp.eq.s32.totalorder %s22, 0
      %p418 = por %p416, %p417
      %p419 = scmp.ne.s32.totalorder %s408, %s411
      %p420 = scmp.eq.s32.totalorder %s27, 1
      %p421 = por %p419, %p420
      %p422 = scmp.ne.s32.totalorder %s411, %s412
      %p423 = scmp.eq.s32.totalorder %s27, 0
      %p424 = por %p422, %p423
      %p425 = scmp.ne.s32.totalorder %s411, %s412
      %p426 = scmp.eq.s32.totalorder %s28, 1
      %p427 = por %p425, %p426
      %p429 = scmp.ne.s32.totalorder %s412, %s428
      %p430 = scmp.eq.s32.totalorder %s28, 0
      %p431 = por %p429, %p430
      %s432 = ssub.s32 %s29, %s41
      %p433 = scmp.eq.s32.totalorder %s432, 0
      %s435 = sadd.s32 %s434, 1
      %s436 = scalar_select %p433, %s434, %s435
      %p439 = pneg %p433
      %p440 = scmp.eq.s32.totalorder %s22, 1
      %p441 = por %p439, %p440
      %p442 = scmp.ne.s32.totalorder %s434, %s437
      %p443 = scmp.eq.s32.totalorder %s22, 0
      %p444 = por %p442, %p443
      %p445 = scmp.ne.s32.totalorder %s434, %s437
      %p446 = scmp.eq.s32.totalorder %s27, 1
      %p447 = por %p445, %p446
      %p448 = scmp.ne.s32.totalorder %s437, %s438
      %p449 = scmp.eq.s32.totalorder %s27, 0
      %p450 = por %p448, %p449
      %p451 = scmp.ne.s32.totalorder %s437, %s438
      %p452 = scmp.eq.s32.totalorder %s28, 1
      %p453 = por %p451, %p452
      %p455 = scmp.ne.s32.totalorder %s438, %s454
      %p456 = scmp.eq.s32.totalorder %s28, 0
      %p457 = por %p455, %p456
      %p458 = scmp.le.s32.totalorder 1, %s22
      %p459 = scmp.lt.s32.totalorder %s22, 3
      %p460 = pnand %p458, %p459
      %p461 = pneg %p460
      // Predicated region
      $region9: #{decoder_forward.1} parent=5 // pred_check
        _
      $region10: #{decoder_forward.1} parent=5 // pred_check_branch
        %463 = sbr.rel (%p460) target = $region12
      $region11: #{decoder_forward.1} parent=5 // pred_region
        %s464 = ssub.s32 %s22, 1
        // Predicated region
        $region13: #{decoder_forward.1} parent=11 // pred_check
          %p465 = pneg %p60
        $region14: #{decoder_forward.1} parent=11 // pred_check_branch
          %467 = sbr.rel (%p465) target = $region16
        $region15: #{decoder_forward.1} parent=11 // pred_region
          %s468 = smul.u32 2, %s31
          %p469 = scmp.lt.s32.totalorder %s468, 1
          %s470 = scalar_select %p469, %s468, 1
          %s471 = smul.addr %s470, 8
          %s472 = scalar_lea.vmem %s0, %s471
          %s473 = smul.u32 2, %s31
        $region16: #{decoder_forward.1} parent=11 // pred_fallthru
          _
        // Predicated region
        $region17: #{decoder_forward.1} parent=11 // pred_check
          %p474 = pneg %p86
        $region18: #{decoder_forward.1} parent=11 // pred_check_branch
          %476 = sbr.rel (%p474) target = $region20
        $region19: #{decoder_forward.1} parent=11 // pred_region
          %s477 = smul.u32 4, %s31
          %p478 = scmp.lt.s32.totalorder %s477, 3
          %s479 = scalar_select %p478, %s477, 3
          %s480 = smul.addr %s479, 4
          %s481 = scalar_lea.vmem %s1, %s480
          %s482 = smul.u32 4, %s31
        $region20: #{decoder_forward.1} parent=11 // pred_fallthru
          _
        // Predicated region
        $region21: #{decoder_forward.1} parent=11 // pred_check
          %p483 = pneg %p112
        $region22: #{decoder_forward.1} parent=11 // pred_check_branch
          %485 = sbr.rel (%p483) target = $region24
        $region23: #{decoder_forward.1} parent=11 // pred_region
          %s486 = smul.u32 2, %s31
          %p487 = scmp.lt.s32.totalorder %s486, 1
          %s488 = scalar_select %p487, %s486, 1
          %s489 = smul.addr %s488, 8
          %s490 = scalar_lea.vmem %s2, %s489
          %s491 = smul.u32 2, %s31
        $region24: #{decoder_forward.1} parent=11 // pred_fallthru
          _
        // Predicated region
        $region25: #{decoder_forward.1} parent=11 // pred_check
          %p492 = pneg %p138
        $region26: #{decoder_forward.1} parent=11 // pred_check_branch
          %494 = sbr.rel (%p492) target = $region28
        $region27: #{decoder_forward.1} parent=11 // pred_region
          %s495 = smul.u32 2, %s31
          %p496 = scmp.lt.s32.totalorder %s495, 1
          %s497 = scalar_select %p496, %s495, 1
          %s498 = smul.addr %s497, 8
          %s499 = scalar_lea.vmem %s3, %s498
          %s500 = smul.u32 2, %s31
        $region28: #{decoder_forward.1} parent=11 // pred_fallthru
          _
      $region12: #{decoder_forward.1} parent=5 // pred_fallthru
        _
      %p501 = scmp.lt.s32.totalorder %s22, 2
      // Predicated region
      $region29: #{decoder_forward.1} parent=5 // pred_check
        %p502 = pneg %p501
      $region30: #{decoder_forward.1} parent=5 // pred_check_branch
        %504 = sbr.rel (%p502) target = $region32
      $region31: #{decoder_forward.1} parent=5 // pred_region
        // Predicated region
        $region33: #{decoder_forward.1} parent=31 // pred_check
          %p505 = pneg %p158
        $region34: #{decoder_forward.1} parent=31 // pred_check_branch
          %507 = sbr.rel (%p505) target = $region36
        $region35: #{decoder_forward.1} parent=31 // pred_region
          %p508 = scmp.lt.s32.totalorder %s30, 1
          %s509 = scalar_select %p508, %s30, 1
          %s510 = smul.addr %s509, 4
          %s511 = smul.addr %s510, 4
          %s512 = scalar_lea.vmem %s4, %s511
        $region36: #{decoder_forward.1} parent=31 // pred_fallthru
          _
        // Predicated region
        $region37: #{decoder_forward.1} parent=31 // pred_check
          %p513 = pneg %p184
        $region38: #{decoder_forward.1} parent=31 // pred_check_branch
          %515 = sbr.rel (%p513) target = $region40
        $region39: #{decoder_forward.1} parent=31 // pred_region
          %p516 = scmp.lt.s32.totalorder %s30, 1
          %s517 = scalar_select %p516, %s30, 1
          %s518 = scalar_lea.vmem %s5, %s517
        $region40: #{decoder_forward.1} parent=31 // pred_fallthru
          _
        // Predicated region
        $region41: #{decoder_forward.1} parent=31 // pred_check
          %p519 = pneg %p210
        $region42: #{decoder_forward.1} parent=31 // pred_check_branch
          %521 = sbr.rel (%p519) target = $region44
        $region43: #{decoder_forward.1} parent=31 // pred_region
          %p522 = scmp.lt.s32.totalorder %s30, 1
          %s523 = scalar_select %p522, %s30, 1
          %s524 = smul.addr %s523, 4
          %s525 = smul.addr %s524, 4
          %s526 = scalar_lea.vmem %s6, %s525
        $region44: #{decoder_forward.1} parent=31 // pred_fallthru
          _
        // Predicated region
        $region45: #{decoder_forward.1} parent=31 // pred_check
          %p527 = pneg %p236
        $region46: #{decoder_forward.1} parent=31 // pred_check_branch
          %529 = sbr.rel (%p527) target = $region48
        $region47: #{decoder_forward.1} parent=31 // pred_region
          %p530 = scmp.lt.s32.totalorder %s30, 1
          %s531 = scalar_select %p530, %s30, 1
          %s532 = smul.addr %s531, 4
          %s533 = smul.addr %s532, 4
          %s534 = scalar_lea.vmem %s7, %s533
        $region48: #{decoder_forward.1} parent=31 // pred_fallthru
          _
        // Predicated region
        $region49: #{decoder_forward.1} parent=31 // pred_check
          %p535 = pneg %p262
        $region50: #{decoder_forward.1} parent=31 // pred_check_branch
          %537 = sbr.rel (%p535) target = $region52
        $region51: #{decoder_forward.1} parent=31 // pred_region
          %p538 = scmp.lt.s32.totalorder %s30, 1
          %s539 = scalar_select %p538, %s30, 1
          %s540 = smul.addr %s539, 4
          %s541 = smul.addr %s540, 4
          %s542 = scalar_lea.vmem %s8, %s541
        $region52: #{decoder_forward.1} parent=31 // pred_fallthru
          _
        // Predicated region
        $region53: #{decoder_forward.1} parent=31 // pred_check
          %p543 = pneg %p288
        $region54: #{decoder_forward.1} parent=31 // pred_check_branch
          %545 = sbr.rel (%p543) target = $region56
        $region55: #{decoder_forward.1} parent=31 // pred_region
          %p546 = scmp.lt.s32.totalorder %s30, 1
          %s547 = scalar_select %p546, %s30, 1
          %s548 = scalar_lea.vmem %s9, %s547
        $region56: #{decoder_forward.1} parent=31 // pred_fallthru
          _
        // Predicated region
        $region57: #{decoder_forward.1} parent=31 // pred_check
          %p549 = pneg %p314
        $region58: #{decoder_forward.1} parent=31 // pred_check_branch
          %551 = sbr.rel (%p549) target = $region60
        $region59: #{decoder_forward.1} parent=31 // pred_region
          %p552 = scmp.lt.s32.totalorder %s30, 1
          %s553 = scalar_select %p552, %s30, 1
          %s554 = smul.addr %s553, 4
          %s555 = smul.addr %s554, 4
          %s556 = scalar_lea.vmem %s10, %s555
        $region60: #{decoder_forward.1} parent=31 // pred_fallthru
          _
        // Predicated region
        $region61: #{decoder_forward.1} parent=31 // pred_check
          %p557 = pneg %p340
        $region62: #{decoder_forward.1} parent=31 // pred_check_branch
          %559 = sbr.rel (%p557) target = $region64
        $region63: #{decoder_forward.1} parent=31 // pred_region
          %p560 = scmp.lt.s32.totalorder %s30, 1
          %s561 = scalar_select %p560, %s30, 1
          %s562 = smul.addr %s561, 4
          %s563 = smul.addr %s562, 4
          %s564 = scalar_lea.vmem %s11, %s563
        $region64: #{decoder_forward.1} parent=31 // pred_fallthru
          _
        // Predicated region
        $region65: #{decoder_forward.1} parent=31 // pred_check
          %p565 = pneg %p366
        $region66: #{decoder_forward.1} parent=31 // pred_check_branch
          %567 = sbr.rel (%p565) target = $region68
        $region67: #{decoder_forward.1} parent=31 // pred_region
          %p568 = scmp.lt.s32.totalorder %s30, 1
          %s569 = scalar_select %p568, %s30, 1
          %s570 = scalar_lea.vmem %s12, %s569
        $region68: #{decoder_forward.1} parent=31 // pred_fallthru
          _
        // Predicated region
        $region69: #{decoder_forward.1} parent=31 // pred_check
          %p571 = pneg %p392
        $region70: #{decoder_forward.1} parent=31 // pred_check_branch
          %573 = sbr.rel (%p571) target = $region72
        $region71: #{decoder_forward.1} parent=31 // pred_region
          %p574 = scmp.lt.s32.totalorder %s30, 1
          %s575 = scalar_select %p574, %s30, 1
          %s576 = smul.addr %s575, 8
          %s577 = smul.addr %s576, 4
          %s578 = scalar_lea.vmem %s13, %s577
        $region72: #{decoder_forward.1} parent=31 // pred_fallthru
          _
        // Predicated region
        $region73: #{decoder_forward.1} parent=31 // pred_check
          %p579 = pneg %p418
        $region74: #{decoder_forward.1} parent=31 // pred_check_branch
          %581 = sbr.rel (%p579) target = $region76
        $region75: #{decoder_forward.1} parent=31 // pred_region
          %p582 = scmp.lt.s32.totalorder %s30, 1
          %s583 = scalar_select %p582, %s30, 1
          %s584 = smul.addr %s583, 2
          %s585 = smul.addr %s584, 8
          %s586 = scalar_lea.vmem %s14, %s585
        $region76: #{decoder_forward.1} parent=31 // pred_fallthru
          _
      $region32: #{decoder_forward.1} parent=5 // pred_fallthru
        _
      %p587 = scmp.le.s32.totalorder 1, %s22
      %p588 = scmp.lt.s32.totalorder %s22, 3
      %p589 = pnand %p587, %p588
      %p590 = pneg %p589
      // Predicated region
      $region77: #{decoder_forward.1} parent=5 // pred_check
        _
      $region78: #{decoder_forward.1} parent=5 // pred_check_branch
        %592 = sbr.rel (%p589) target = $region80
      $region79: #{decoder_forward.1} parent=5 // pred_region
        %s593 = ssub.s32 %s22, 1
        %s594 = smul.u32 2, %s31
        %p595 = scmp.lt.s32.totalorder %s594, 1
        %s596 = scalar_select %p595, %s594, 1
        %s597 = smul.addr %s596, 8
        %s598 = scalar_lea.vmem %s0, %s597
        %p599 = pneg %p60
        %p600 = pneg %p57
        %s601 = smul.u32 4, %s31
        %p602 = scmp.lt.s32.totalorder %s601, 3
        %s603 = scalar_select %p602, %s601, 3
        %s604 = smul.addr %s603, 4
        %s605 = scalar_lea.vmem %s1, %s604
        %p606 = pneg %p86
        %p607 = pneg %p83
        %s608 = smul.u32 2, %s31
        %p609 = scmp.lt.s32.totalorder %s608, 1
        %s610 = scalar_select %p609, %s608, 1
        %s611 = smul.addr %s610, 8
        %s612 = scalar_lea.vmem %s2, %s611
        %p613 = pneg %p112
        %p614 = pneg %p109
        %s615 = smul.u32 2, %s31
        %p616 = scmp.lt.s32.totalorder %s615, 1
        %s617 = scalar_select %p616, %s615, 1
        %s618 = smul.addr %s617, 8
        %s619 = scalar_lea.vmem %s3, %s618
        %p620 = pneg %p138
        %p621 = pneg %p135
        %p622 = scmp.lt.s32.totalorder %s32, 1
        %s623 = scalar_select %p622, %s32, 1
        %s624 = smul.addr %s623, 4
        %s625 = smul.addr %s624, 4
        %s626 = scalar_lea.vmem %s4, %s625
        %p627 = pneg %p164
        %p628 = pneg %p161
        %p629 = scmp.lt.s32.totalorder %s32, 1
        %s630 = scalar_select %p629, %s32, 1
        %s631 = scalar_lea.vmem %s5, %s630
        %p632 = pneg %p190
        %p633 = pneg %p187
        %p634 = scmp.lt.s32.totalorder %s32, 1
        %s635 = scalar_select %p634, %s32, 1
        %s636 = smul.addr %s635, 4
        %s637 = smul.addr %s636, 4
        %s638 = scalar_lea.vmem %s6, %s637
        %p639 = pneg %p216
        %p640 = pneg %p213
        %p641 = scmp.lt.s32.totalorder %s32, 1
        %s642 = scalar_select %p641, %s32, 1
        %s643 = smul.addr %s642, 4
        %s644 = smul.addr %s643, 4
        %s645 = scalar_lea.vmem %s7, %s644
        %p646 = pneg %p242
        %p647 = pneg %p239
        %p648 = scmp.lt.s32.totalorder %s32, 1
        %s649 = scalar_select %p648, %s32, 1
        %s650 = smul.addr %s649, 4
        %s651 = smul.addr %s650, 4
        %s652 = scalar_lea.vmem %s8, %s651
        %p653 = pneg %p268
        %p654 = pneg %p265
        %p655 = scmp.lt.s32.totalorder %s32, 1
        %s656 = scalar_select %p655, %s32, 1
        %s657 = scalar_lea.vmem %s9, %s656
        %p658 = pneg %p294
        %p659 = pneg %p291
        %p660 = scmp.lt.s32.totalorder %s32, 1
        %s661 = scalar_select %p660, %s32, 1
        %s662 = smul.addr %s661, 4
        %s663 = smul.addr %s662, 4
        %s664 = scalar_lea.vmem %s10, %s663
        %p665 = pneg %p320
        %p666 = pneg %p317
        %p667 = scmp.lt.s32.totalorder %s32, 1
        %s668 = scalar_select %p667, %s32, 1
        %s669 = smul.addr %s668, 4
        %s670 = smul.addr %s669, 4
        %s671 = scalar_lea.vmem %s11, %s670
        %p672 = pneg %p346
        %p673 = pneg %p343
        %p674 = scmp.lt.s32.totalorder %s32, 1
        %s675 = scalar_select %p674, %s32, 1
        %s676 = scalar_lea.vmem %s12, %s675
        %p677 = pneg %p372
        %p678 = pneg %p369
        %p679 = scmp.lt.s32.totalorder %s32, 1
        %s680 = scalar_select %p679, %s32, 1
        %s681 = smul.addr %s680, 8
        %s682 = smul.addr %s681, 4
        %s683 = scalar_lea.vmem %s13, %s682
        %p684 = pneg %p398
        %p685 = pneg %p395
        %p686 = scmp.lt.s32.totalorder %s32, 1
        %s687 = scalar_select %p686, %s32, 1
        %s688 = smul.addr %s687, 2
        %s689 = smul.addr %s688, 8
        %s690 = scalar_lea.vmem %s14, %s689
        %p691 = pneg %p424
        %p692 = pneg %p421
        %p693 = pneg %p450
        %p694 = pneg %p447
        %s695 = smul.u32 2, %s31
        %p696 = scmp.lt.s32.totalorder %s695, 1
        %s697 = scalar_select %p696, %s695, 1
        %s698 = smul.addr %s697, 8
        %s699 = scalar_lea.vmem %s0, %s698
        %s700 = smul.u32 2, %s31
        %s701 = smul.u32 4, %s31
        %p702 = scmp.lt.s32.totalorder %s701, 3
        %s703 = scalar_select %p702, %s701, 3
        %s704 = smul.addr %s703, 4
        %s705 = scalar_lea.vmem %s1, %s704
        %s706 = smul.u32 4, %s31
        %s707 = smul.u32 2, %s31
        %p708 = scmp.lt.s32.totalorder %s707, 1
        %s709 = scalar_select %p708, %s707, 1
        %s710 = smul.addr %s709, 8
        %s711 = scalar_lea.vmem %s2, %s710
        %s712 = smul.u32 2, %s31
        %s713 = smul.u32 2, %s31
        %p714 = scmp.lt.s32.totalorder %s713, 1
        %s715 = scalar_select %p714, %s713, 1
        %s716 = smul.addr %s715, 8
        %s717 = scalar_lea.vmem %s3, %s716
        %s718 = smul.u32 2, %s31
        %p719 = scmp.lt.s32.totalorder %s32, 1
        %s720 = scalar_select %p719, %s32, 1
        %s721 = smul.addr %s720, 4
        %s722 = smul.addr %s721, 4
        %s723 = scalar_lea.vmem %s4, %s722
        %p724 = scmp.lt.s32.totalorder %s32, 1
        %s725 = scalar_select %p724, %s32, 1
        %s726 = scalar_lea.vmem %s5, %s725
        %p727 = scmp.lt.s32.totalorder %s32, 1
        %s728 = scalar_select %p727, %s32, 1
        %s729 = smul.addr %s728, 4
        %s730 = smul.addr %s729, 4
        %s731 = scalar_lea.vmem %s6, %s730
        %p732 = scmp.lt.s32.totalorder %s32, 1
        %s733 = scalar_select %p732, %s32, 1
        %s734 = smul.addr %s733, 4
        %s735 = smul.addr %s734, 4
        %s736 = scalar_lea.vmem %s7, %s735
        %p737 = scmp.lt.s32.totalorder %s32, 1
        %s738 = scalar_select %p737, %s32, 1
        %s739 = smul.addr %s738, 4
        %s740 = smul.addr %s739, 4
        %s741 = scalar_lea.vmem %s8, %s740
        %p742 = scmp.lt.s32.totalorder %s32, 1
        %s743 = scalar_select %p742, %s32, 1
        %s744 = scalar_lea.vmem %s9, %s743
        %p745 = scmp.lt.s32.totalorder %s32, 1
        %s746 = scalar_select %p745, %s32, 1
        %s747 = smul.addr %s746, 4
        %s748 = smul.addr %s747, 4
        %s749 = scalar_lea.vmem %s10, %s748
        %p750 = scmp.lt.s32.totalorder %s32, 1
        %s751 = scalar_select %p750, %s32, 1
        %s752 = smul.addr %s751, 4
        %s753 = smul.addr %s752, 4
        %s754 = scalar_lea.vmem %s11, %s753
        %p755 = scmp.lt.s32.totalorder %s32, 1
        %s756 = scalar_select %p755, %s32, 1
        %s757 = scalar_lea.vmem %s12, %s756
        %p758 = scmp.lt.s32.totalorder %s32, 1
        %s759 = scalar_select %p758, %s32, 1
        %s760 = smul.addr %s759, 8
        %s761 = smul.addr %s760, 4
        %s762 = scalar_lea.vmem %s13, %s761
        %p763 = scmp.lt.s32.totalorder %s32, 1
        %s764 = scalar_select %p763, %s32, 1
        %s765 = smul.addr %s764, 2
        %s766 = smul.addr %s765, 8
        %s767 = scalar_lea.vmem %s14, %s766
        %s768 = smul.u32 2, %s31
        %p770 = scmp.eq.s32.totalorder %s32, 0
        // Predicated region
        $region81: #{decoder_forward.1} parent=79 // pred_check
          %p771 = pneg %p770
        $region82: #{decoder_forward.1} parent=79 // pred_check_branch
          %773 = sbr.rel (%p771) target = $region84
        $region83: #{decoder_forward.1} parent=79 // pred_region
          %v774 = vld [vmem:[%s699] sm:$0xff]
          %v775 = vld [vmem:[%s699 + $0x8] sm:$0xff]
          %vm776 = vcmask 261120
          %777 = vst.msk [vmem:[#allocation2] sm:$0xff] %vm776, %v774
          %778 = vst.msk [vmem:[#allocation2 + $0x8] sm:$0xff] %vm776, %v775
        $region84: #{decoder_forward.1} parent=79 // pred_fallthru
          _
        %v779 = vld [vmem:[#allocation2] sm:$0xff]
        %v780 = vld [vmem:[#allocation2 + $0x8] sm:$0xff]
        %v781 = vld [vmem:[%s767] sm:$0xff]
        %v782 = vld [vmem:[%s767 + $0x8] sm:$0x3]
        %v783 = vpack.c.bf16 %v780, %v779
        %v784 = vld [vmem:[%s726] sm:$0x1]
        %v785 = vld [vmem:[%s723] sm:$0xf]
        %v786 = vld [vmem:[%s723 + $0x4] sm:$0xf]
        %v787 = vld [vmem:[%s723 + $0x8] sm:$0xf]
        %v788 = vld [vmem:[%s723 + $0xc] sm:$0xf]
        %v790 = vlaneseq
        %v791 = vshrl.u32 %v790, 7
        %v792 = vsub.s32 0, %v791
        %v793 = vrot.slane %v784, %v792
        %v799 = vunpack.c.l.b16 %v785
        %v800 = vunpack.c.l.b16 %v786
        %v801 = vunpack.c.l.b16 %v787
        %v802 = vunpack.c.l.b16 %v788
        %v803 = vpack.c.b16 %v800, %v799
        %v804 = vpack.c.b16 %v802, %v801
        %vm807 = vcmask 261120
        %v809 = vsel %vm807, %v783, 0
        %811 = vmatprep.subr.bf16.mxu0 0
        %812 = vmatpush1.bf16.msra.mxu0 0
        %813 = vmatprep.subr.bf16.mxu0 0
        %814 = vmatpush1.bf16.msra.mxu0 0
        %815 = vmatprep.subr.bf16.mxu0 0
        %816 = vmatpush1.bf16.msra.mxu0 0
        %817 = vmatprep.subr.bf16.mxu0 0
        %818 = vmatpush1.bf16.msra.mxu0 0
        %819 = vmatprep.subr.bf16.mxu0 0
        %820 = vmatpush1.bf16.msra.mxu0 0
        %821 = vmatprep.subr.bf16.mxu0 0
        %822 = vmatpush1.bf16.msra.mxu0 0
        %823 = vmatprep.subr.bf16.mxu0 0
        %824 = vmatpush1.bf16.msra.mxu0 %v804
        %825 = vmatprep.subr.bf16.mxu0 0
        %826 = vmatpush1.bf16.msra.mxu0 %v803
        %827 = vmatprep.subr.bf16.mxu0 0
        %828 = vmatpush2.bf16.msra.mxu0 0
        %829 = vmatprep.subr.bf16.mxu0 0
        %830 = vmatpush2.bf16.msra.mxu0 0
        %831 = vmatprep.subr.bf16.mxu0 0
        %832 = vmatpush2.bf16.msra.mxu0 0
        %833 = vmatprep.subr.bf16.mxu0 0
        %834 = vmatpush2.bf16.msra.mxu0 0
        %835 = vmatprep.subr.bf16.mxu0 0
        %836 = vmatpush2.bf16.msra.mxu0 0
        %837 = vmatprep.subr.bf16.mxu0 0
        %838 = vmatpush2.bf16.msra.mxu0 0
        %839 = vmatprep.subr.bf16.mxu0 0
        %840 = vmatpush2.bf16.msra.mxu0 0
        %841 = vmatprep.subr.bf16.mxu0 0
        %842 = vmatpush2.bf16.msra.mxu0 0
        %843 = vmatprep.mubr.bf16.mxu0 0
        %844 = vmatmul.mubr.bf16.gmra.mxu0 %v809
        %v845 = vpop.f32.mrf.mxu0
        %v846 = vadd.f32 %v793, %v845
        %v847 = vpop.f32.mrf.mxu0
        %v848 = vpop.f32.mrf.mxu0
        %v849 = vadd.f32 %v793, %v848
        %v850 = vpop.f32.mrf.mxu0
        %851 = vdwg.mxu0
        %v852 = vld [vmem:[%s711] sm:$0xff]
        %v853 = vld [vmem:[%s711 + $0x8] sm:$0xff]
        %v854 = vpack.c.bf16 %v846, %v846
        %v855 = vpack.c.bf16 %v849, %v849
        %857 = vrot.lane.b32.xlu0 %v854, 96
        %v858 = vpop.permute.xlu0 %857
        %vm859 = vcmask 64512
        %v861 = vsel %vm859, %v854, 0
        %v864 = vsel %vm859, %v858, 0
        %866 = vmatprep.subr.bf16.mxu0 0
        %867 = vmatpush1.bf16.xpose.msra.mxu0 0
        %868 = vmatprep.subr.bf16.mxu0 0
        %869 = vmatpush1.bf16.xpose.msra.mxu0 0
        %870 = vmatprep.subr.bf16.mxu0 0
        %871 = vmatpush1.bf16.xpose.msra.mxu0 0
        %872 = vmatprep.subr.bf16.mxu0 0
        %873 = vmatpush1.bf16.xpose.msra.mxu0 0
        %874 = vmatprep.subr.bf16.mxu0 0
        %875 = vmatpush1.bf16.xpose.msra.mxu0 0
        %876 = vmatprep.subr.bf16.mxu0 0
        %877 = vmatpush1.bf16.xpose.msra.mxu0 0
        %878 = vmatprep.subr.bf16.mxu0 0
        %879 = vmatpush1.bf16.xpose.msra.mxu0 0
        %880 = vmatprep.subr.bf16.mxu0 0
        %881 = vmatpush1.bf16.xpose.msra.mxu0 %v864
        %882 = vmatprep.subr.bf16.mxu0 0
        %883 = vmatpush2.bf16.xpose.msra.mxu0 0
        %884 = vmatprep.subr.bf16.mxu0 0
        %885 = vmatpush2.bf16.xpose.msra.mxu0 0
        %886 = vmatprep.subr.bf16.mxu0 0
        %887 = vmatpush2.bf16.xpose.msra.mxu0 0
        %888 = vmatprep.subr.bf16.mxu0 0
        %889 = vmatpush2.bf16.xpose.msra.mxu0 0
        %890 = vmatprep.subr.bf16.mxu0 0
        %891 = vmatpush2.bf16.xpose.msra.mxu0 0
        %892 = vmatprep.subr.bf16.mxu0 0
        %893 = vmatpush2.bf16.xpose.msra.mxu0 0
        %894 = vmatprep.subr.bf16.mxu0 0
        %895 = vmatpush2.bf16.xpose.msra.mxu0 0
        %896 = vmatprep.subr.bf16.mxu0 0
        %897 = vmatpush2.bf16.xpose.msra.mxu0 0
        %898 = vmatprep.mubr.bf16.mxu0 0
        %899 = vmatmul.mubr.bf16.gmra.mxu0 %v861
        %v900 = vpop.f32.mrf.mxu0
        %v901 = vadd.f32 %v852, %v900
        %v902 = vpop.f32.mrf.mxu0
        %v903 = vpop.f32.mrf.mxu0
        %v904 = vpop.f32.mrf.mxu0
        %905 = vdwg.mxu0
        %907 = vrot.lane.b32.xlu0 %v855, 96
        %v908 = vpop.permute.xlu0 %907
        %v910 = vsel %vm859, %v855, 0
        %v913 = vsel %vm859, %v908, 0
        %915 = vmatprep.subr.bf16.mxu0 0
        %916 = vmatpush1.bf16.xpose.msra.mxu0 0
        %917 = vmatprep.subr.bf16.mxu0 0
        %918 = vmatpush1.bf16.xpose.msra.mxu0 0
        %919 = vmatprep.subr.bf16.mxu0 0
        %920 = vmatpush1.bf16.xpose.msra.mxu0 0
        %921 = vmatprep.subr.bf16.mxu0 0
        %922 = vmatpush1.bf16.xpose.msra.mxu0 0
        %923 = vmatprep.subr.bf16.mxu0 0
        %924 = vmatpush1.bf16.xpose.msra.mxu0 0
        %925 = vmatprep.subr.bf16.mxu0 0
        %926 = vmatpush1.bf16.xpose.msra.mxu0 0
        %927 = vmatprep.subr.bf16.mxu0 0
        %928 = vmatpush1.bf16.xpose.msra.mxu0 0
        %929 = vmatprep.subr.bf16.mxu0 0
        %930 = vmatpush1.bf16.xpose.msra.mxu0 %v913
        %931 = vmatprep.subr.bf16.mxu0 0
        %932 = vmatpush2.bf16.xpose.msra.mxu0 0
        %933 = vmatprep.subr.bf16.mxu0 0
        %934 = vmatpush2.bf16.xpose.msra.mxu0 0
        %935 = vmatprep.subr.bf16.mxu0 0
        %936 = vmatpush2.bf16.xpose.msra.mxu0 0
        %937 = vmatprep.subr.bf16.mxu0 0
        %938 = vmatpush2.bf16.xpose.msra.mxu0 0
        %939 = vmatprep.subr.bf16.mxu0 0
        %940 = vmatpush2.bf16.xpose.msra.mxu0 0
        %941 = vmatprep.subr.bf16.mxu0 0
        %942 = vmatpush2.bf16.xpose.msra.mxu0 0
        %943 = vmatprep.subr.bf16.mxu0 0
        %944 = vmatpush2.bf16.xpose.msra.mxu0 0
        %945 = vmatprep.subr.bf16.mxu0 0
        %946 = vmatpush2.bf16.xpose.msra.mxu0 0
        %947 = vmatprep.mubr.bf16.mxu0 0
        %948 = vmatmul.mubr.bf16.gmra.mxu0 %v910
        %v949 = vpop.f32.mrf.mxu0
        %v950 = vadd.f32 %v853, %v949
        %v951 = vpop.f32.mrf.mxu0
        %v952 = vpop.f32.mrf.mxu0
        %v953 = vpop.f32.mrf.mxu0
        %954 = vdwg.mxu0
        %v955 = vsel %vm859, %v901, -inf
        %956 = vmax.xlane.f32.xlu0 %v955
        %v957 = vpop.xlane.xlu0 %956
        %v958 = vsel %vm859, %v950, -inf
        %959 = vmax.xlane.f32.xlu0 %v958
        %v960 = vpop.xlane.xlu0 %959
        %v961 = vsub.f32 %v901, %v957
        %v962 = vsub.f32 %v950, %v960
        %v963 = vmul.f32 %v961, 1.442695
        %v964 = vpow.pop %v963
        %v965 = vmul.f32 %v962, 1.442695
        %v966 = vpow.pop %v965
        %v967 = vsel %vm859, %v964, 0.0
        %968 = vadd.xlane.f32.xlu0 %v967
        %v969 = vpop.xlane.xlu0 %968
        %v970 = vsel %vm859, %v966, 0.0
        %971 = vadd.xlane.f32.xlu0 %v970
        %v972 = vpop.xlane.xlu0 %971
        %v973 = vrcp.pop %v969
        %v974 = vrcp.pop %v972
        %v975 = vmul.f32 %v964, %v973
        %v976 = vmul.f32 %v966, %v974
        %v977 = vpack.c.bf16 %v975, %v975
        %v978 = vpack.c.bf16 %v976, %v976
        %979 = vrot.lane.b32.xlu0 %v854, 64
        %v980 = vpop.permute.xlu0 %979
        %v982 = vsel %vm859, %v977, 0
        %vm984 = vcmask 1043456
        %v986 = vsel %vm984, %v980, 0
        %988 = vmatprep.subr.bf16.mxu0 0
        %989 = vmatpush1.bf16.msra.mxu0 0
        %990 = vmatprep.subr.bf16.mxu0 0
        %991 = vmatpush1.bf16.msra.mxu0 0
        %992 = vmatprep.subr.bf16.mxu0 0
        %993 = vmatpush1.bf16.msra.mxu0 0
        %994 = vmatprep.subr.bf16.mxu0 0
        %995 = vmatpush1.bf16.msra.mxu0 0
        %996 = vmatprep.subr.bf16.mxu0 0
        %997 = vmatpush1.bf16.msra.mxu0 0
        %998 = vmatprep.subr.bf16.mxu0 0
        %999 = vmatpush1.bf16.msra.mxu0 0
        %1000 = vmatprep.subr.bf16.mxu0 0
        %1001 = vmatpush1.bf16.msra.mxu0 0
        %1002 = vmatprep.subr.bf16.mxu0 0
        %1003 = vmatpush1.bf16.msra.mxu0 %v986
        %1004 = vmatprep.subr.bf16.mxu0 0
        %1005 = vmatpush2.bf16.msra.mxu0 0
        %1006 = vmatprep.subr.bf16.mxu0 0
        %1007 = vmatpush2.bf16.msra.mxu0 0
        %1008 = vmatprep.subr.bf16.mxu0 0
        %1009 = vmatpush2.bf16.msra.mxu0 0
        %1010 = vmatprep.subr.bf16.mxu0 0
        %1011 = vmatpush2.bf16.msra.mxu0 0
        %1012 = vmatprep.subr.bf16.mxu0 0
        %1013 = vmatpush2.bf16.msra.mxu0 0
        %1014 = vmatprep.subr.bf16.mxu0 0
        %1015 = vmatpush2.bf16.msra.mxu0 0
        %1016 = vmatprep.subr.bf16.mxu0 0
        %1017 = vmatpush2.bf16.msra.mxu0 0
        %1018 = vmatprep.subr.bf16.mxu0 0
        %1019 = vmatpush2.bf16.msra.mxu0 0
        %1020 = vmatprep.mubr.bf16.mxu0 0
        %1021 = vmatmul.mubr.bf16.gmra.mxu0 %v982
        %v1022 = vpop.f32.mrf.mxu0
        %v1023 = vadd.f32 0.0, %v1022
        %v1024 = vpop.f32.mrf.mxu0
        %v1025 = vpop.f32.mrf.mxu0
        %v1026 = vpop.f32.mrf.mxu0
        %1027 = vdwg.mxu0
        %1028 = vrot.lane.b32.xlu0 %v855, 64
        %v1029 = vpop.permute.xlu0 %1028
        %v1031 = vsel %vm859, %v978, 0
        %v1034 = vsel %vm984, %v1029, 0
        %1036 = vmatprep.subr.bf16.mxu0 0
        %1037 = vmatpush1.bf16.msra.mxu0 0
        %1038 = vmatprep.subr.bf16.mxu0 0
        %1039 = vmatpush1.bf16.msra.mxu0 0
        %1040 = vmatprep.subr.bf16.mxu0 0
        %1041 = vmatpush1.bf16.msra.mxu0 0
        %1042 = vmatprep.subr.bf16.mxu0 0
        %1043 = vmatpush1.bf16.msra.mxu0 0
        %1044 = vmatprep.subr.bf16.mxu0 0
        %1045 = vmatpush1.bf16.msra.mxu0 0
        %1046 = vmatprep.subr.bf16.mxu0 0
        %1047 = vmatpush1.bf16.msra.mxu0 0
        %1048 = vmatprep.subr.bf16.mxu0 0
        %1049 = vmatpush1.bf16.msra.mxu0 0
        %1050 = vmatprep.subr.bf16.mxu0 0
        %1051 = vmatpush1.bf16.msra.mxu0 %v1034
        %1052 = vmatprep.subr.bf16.mxu0 0
        %1053 = vmatpush2.bf16.msra.mxu0 0
        %1054 = vmatprep.subr.bf16.mxu0 0
        %1055 = vmatpush2.bf16.msra.mxu0 0
        %1056 = vmatprep.subr.bf16.mxu0 0
        %1057 = vmatpush2.bf16.msra.mxu0 0
        %1058 = vmatprep.subr.bf16.mxu0 0
        %1059 = vmatpush2.bf16.msra.mxu0 0
        %1060 = vmatprep.subr.bf16.mxu0 0
        %1061 = vmatpush2.bf16.msra.mxu0 0
        %1062 = vmatprep.subr.bf16.mxu0 0
        %1063 = vmatpush2.bf16.msra.mxu0 0
        %1064 = vmatprep.subr.bf16.mxu0 0
        %1065 = vmatpush2.bf16.msra.mxu0 0
        %1066 = vmatprep.subr.bf16.mxu0 0
        %1067 = vmatpush2.bf16.msra.mxu0 0
        %1068 = vmatprep.mubr.bf16.mxu0 0
        %1069 = vmatmul.mubr.bf16.gmra.mxu0 %v1031
        %v1070 = vpop.f32.mrf.mxu0
        %v1071 = vadd.f32 0.0, %v1070
        %v1072 = vpop.f32.mrf.mxu0
        %v1073 = vpop.f32.mrf.mxu0
        %v1074 = vpop.f32.mrf.mxu0
        %1075 = vdwg.mxu0
        %1076 = vrot.lane.b32.xlu0 %v854, 120
        %v1077 = vpop.permute.xlu0 %1076
        %1078 = vrot.lane.b32.xlu0 %v854, 88
        %v1079 = vpop.permute.xlu0 %1078
        %v1081 = vsel %vm859, %v1077, 0
        %v1084 = vsel %vm859, %v1079, 0
        %1086 = vmatprep.subr.bf16.mxu0 0
        %1087 = vmatpush1.bf16.xpose.msra.mxu0 0
        %1088 = vmatprep.subr.bf16.mxu0 0
        %1089 = vmatpush1.bf16.xpose.msra.mxu0 0
        %1090 = vmatprep.subr.bf16.mxu0 0
        %1091 = vmatpush1.bf16.xpose.msra.mxu0 0
        %1092 = vmatprep.subr.bf16.mxu0 0
        %1093 = vmatpush1.bf16.xpose.msra.mxu0 0
        %1094 = vmatprep.subr.bf16.mxu0 0
        %1095 = vmatpush1.bf16.xpose.msra.mxu0 0
        %1096 = vmatprep.subr.bf16.mxu0 0
        %1097 = vmatpush1.bf16.xpose.msra.mxu0 0
        %1098 = vmatprep.subr.bf16.mxu0 0
        %1099 = vmatpush1.bf16.xpose.msra.mxu0 0
        %1100 = vmatprep.subr.bf16.mxu0 0
        %1101 = vmatpush1.bf16.xpose.msra.mxu0 %v1084
        %1102 = vmatprep.subr.bf16.mxu0 0
        %1103 = vmatpush2.bf16.xpose.msra.mxu0 0
        %1104 = vmatprep.subr.bf16.mxu0 0
        %1105 = vmatpush2.bf16.xpose.msra.mxu0 0
        %1106 = vmatprep.subr.bf16.mxu0 0
        %1107 = vmatpush2.bf16.xpose.msra.mxu0 0
        %1108 = vmatprep.subr.bf16.mxu0 0
        %1109 = vmatpush2.bf16.xpose.msra.mxu0 0
        %1110 = vmatprep.subr.bf16.mxu0 0
        %1111 = vmatpush2.bf16.xpose.msra.mxu0 0
        %1112 = vmatprep.subr.bf16.mxu0 0
        %1113 = vmatpush2.bf16.xpose.msra.mxu0 0
        %1114 = vmatprep.subr.bf16.mxu0 0
        %1115 = vmatpush2.bf16.xpose.msra.mxu0 0
        %1116 = vmatprep.subr.bf16.mxu0 0
        %1117 = vmatpush2.bf16.xpose.msra.mxu0 0
        %1118 = vmatprep.mubr.bf16.mxu0 0
        %1119 = vmatmul.mubr.bf16.gmra.mxu0 %v1081
        %v1120 = vpop.f32.mrf.mxu0
        %v1121 = vadd.f32 %v852, %v1120
        %v1122 = vpop.f32.mrf.mxu0
        %v1123 = vpop.f32.mrf.mxu0
        %v1124 = vpop.f32.mrf.mxu0
        %1125 = vdwg.mxu0
        %1126 = vrot.lane.b32.xlu0 %v855, 120
        %v1127 = vpop.permute.xlu0 %1126
        %1128 = vrot.lane.b32.xlu0 %v855, 88
        %v1129 = vpop.permute.xlu0 %1128
        %v1131 = vsel %vm859, %v1127, 0
        %v1134 = vsel %vm859, %v1129, 0
        %1136 = vmatprep.subr.bf16.mxu0 0
        %1137 = vmatpush1.bf16.xpose.msra.mxu0 0
        %1138 = vmatprep.subr.bf16.mxu0 0
        %1139 = vmatpush1.bf16.xpose.msra.mxu0 0
        %1140 = vmatprep.subr.bf16.mxu0 0
        %1141 = vmatpush1.bf16.xpose.msra.mxu0 0
        %1142 = vmatprep.subr.bf16.mxu0 0
        %1143 = vmatpush1.bf16.xpose.msra.mxu0 0
        %1144 = vmatprep.subr.bf16.mxu0 0
        %1145 = vmatpush1.bf16.xpose.msra.mxu0 0
        %1146 = vmatprep.subr.bf16.mxu0 0
        %1147 = vmatpush1.bf16.xpose.msra.mxu0 0
        %1148 = vmatprep.subr.bf16.mxu0 0
        %1149 = vmatpush1.bf16.xpose.msra.mxu0 0
        %1150 = vmatprep.subr.bf16.mxu0 0
        %1151 = vmatpush1.bf16.xpose.msra.mxu0 %v1134
        %1152 = vmatprep.subr.bf16.mxu0 0
        %1153 = vmatpush2.bf16.xpose.msra.mxu0 0
        %1154 = vmatprep.subr.bf16.mxu0 0
        %1155 = vmatpush2.bf16.xpose.msra.mxu0 0
        %1156 = vmatprep.subr.bf16.mxu0 0
        %1157 = vmatpush2.bf16.xpose.msra.mxu0 0
        %1158 = vmatprep.subr.bf16.mxu0 0
        %1159 = vmatpush2.bf16.xpose.msra.mxu0 0
        %1160 = vmatprep.subr.bf16.mxu0 0
        %1161 = vmatpush2.bf16.xpose.msra.mxu0 0
        %1162 = vmatprep.subr.bf16.mxu0 0
        %1163 = vmatpush2.bf16.xpose.msra.mxu0 0
        %1164 = vmatprep.subr.bf16.mxu0 0
        %1165 = vmatpush2.bf16.xpose.msra.mxu0 0
        %1166 = vmatprep.subr.bf16.mxu0 0
        %1167 = vmatpush2.bf16.xpose.msra.mxu0 0
        %1168 = vmatprep.mubr.bf16.mxu0 0
        %1169 = vmatmul.mubr.bf16.gmra.mxu0 %v1131
        %v1170 = vpop.f32.mrf.mxu0
        %v1171 = vadd.f32 %v853, %v1170
        %v1172 = vpop.f32.mrf.mxu0
        %v1173 = vpop.f32.mrf.mxu0
        %v1174 = vpop.f32.mrf.mxu0
        %1175 = vdwg.mxu0
        %v1176 = vsel %vm859, %v1121, -inf
        %1177 = vmax.xlane.f32.xlu0 %v1176
        %v1178 = vpop.xlane.xlu0 %1177
        %v1179 = vsel %vm859, %v1171, -inf
        %1180 = vmax.xlane.f32.xlu0 %v1179
        %v1181 = vpop.xlane.xlu0 %1180
        %v1182 = vsub.f32 %v1121, %v1178
        %v1183 = vsub.f32 %v1171, %v1181
        %v1184 = vmul.f32 %v1182, 1.442695
        %v1185 = vpow.pop %v1184
        %v1186 = vmul.f32 %v1183, 1.442695
        %v1187 = vpow.pop %v1186
        %v1188 = vsel %vm859, %v1185, 0.0
        %1189 = vadd.xlane.f32.xlu0 %v1188
        %v1190 = vpop.xlane.xlu0 %1189
        %v1191 = vsel %vm859, %v1187, 0.0
        %1192 = vadd.xlane.f32.xlu0 %v1191
        %v1193 = vpop.xlane.xlu0 %1192
        %v1194 = vrcp.pop %v1190
        %v1195 = vrcp.pop %v1193
        %v1196 = vmul.f32 %v1185, %v1194
        %v1197 = vmul.f32 %v1187, %v1195
        %v1198 = vpack.c.bf16 %v1196, %v1196
        %v1199 = vpack.c.bf16 %v1197, %v1197
        %1200 = vrot.lane.b32.xlu0 %v854, 56
        %v1201 = vpop.permute.xlu0 %1200
        %v1203 = vsel %vm859, %v1198, 0
        %v1206 = vsel %vm984, %v1201, 0
        %1208 = vmatprep.subr.bf16.mxu0 0
        %1209 = vmatpush1.bf16.msra.mxu0 0
        %1210 = vmatprep.subr.bf16.mxu0 0
        %1211 = vmatpush1.bf16.msra.mxu0 0
        %1212 = vmatprep.subr.bf16.mxu0 0
        %1213 = vmatpush1.bf16.msra.mxu0 0
        %1214 = vmatprep.subr.bf16.mxu0 0
        %1215 = vmatpush1.bf16.msra.mxu0 0
        %1216 = vmatprep.subr.bf16.mxu0 0
        %1217 = vmatpush1.bf16.msra.mxu0 0
        %1218 = vmatprep.subr.bf16.mxu0 0
        %1219 = vmatpush1.bf16.msra.mxu0 0
        %1220 = vmatprep.subr.bf16.mxu0 0
        %1221 = vmatpush1.bf16.msra.mxu0 0
        %1222 = vmatprep.subr.bf16.mxu0 0
        %1223 = vmatpush1.bf16.msra.mxu0 %v1206
        %1224 = vmatprep.subr.bf16.mxu0 0
        %1225 = vmatpush2.bf16.msra.mxu0 0
        %1226 = vmatprep.subr.bf16.mxu0 0
        %1227 = vmatpush2.bf16.msra.mxu0 0
        %1228 = vmatprep.subr.bf16.mxu0 0
        %1229 = vmatpush2.bf16.msra.mxu0 0
        %1230 = vmatprep.subr.bf16.mxu0 0
        %1231 = vmatpush2.bf16.msra.mxu0 0
        %1232 = vmatprep.subr.bf16.mxu0 0
        %1233 = vmatpush2.bf16.msra.mxu0 0
        %1234 = vmatprep.subr.bf16.mxu0 0
        %1235 = vmatpush2.bf16.msra.mxu0 0
        %1236 = vmatprep.subr.bf16.mxu0 0
        %1237 = vmatpush2.bf16.msra.mxu0 0
        %1238 = vmatprep.subr.bf16.mxu0 0
        %1239 = vmatpush2.bf16.msra.mxu0 0
        %1240 = vmatprep.mubr.bf16.mxu0 0
        %1241 = vmatmul.mubr.bf16.gmra.mxu0 %v1203
        %v1242 = vpop.f32.mrf.mxu0
        %v1243 = vadd.f32 0.0, %v1242
        %v1244 = vpop.f32.mrf.mxu0
        %v1245 = vpop.f32.mrf.mxu0
        %v1246 = vpop.f32.mrf.mxu0
        %1247 = vdwg.mxu0
        %1248 = vrot.lane.b32.xlu0 %v855, 56
        %v1249 = vpop.permute.xlu0 %1248
        %v1251 = vsel %vm859, %v1199, 0
        %v1254 = vsel %vm984, %v1249, 0
        %1256 = vmatprep.subr.bf16.mxu0 0
        %1257 = vmatpush1.bf16.msra.mxu0 0
        %1258 = vmatprep.subr.bf16.mxu0 0
        %1259 = vmatpush1.bf16.msra.mxu0 0
        %1260 = vmatprep.subr.bf16.mxu0 0
        %1261 = vmatpush1.bf16.msra.mxu0 0
        %1262 = vmatprep.subr.bf16.mxu0 0
        %1263 = vmatpush1.bf16.msra.mxu0 0
        %1264 = vmatprep.subr.bf16.mxu0 0
        %1265 = vmatpush1.bf16.msra.mxu0 0
        %1266 = vmatprep.subr.bf16.mxu0 0
        %1267 = vmatpush1.bf16.msra.mxu0 0
        %1268 = vmatprep.subr.bf16.mxu0 0
        %1269 = vmatpush1.bf16.msra.mxu0 0
        %1270 = vmatprep.subr.bf16.mxu0 0
        %1271 = vmatpush1.bf16.msra.mxu0 %v1254
        %1272 = vmatprep.subr.bf16.mxu0 0
        %1273 = vmatpush2.bf16.msra.mxu0 0
        %1274 = vmatprep.subr.bf16.mxu0 0
        %1275 = vmatpush2.bf16.msra.mxu0 0
        %1276 = vmatprep.subr.bf16.mxu0 0
        %1277 = vmatpush2.bf16.msra.mxu0 0
        %1278 = vmatprep.subr.bf16.mxu0 0
        %1279 = vmatpush2.bf16.msra.mxu0 0
        %1280 = vmatprep.subr.bf16.mxu0 0
        %1281 = vmatpush2.bf16.msra.mxu0 0
        %1282 = vmatprep.subr.bf16.mxu0 0
        %1283 = vmatpush2.bf16.msra.mxu0 0
        %1284 = vmatprep.subr.bf16.mxu0 0
        %1285 = vmatpush2.bf16.msra.mxu0 0
        %1286 = vmatprep.subr.bf16.mxu0 0
        %1287 = vmatpush2.bf16.msra.mxu0 0
        %1288 = vmatprep.mubr.bf16.mxu0 0
        %1289 = vmatmul.mubr.bf16.gmra.mxu0 %v1251
        %v1290 = vpop.f32.mrf.mxu0
        %v1291 = vadd.f32 0.0, %v1290
        %v1292 = vpop.f32.mrf.mxu0
        %v1293 = vpop.f32.mrf.mxu0
        %v1294 = vpop.f32.mrf.mxu0
        %1295 = vdwg.mxu0
        %1296 = vrot.lane.b32.xlu0 %v854, 112
        %v1297 = vpop.permute.xlu0 %1296
        %1298 = vrot.lane.b32.xlu0 %v854, 80
        %v1299 = vpop.permute.xlu0 %1298
        %v1301 = vsel %vm859, %v1297, 0
        %v1304 = vsel %vm859, %v1299, 0
        %1306 = vmatprep.subr.bf16.mxu0 0
        %1307 = vmatpush1.bf16.xpose.msra.mxu0 0
        %1308 = vmatprep.subr.bf16.mxu0 0
        %1309 = vmatpush1.bf16.xpose.msra.mxu0 0
        %1310 = vmatprep.subr.bf16.mxu0 0
        %1311 = vmatpush1.bf16.xpose.msra.mxu0 0
        %1312 = vmatprep.subr.bf16.mxu0 0
        %1313 = vmatpush1.bf16.xpose.msra.mxu0 0
        %1314 = vmatprep.subr.bf16.mxu0 0
        %1315 = vmatpush1.bf16.xpose.msra.mxu0 0
        %1316 = vmatprep.subr.bf16.mxu0 0
        %1317 = vmatpush1.bf16.xpose.msra.mxu0 0
        %1318 = vmatprep.subr.bf16.mxu0 0
        %1319 = vmatpush1.bf16.xpose.msra.mxu0 0
        %1320 = vmatprep.subr.bf16.mxu0 0
        %1321 = vmatpush1.bf16.xpose.msra.mxu0 %v1304
        %1322 = vmatprep.subr.bf16.mxu0 0
        %1323 = vmatpush2.bf16.xpose.msra.mxu0 0
        %1324 = vmatprep.subr.bf16.mxu0 0
        %1325 = vmatpush2.bf16.xpose.msra.mxu0 0
        %1326 = vmatprep.subr.bf16.mxu0 0
        %1327 = vmatpush2.bf16.xpose.msra.mxu0 0
        %1328 = vmatprep.subr.bf16.mxu0 0
        %1329 = vmatpush2.bf16.xpose.msra.mxu0 0
        %1330 = vmatprep.subr.bf16.mxu0 0
        %1331 = vmatpush2.bf16.xpose.msra.mxu0 0
        %1332 = vmatprep.subr.bf16.mxu0 0
        %1333 = vmatpush2.bf16.xpose.msra.mxu0 0
        %1334 = vmatprep.subr.bf16.mxu0 0
        %1335 = vmatpush2.bf16.xpose.msra.mxu0 0
        %1336 = vmatprep.subr.bf16.mxu0 0
        %1337 = vmatpush2.bf16.xpose.msra.mxu0 0
        %1338 = vmatprep.mubr.bf16.mxu0 0
        %1339 = vmatmul.mubr.bf16.gmra.mxu0 %v1301
        %v1340 = vpop.f32.mrf.mxu0
        %v1341 = vadd.f32 %v852, %v1340
        %v1342 = vpop.f32.mrf.mxu0
        %v1343 = vpop.f32.mrf.mxu0
        %v1344 = vpop.f32.mrf.mxu0
        %1345 = vdwg.mxu0
        %1346 = vrot.lane.b32.xlu0 %v855, 112
        %v1347 = vpop.permute.xlu0 %1346
        %1348 = vrot.lane.b32.xlu0 %v855, 80
        %v1349 = vpop.permute.xlu0 %1348
        %v1351 = vsel %vm859, %v1347, 0
        %v1354 = vsel %vm859, %v1349, 0
        %1356 = vmatprep.subr.bf16.mxu0 0
        %1357 = vmatpush1.bf16.xpose.msra.mxu0 0
        %1358 = vmatprep.subr.bf16.mxu0 0
        %1359 = vmatpush1.bf16.xpose.msra.mxu0 0
        %1360 = vmatprep.subr.bf16.mxu0 0
        %1361 = vmatpush1.bf16.xpose.msra.mxu0 0
        %1362 = vmatprep.subr.bf16.mxu0 0
        %1363 = vmatpush1.bf16.xpose.msra.mxu0 0
        %1364 = vmatprep.subr.bf16.mxu0 0
        %1365 = vmatpush1.bf16.xpose.msra.mxu0 0
        %1366 = vmatprep.subr.bf16.mxu0 0
        %1367 = vmatpush1.bf16.xpose.msra.mxu0 0
        %1368 = vmatprep.subr.bf16.mxu0 0
        %1369 = vmatpush1.bf16.xpose.msra.mxu0 0
        %1370 = vmatprep.subr.bf16.mxu0 0
        %1371 = vmatpush1.bf16.xpose.msra.mxu0 %v1354
        %1372 = vmatprep.subr.bf16.mxu0 0
        %1373 = vmatpush2.bf16.xpose.msra.mxu0 0
        %1374 = vmatprep.subr.bf16.mxu0 0
        %1375 = vmatpush2.bf16.xpose.msra.mxu0 0
        %1376 = vmatprep.subr.bf16.mxu0 0
        %1377 = vmatpush2.bf16.xpose.msra.mxu0 0
        %1378 = vmatprep.subr.bf16.mxu0 0
        %1379 = vmatpush2.bf16.xpose.msra.mxu0 0
        %1380 = vmatprep.subr.bf16.mxu0 0
        %1381 = vmatpush2.bf16.xpose.msra.mxu0 0
        %1382 = vmatprep.subr.bf16.mxu0 0
        %1383 = vmatpush2.bf16.xpose.msra.mxu0 0
        %1384 = vmatprep.subr.bf16.mxu0 0
        %1385 = vmatpush2.bf16.xpose.msra.mxu0 0
        %1386 = vmatprep.subr.bf16.mxu0 0
        %1387 = vmatpush2.bf16.xpose.msra.mxu0 0
        %1388 = vmatprep.mubr.bf16.mxu0 0
        %1389 = vmatmul.mubr.bf16.gmra.mxu0 %v1351
        %v1390 = vpop.f32.mrf.mxu0
        %v1391 = vadd.f32 %v853, %v1390
        %v1392 = vpop.f32.mrf.mxu0
        %v1393 = vpop.f32.mrf.mxu0
        %v1394 = vpop.f32.mrf.mxu0
        %1395 = vdwg.mxu0
        %v1396 = vsel %vm859, %v1341, -inf
        %1397 = vmax.xlane.f32.xlu0 %v1396
        %v1398 = vpop.xlane.xlu0 %1397
        %v1399 = vsel %vm859, %v1391, -inf
        %1400 = vmax.xlane.f32.xlu0 %v1399
        %v1401 = vpop.xlane.xlu0 %1400
        %v1402 = vsub.f32 %v1341, %v1398
        %v1403 = vsub.f32 %v1391, %v1401
        %v1404 = vmul.f32 %v1402, 1.442695
        %v1405 = vpow.pop %v1404
        %v1406 = vmul.f32 %v1403, 1.442695
        %v1407 = vpow.pop %v1406
        %v1408 = vsel %vm859, %v1405, 0.0
        %1409 = vadd.xlane.f32.xlu0 %v1408
        %v1410 = vpop.xlane.xlu0 %1409
        %v1411 = vsel %vm859, %v1407, 0.0
        %1412 = vadd.xlane.f32.xlu0 %v1411
        %v1413 = vpop.xlane.xlu0 %1412
        %v1414 = vrcp.pop %v1410
        %v1415 = vrcp.pop %v1413
        %v1416 = vmul.f32 %v1405, %v1414
        %v1417 = vmul.f32 %v1407, %v1415
        %v1418 = vpack.c.bf16 %v1416, %v1416
        %v1419 = vpack.c.bf16 %v1417, %v1417
        %1420 = vrot.lane.b32.xlu0 %v854, 48
        %v1421 = vpop.permute.xlu0 %1420
        %v1423 = vsel %vm859, %v1418, 0
        %v1426 = vsel %vm984, %v1421, 0
        %1428 = vmatprep.subr.bf16.mxu0 0
        %1429 = vmatpush1.bf16.msra.mxu0 0
        %1430 = vmatprep.subr.bf16.mxu0 0
        %1431 = vmatpush1.bf16.msra.mxu0 0
        %1432 = vmatprep.subr.bf16.mxu0 0
        %1433 = vmatpush1.bf16.msra.mxu0 0
        %1434 = vmatprep.subr.bf16.mxu0 0
        %1435 = vmatpush1.bf16.msra.mxu0 0
        %1436 = vmatprep.subr.bf16.mxu0 0
        %1437 = vmatpush1.bf16.msra.mxu0 0
        %1438 = vmatprep.subr.bf16.mxu0 0
        %1439 = vmatpush1.bf16.msra.mxu0 0
        %1440 = vmatprep.subr.bf16.mxu0 0
        %1441 = vmatpush1.bf16.msra.mxu0 0
        %1442 = vmatprep.subr.bf16.mxu0 0
        %1443 = vmatpush1.bf16.msra.mxu0 %v1426
        %1444 = vmatprep.subr.bf16.mxu0 0
        %1445 = vmatpush2.bf16.msra.mxu0 0
        %1446 = vmatprep.subr.bf16.mxu0 0
        %1447 = vmatpush2.bf16.msra.mxu0 0
        %1448 = vmatprep.subr.bf16.mxu0 0
        %1449 = vmatpush2.bf16.msra.mxu0 0
        %1450 = vmatprep.subr.bf16.mxu0 0
        %1451 = vmatpush2.bf16.msra.mxu0 0
        %1452 = vmatprep.subr.bf16.mxu0 0
        %1453 = vmatpush2.bf16.msra.mxu0 0
        %1454 = vmatprep.subr.bf16.mxu0 0
        %1455 = vmatpush2.bf16.msra.mxu0 0
        %1456 = vmatprep.subr.bf16.mxu0 0
        %1457 = vmatpush2.bf16.msra.mxu0 0
        %1458 = vmatprep.subr.bf16.mxu0 0
        %1459 = vmatpush2.bf16.msra.mxu0 0
        %1460 = vmatprep.mubr.bf16.mxu0 0
        %1461 = vmatmul.mubr.bf16.gmra.mxu0 %v1423
        %v1462 = vpop.f32.mrf.mxu0
        %v1463 = vadd.f32 0.0, %v1462
        %v1464 = vpop.f32.mrf.mxu0
        %v1465 = vpop.f32.mrf.mxu0
        %v1466 = vpop.f32.mrf.mxu0
        %1467 = vdwg.mxu0
        %1468 = vrot.lane.b32.xlu0 %v855, 48
        %v1469 = vpop.permute.xlu0 %1468
        %v1471 = vsel %vm859, %v1419, 0
        %v1474 = vsel %vm984, %v1469, 0
        %1476 = vmatprep.subr.bf16.mxu0 0
        %1477 = vmatpush1.bf16.msra.mxu0 0
        %1478 = vmatprep.subr.bf16.mxu0 0
        %1479 = vmatpush1.bf16.msra.mxu0 0
        %1480 = vmatprep.subr.bf16.mxu0 0
        %1481 = vmatpush1.bf16.msra.mxu0 0
        %1482 = vmatprep.subr.bf16.mxu0 0
        %1483 = vmatpush1.bf16.msra.mxu0 0
        %1484 = vmatprep.subr.bf16.mxu0 0
        %1485 = vmatpush1.bf16.msra.mxu0 0
        %1486 = vmatprep.subr.bf16.mxu0 0
        %1487 = vmatpush1.bf16.msra.mxu0 0
        %1488 = vmatprep.subr.bf16.mxu0 0
        %1489 = vmatpush1.bf16.msra.mxu0 0
        %1490 = vmatprep.subr.bf16.mxu0 0
        %1491 = vmatpush1.bf16.msra.mxu0 %v1474
        %1492 = vmatprep.subr.bf16.mxu0 0
        %1493 = vmatpush2.bf16.msra.mxu0 0
        %1494 = vmatprep.subr.bf16.mxu0 0
        %1495 = vmatpush2.bf16.msra.mxu0 0
        %1496 = vmatprep.subr.bf16.mxu0 0
        %1497 = vmatpush2.bf16.msra.mxu0 0
        %1498 = vmatprep.subr.bf16.mxu0 0
        %1499 = vmatpush2.bf16.msra.mxu0 0
        %1500 = vmatprep.subr.bf16.mxu0 0
        %1501 = vmatpush2.bf16.msra.mxu0 0
        %1502 = vmatprep.subr.bf16.mxu0 0
        %1503 = vmatpush2.bf16.msra.mxu0 0
        %1504 = vmatprep.subr.bf16.mxu0 0
        %1505 = vmatpush2.bf16.msra.mxu0 0
        %1506 = vmatprep.subr.bf16.mxu0 0
        %1507 = vmatpush2.bf16.msra.mxu0 0
        %1508 = vmatprep.mubr.bf16.mxu0 0
        %1509 = vmatmul.mubr.bf16.gmra.mxu0 %v1471
        %v1510 = vpop.f32.mrf.mxu0
        %v1511 = vadd.f32 0.0, %v1510
        %v1512 = vpop.f32.mrf.mxu0
        %v1513 = vpop.f32.mrf.mxu0
        %v1514 = vpop.f32.mrf.mxu0
        %1515 = vdwg.mxu0
        %1516 = vrot.lane.b32.xlu0 %v854, 104
        %v1517 = vpop.permute.xlu0 %1516
        %1518 = vrot.lane.b32.xlu0 %v854, 72
        %v1519 = vpop.permute.xlu0 %1518
        %v1521 = vsel %vm859, %v1517, 0
        %v1524 = vsel %vm859, %v1519, 0
        %1526 = vmatprep.subr.bf16.mxu0 0
        %1527 = vmatpush1.bf16.xpose.msra.mxu0 0
        %1528 = vmatprep.subr.bf16.mxu0 0
        %1529 = vmatpush1.bf16.xpose.msra.mxu0 0
        %1530 = vmatprep.subr.bf16.mxu0 0
        %1531 = vmatpush1.bf16.xpose.msra.mxu0 0
        %1532 = vmatprep.subr.bf16.mxu0 0
        %1533 = vmatpush1.bf16.xpose.msra.mxu0 0
        %1534 = vmatprep.subr.bf16.mxu0 0
        %1535 = vmatpush1.bf16.xpose.msra.mxu0 0
        %1536 = vmatprep.subr.bf16.mxu0 0
        %1537 = vmatpush1.bf16.xpose.msra.mxu0 0
        %1538 = vmatprep.subr.bf16.mxu0 0
        %1539 = vmatpush1.bf16.xpose.msra.mxu0 0
        %1540 = vmatprep.subr.bf16.mxu0 0
        %1541 = vmatpush1.bf16.xpose.msra.mxu0 %v1524
        %1542 = vmatprep.subr.bf16.mxu0 0
        %1543 = vmatpush2.bf16.xpose.msra.mxu0 0
        %1544 = vmatprep.subr.bf16.mxu0 0
        %1545 = vmatpush2.bf16.xpose.msra.mxu0 0
        %1546 = vmatprep.subr.bf16.mxu0 0
        %1547 = vmatpush2.bf16.xpose.msra.mxu0 0
        %1548 = vmatprep.subr.bf16.mxu0 0
        %1549 = vmatpush2.bf16.xpose.msra.mxu0 0
        %1550 = vmatprep.subr.bf16.mxu0 0
        %1551 = vmatpush2.bf16.xpose.msra.mxu0 0
        %1552 = vmatprep.subr.bf16.mxu0 0
        %1553 = vmatpush2.bf16.xpose.msra.mxu0 0
        %1554 = vmatprep.subr.bf16.mxu0 0
        %1555 = vmatpush2.bf16.xpose.msra.mxu0 0
        %1556 = vmatprep.subr.bf16.mxu0 0
        %1557 = vmatpush2.bf16.xpose.msra.mxu0 0
        %1558 = vmatprep.mubr.bf16.mxu0 0
        %1559 = vmatmul.mubr.bf16.gmra.mxu0 %v1521
        %v1560 = vpop.f32.mrf.mxu0
        %v1561 = vadd.f32 %v852, %v1560
        %v1562 = vpop.f32.mrf.mxu0
        %v1563 = vpop.f32.mrf.mxu0
        %v1564 = vpop.f32.mrf.mxu0
        %1565 = vdwg.mxu0
        %1566 = vrot.lane.b32.xlu0 %v855, 104
        %v1567 = vpop.permute.xlu0 %1566
        %1568 = vrot.lane.b32.xlu0 %v855, 72
        %v1569 = vpop.permute.xlu0 %1568
        %v1571 = vsel %vm859, %v1567, 0
        %v1574 = vsel %vm859, %v1569, 0
        %1576 = vmatprep.subr.bf16.mxu0 0
        %1577 = vmatpush1.bf16.xpose.msra.mxu0 0
        %1578 = vmatprep.subr.bf16.mxu0 0
        %1579 = vmatpush1.bf16.xpose.msra.mxu0 0
        %1580 = vmatprep.subr.bf16.mxu0 0
        %1581 = vmatpush1.bf16.xpose.msra.mxu0 0
        %1582 = vmatprep.subr.bf16.mxu0 0
        %1583 = vmatpush1.bf16.xpose.msra.mxu0 0
        %1584 = vmatprep.subr.bf16.mxu0 0
        %1585 = vmatpush1.bf16.xpose.msra.mxu0 0
        %1586 = vmatprep.subr.bf16.mxu0 0
        %1587 = vmatpush1.bf16.xpose.msra.mxu0 0
        %1588 = vmatprep.subr.bf16.mxu0 0
        %1589 = vmatpush1.bf16.xpose.msra.mxu0 0
        %1590 = vmatprep.subr.bf16.mxu0 0
        %1591 = vmatpush1.bf16.xpose.msra.mxu0 %v1574
        %1592 = vmatprep.subr.bf16.mxu0 0
        %1593 = vmatpush2.bf16.xpose.msra.mxu0 0
        %1594 = vmatprep.subr.bf16.mxu0 0
        %1595 = vmatpush2.bf16.xpose.msra.mxu0 0
        %1596 = vmatprep.subr.bf16.mxu0 0
        %1597 = vmatpush2.bf16.xpose.msra.mxu0 0
        %1598 = vmatprep.subr.bf16.mxu0 0
        %1599 = vmatpush2.bf16.xpose.msra.mxu0 0
        %1600 = vmatprep.subr.bf16.mxu0 0
        %1601 = vmatpush2.bf16.xpose.msra.mxu0 0
        %1602 = vmatprep.subr.bf16.mxu0 0
        %1603 = vmatpush2.bf16.xpose.msra.mxu0 0
        %1604 = vmatprep.subr.bf16.mxu0 0
        %1605 = vmatpush2.bf16.xpose.msra.mxu0 0
        %1606 = vmatprep.subr.bf16.mxu0 0
        %1607 = vmatpush2.bf16.xpose.msra.mxu0 0
        %1608 = vmatprep.mubr.bf16.mxu0 0
        %1609 = vmatmul.mubr.bf16.gmra.mxu0 %v1571
        %v1610 = vpop.f32.mrf.mxu0
        %v1611 = vadd.f32 %v853, %v1610
        %v1612 = vpop.f32.mrf.mxu0
        %v1613 = vpop.f32.mrf.mxu0
        %v1614 = vpop.f32.mrf.mxu0
        %1615 = vdwg.mxu0
        %v1616 = vsel %vm859, %v1561, -inf
        %1617 = vmax.xlane.f32.xlu0 %v1616
        %v1618 = vpop.xlane.xlu0 %1617
        %v1619 = vsel %vm859, %v1611, -inf
        %1620 = vmax.xlane.f32.xlu0 %v1619
        %v1621 = vpop.xlane.xlu0 %1620
        %v1622 = vsub.f32 %v1561, %v1618
        %v1623 = vsub.f32 %v1611, %v1621
        %v1624 = vmul.f32 %v1622, 1.442695
        %v1625 = vpow.pop %v1624
        %v1626 = vmul.f32 %v1623, 1.442695
        %v1627 = vpow.pop %v1626
        %v1628 = vsel %vm859, %v1625, 0.0
        %1629 = vadd.xlane.f32.xlu0 %v1628
        %v1630 = vpop.xlane.xlu0 %1629
        %v1631 = vsel %vm859, %v1627, 0.0
        %1632 = vadd.xlane.f32.xlu0 %v1631
        %v1633 = vpop.xlane.xlu0 %1632
        %v1634 = vrcp.pop %v1630
        %v1635 = vrcp.pop %v1633
        %v1636 = vmul.f32 %v1625, %v1634
        %v1637 = vmul.f32 %v1627, %v1635
        %v1638 = vpack.c.bf16 %v1636, %v1636
        %v1639 = vpack.c.bf16 %v1637, %v1637
        %1640 = vrot.lane.b32.xlu0 %v854, 40
        %v1641 = vpop.permute.xlu0 %1640
        %v1643 = vsel %vm859, %v1638, 0
        %v1646 = vsel %vm984, %v1641, 0
        %1648 = vmatprep.subr.bf16.mxu0 0
        %1649 = vmatpush1.bf16.msra.mxu0 0
        %1650 = vmatprep.subr.bf16.mxu0 0
        %1651 = vmatpush1.bf16.msra.mxu0 0
        %1652 = vmatprep.subr.bf16.mxu0 0
        %1653 = vmatpush1.bf16.msra.mxu0 0
        %1654 = vmatprep.subr.bf16.mxu0 0
        %1655 = vmatpush1.bf16.msra.mxu0 0
        %1656 = vmatprep.subr.bf16.mxu0 0
        %1657 = vmatpush1.bf16.msra.mxu0 0
        %1658 = vmatprep.subr.bf16.mxu0 0
        %1659 = vmatpush1.bf16.msra.mxu0 0
        %1660 = vmatprep.subr.bf16.mxu0 0
        %1661 = vmatpush1.bf16.msra.mxu0 0
        %1662 = vmatprep.subr.bf16.mxu0 0
        %1663 = vmatpush1.bf16.msra.mxu0 %v1646
        %1664 = vmatprep.subr.bf16.mxu0 0
        %1665 = vmatpush2.bf16.msra.mxu0 0
        %1666 = vmatprep.subr.bf16.mxu0 0
        %1667 = vmatpush2.bf16.msra.mxu0 0
        %1668 = vmatprep.subr.bf16.mxu0 0
        %1669 = vmatpush2.bf16.msra.mxu0 0
        %1670 = vmatprep.subr.bf16.mxu0 0
        %1671 = vmatpush2.bf16.msra.mxu0 0
        %1672 = vmatprep.subr.bf16.mxu0 0
        %1673 = vmatpush2.bf16.msra.mxu0 0
        %1674 = vmatprep.subr.bf16.mxu0 0
        %1675 = vmatpush2.bf16.msra.mxu0 0
        %1676 = vmatprep.subr.bf16.mxu0 0
        %1677 = vmatpush2.bf16.msra.mxu0 0
        %1678 = vmatprep.subr.bf16.mxu0 0
        %1679 = vmatpush2.bf16.msra.mxu0 0
        %1680 = vmatprep.mubr.bf16.mxu0 0
        %1681 = vmatmul.mubr.bf16.gmra.mxu0 %v1643
        %v1682 = vpop.f32.mrf.mxu0
        %v1683 = vadd.f32 0.0, %v1682
        %v1684 = vpop.f32.mrf.mxu0
        %v1685 = vpop.f32.mrf.mxu0
        %v1686 = vpop.f32.mrf.mxu0
        %1687 = vdwg.mxu0
        %1688 = vrot.lane.b32.xlu0 %v855, 40
        %v1689 = vpop.permute.xlu0 %1688
        %v1691 = vsel %vm859, %v1639, 0
        %v1694 = vsel %vm984, %v1689, 0
        %1696 = vmatprep.subr.bf16.mxu0 0
        %1697 = vmatpush1.bf16.msra.mxu0 0
        %1698 = vmatprep.subr.bf16.mxu0 0
        %1699 = vmatpush1.bf16.msra.mxu0 0
        %1700 = vmatprep.subr.bf16.mxu0 0
        %1701 = vmatpush1.bf16.msra.mxu0 0
        %1702 = vmatprep.subr.bf16.mxu0 0
        %1703 = vmatpush1.bf16.msra.mxu0 0
        %1704 = vmatprep.subr.bf16.mxu0 0
        %1705 = vmatpush1.bf16.msra.mxu0 0
        %1706 = vmatprep.subr.bf16.mxu0 0
        %1707 = vmatpush1.bf16.msra.mxu0 0
        %1708 = vmatprep.subr.bf16.mxu0 0
        %1709 = vmatpush1.bf16.msra.mxu0 0
        %1710 = vmatprep.subr.bf16.mxu0 0
        %1711 = vmatpush1.bf16.msra.mxu0 %v1694
        %1712 = vmatprep.subr.bf16.mxu0 0
        %1713 = vmatpush2.bf16.msra.mxu0 0
        %1714 = vmatprep.subr.bf16.mxu0 0
        %1715 = vmatpush2.bf16.msra.mxu0 0
        %1716 = vmatprep.subr.bf16.mxu0 0
        %1717 = vmatpush2.bf16.msra.mxu0 0
        %1718 = vmatprep.subr.bf16.mxu0 0
        %1719 = vmatpush2.bf16.msra.mxu0 0
        %1720 = vmatprep.subr.bf16.mxu0 0
        %1721 = vmatpush2.bf16.msra.mxu0 0
        %1722 = vmatprep.subr.bf16.mxu0 0
        %1723 = vmatpush2.bf16.msra.mxu0 0
        %1724 = vmatprep.subr.bf16.mxu0 0
        %1725 = vmatpush2.bf16.msra.mxu0 0
        %1726 = vmatprep.subr.bf16.mxu0 0
        %1727 = vmatpush2.bf16.msra.mxu0 0
        %1728 = vmatprep.mubr.bf16.mxu0 0
        %1729 = vmatmul.mubr.bf16.gmra.mxu0 %v1691
        %v1730 = vpop.f32.mrf.mxu0
        %v1731 = vadd.f32 0.0, %v1730
        %v1732 = vpop.f32.mrf.mxu0
        %v1733 = vpop.f32.mrf.mxu0
        %v1734 = vpop.f32.mrf.mxu0
        %1735 = vdwg.mxu0
        %1738 = vrot.lane.b32.xlu0 %v1243, 8
        %v1739 = vpop.permute.xlu0 %1738
        %1740 = vrot.lane.b32.xlu0 %v1291, 8
        %v1741 = vpop.permute.xlu0 %1740
        %1746 = vrot.lane.b32.xlu0 %v1463, 16
        %v1747 = vpop.permute.xlu0 %1746
        %1748 = vrot.lane.b32.xlu0 %v1511, 16
        %v1749 = vpop.permute.xlu0 %1748
        %1754 = vrot.lane.b32.xlu0 %v1683, 24
        %v1755 = vpop.permute.xlu0 %1754
        %1756 = vrot.lane.b32.xlu0 %v1731, 24
        %v1757 = vpop.permute.xlu0 %1756
        %v1760 = vsel %vm859, %v1023, %v1739
        %v1761 = vsel %vm859, %v1071, %v1741
        %vm1762 = vcmask 130048
        %v1763 = vsel %vm1762, %v1760, %v1747
        %v1764 = vsel %vm1762, %v1761, %v1749
        %vm1765 = vcmask 195584
        %v1766 = vsel %vm1765, %v1763, %v1755
        %v1767 = vsel %vm1765, %v1764, %v1757
        %v1768 = vpack.c.bf16 %v1767, %v1766
        %v1769 = vld [vmem:[%s731] sm:$0xf]
        %v1770 = vld [vmem:[%s731 + $0x4] sm:$0xf]
        %v1771 = vld [vmem:[%s731 + $0x8] sm:$0xf]
        %v1772 = vld [vmem:[%s731 + $0xc] sm:$0xf]
        %v1773 = vlaneseq
        %v1774 = vshrl.u32 %v1773, 7
        %v1775 = vsub.s32 0, %v1774
        %v1776 = vrot.slane %v781, %v1775
        %v1781 = vunpack.c.l.b16 %v1769
        %v1782 = vunpack.c.l.b16 %v1770
        %v1783 = vunpack.c.l.b16 %v1771
        %v1784 = vunpack.c.l.b16 %v1772
        %v1785 = vpack.c.b16 %v1782, %v1781
        %v1786 = vpack.c.b16 %v1784, %v1783
        %v1790 = vsel %vm807, %v1768, 0
        %1792 = vmatprep.subr.bf16.mxu0 0
        %1793 = vmatpush1.bf16.msra.mxu0 0
        %1794 = vmatprep.subr.bf16.mxu0 0
        %1795 = vmatpush1.bf16.msra.mxu0 0
        %1796 = vmatprep.subr.bf16.mxu0 0
        %1797 = vmatpush1.bf16.msra.mxu0 0
        %1798 = vmatprep.subr.bf16.mxu0 0
        %1799 = vmatpush1.bf16.msra.mxu0 0
        %1800 = vmatprep.subr.bf16.mxu0 0
        %1801 = vmatpush1.bf16.msra.mxu0 0
        %1802 = vmatprep.subr.bf16.mxu0 0
        %1803 = vmatpush1.bf16.msra.mxu0 0
        %1804 = vmatprep.subr.bf16.mxu0 0
        %1805 = vmatpush1.bf16.msra.mxu0 %v1786
        %1806 = vmatprep.subr.bf16.mxu0 0
        %1807 = vmatpush1.bf16.msra.mxu0 %v1785
        %1808 = vmatprep.subr.bf16.mxu0 0
        %1809 = vmatpush2.bf16.msra.mxu0 0
        %1810 = vmatprep.subr.bf16.mxu0 0
        %1811 = vmatpush2.bf16.msra.mxu0 0
        %1812 = vmatprep.subr.bf16.mxu0 0
        %1813 = vmatpush2.bf16.msra.mxu0 0
        %1814 = vmatprep.subr.bf16.mxu0 0
        %1815 = vmatpush2.bf16.msra.mxu0 0
        %1816 = vmatprep.subr.bf16.mxu0 0
        %1817 = vmatpush2.bf16.msra.mxu0 0
        %1818 = vmatprep.subr.bf16.mxu0 0
        %1819 = vmatpush2.bf16.msra.mxu0 0
        %1820 = vmatprep.subr.bf16.mxu0 0
        %1821 = vmatpush2.bf16.msra.mxu0 0
        %1822 = vmatprep.subr.bf16.mxu0 0
        %1823 = vmatpush2.bf16.msra.mxu0 0
        %1824 = vmatprep.mubr.bf16.mxu0 0
        %1825 = vmatmul.mubr.bf16.gmra.mxu0 %v1790
        %v1826 = vpop.f32.mrf.mxu0
        %v1827 = vadd.f32 %v1776, %v1826
        %v1828 = vpop.f32.mrf.mxu0
        %v1829 = vpop.f32.mrf.mxu0
        %v1830 = vadd.f32 %v1776, %v1829
        %v1831 = vpop.f32.mrf.mxu0
        %1832 = vdwg.mxu0
        %v1833 = vadd.f32 %v1827, %v779
        %v1834 = vadd.f32 %v1830, %v780
        %v1835 = vsel %vm807, %v1833, 0.0
        %1836 = vadd.xlane.f32.xlu0 %v1835
        %v1837 = vpop.xlane.xlu0 %1836
        %v1838 = vsel %vm807, %v1834, 0.0
        %1839 = vadd.xlane.f32.xlu0 %v1838
        %v1840 = vpop.xlane.xlu0 %1839
        %v1841 = vrcp.pop 32.0
        %v1842 = vmul.f32 %v1837, %v1841
        %v1843 = vmul.f32 %v1840, %v1841
        %v1844 = vsub.f32 %v1833, %v1842
        %v1845 = vsub.f32 %v1834, %v1843
        %v1846 = vmul.f32 %v1844, %v1844
        %v1847 = vmul.f32 %v1845, %v1845
        %v1848 = vsel %vm807, %v1846, 0.0
        %1849 = vadd.xlane.f32.xlu0 %v1848
        %v1850 = vpop.xlane.xlu0 %1849
        %v1851 = vsel %vm807, %v1847, 0.0
        %1852 = vadd.xlane.f32.xlu0 %v1851
        %v1853 = vpop.xlane.xlu0 %1852
        %v1854 = vmul.f32 %v1850, %v1841
        %v1855 = vmul.f32 %v1853, %v1841
        %v1856 = vadd.f32 %v1854, 1e-05
        %v1857 = vadd.f32 %v1855, 1e-05
        %v1858 = vrsqrt.pop %v1856
        %v1859 = vrsqrt.pop %v1857
        %v1860 = vmul.f32 %v1844, %v1858
        %v1861 = vmul.f32 %v1845, %v1859
        %v1862 = vlaneseq
        %v1863 = vshrl.u32 %v1862, 7
        %v1864 = vsub.s32 1, %v1863
        %v1865 = vrot.slane %v781, %v1864
        %v1866 = vmul.f32 %v1860, %v1865
        %v1867 = vmul.f32 %v1861, %v1865
        %v1868 = vlaneseq
        %v1869 = vshrl.u32 %v1868, 7
        %v1870 = vsub.s32 2, %v1869
        %v1871 = vrot.slane %v781, %v1870
        %v1872 = vadd.f32 %v1866, %v1871
        %v1873 = vadd.f32 %v1867, %v1871
        %v1874 = vpack.c.bf16 %v1873, %v1872
        %v1875 = vld [vmem:[%s736] sm:$0xf]
        %v1876 = vld [vmem:[%s736 + $0x4] sm:$0xf]
        %v1877 = vld [vmem:[%s736 + $0x8] sm:$0xf]
        %v1878 = vld [vmem:[%s736 + $0xc] sm:$0xf]
        %v1879 = vlaneseq
        %v1880 = vshrl.u32 %v1879, 7
        %v1881 = vsub.s32 3, %v1880
        %v1882 = vrot.slane %v781, %v1881
        %v1887 = vunpack.c.l.b16 %v1875
        %v1888 = vunpack.c.l.b16 %v1876
        %v1889 = vunpack.c.l.b16 %v1877
        %v1890 = vunpack.c.l.b16 %v1878
        %v1891 = vpack.c.b16 %v1888, %v1887
        %v1892 = vpack.c.b16 %v1890, %v1889
        %v1896 = vsel %vm807, %v1874, 0
        %1898 = vmatprep.subr.bf16.mxu0 0
        %1899 = vmatpush1.bf16.msra.mxu0 0
        %1900 = vmatprep.subr.bf16.mxu0 0
        %1901 = vmatpush1.bf16.msra.mxu0 0
        %1902 = vmatprep.subr.bf16.mxu0 0
        %1903 = vmatpush1.bf16.msra.mxu0 0
        %1904 = vmatprep.subr.bf16.mxu0 0
        %1905 = vmatpush1.bf16.msra.mxu0 0
        %1906 = vmatprep.subr.bf16.mxu0 0
        %1907 = vmatpush1.bf16.msra.mxu0 0
        %1908 = vmatprep.subr.bf16.mxu0 0
        %1909 = vmatpush1.bf16.msra.mxu0 0
        %1910 = vmatprep.subr.bf16.mxu0 0
        %1911 = vmatpush1.bf16.msra.mxu0 %v1892
        %1912 = vmatprep.subr.bf16.mxu0 0
        %1913 = vmatpush1.bf16.msra.mxu0 %v1891
        %1914 = vmatprep.subr.bf16.mxu0 0
        %1915 = vmatpush2.bf16.msra.mxu0 0
        %1916 = vmatprep.subr.bf16.mxu0 0
        %1917 = vmatpush2.bf16.msra.mxu0 0
        %1918 = vmatprep.subr.bf16.mxu0 0
        %1919 = vmatpush2.bf16.msra.mxu0 0
        %1920 = vmatprep.subr.bf16.mxu0 0
        %1921 = vmatpush2.bf16.msra.mxu0 0
        %1922 = vmatprep.subr.bf16.mxu0 0
        %1923 = vmatpush2.bf16.msra.mxu0 0
        %1924 = vmatprep.subr.bf16.mxu0 0
        %1925 = vmatpush2.bf16.msra.mxu0 0
        %1926 = vmatprep.subr.bf16.mxu0 0
        %1927 = vmatpush2.bf16.msra.mxu0 0
        %1928 = vmatprep.subr.bf16.mxu0 0
        %1929 = vmatpush2.bf16.msra.mxu0 0
        %1930 = vmatprep.mubr.bf16.mxu0 0
        %1931 = vmatmul.mubr.bf16.gmra.mxu0 %v1896
        %v1932 = vpop.f32.mrf.mxu0
        %v1933 = vadd.f32 %v1882, %v1932
        %v1934 = vpop.f32.mrf.mxu0
        %v1935 = vpop.f32.mrf.mxu0
        %v1936 = vadd.f32 %v1882, %v1935
        %v1937 = vpop.f32.mrf.mxu0
        %1938 = vdwg.mxu0
        %v1939 = vld [vmem:[%s705] sm:$0xf]
        %v1940 = vld [vmem:[%s705 + $0x4] sm:$0xf]
        %v1941 = vld [vmem:[%s705 + $0x8] sm:$0xf]
        %v1942 = vld [vmem:[%s705 + $0xc] sm:$0xf]
        %v1943 = vld [vmem:[%s744] sm:$0x1]
        %v1944 = vld [vmem:[%s741] sm:$0xf]
        %v1945 = vld [vmem:[%s741 + $0x4] sm:$0xf]
        %v1946 = vld [vmem:[%s741 + $0x8] sm:$0xf]
        %v1947 = vld [vmem:[%s741 + $0xc] sm:$0xf]
        %v1949 = vlaneseq
        %v1950 = vshrl.u32 %v1949, 7
        %v1951 = vsub.s32 0, %v1950
        %v1952 = vrot.slane %v1943, %v1951
        %v1958 = vunpack.c.l.b16 %v1939
        %v1959 = vunpack.c.l.b16 %v1940
        %v1960 = vunpack.c.l.b16 %v1941
        %v1961 = vunpack.c.l.b16 %v1942
        %v1962 = vpack.c.b16 %v1959, %v1958
        %v1963 = vpack.c.b16 %v1961, %v1960
        %v1968 = vunpack.c.l.b16 %v1944
        %v1969 = vunpack.c.l.b16 %v1945
        %v1970 = vunpack.c.l.b16 %v1946
        %v1971 = vunpack.c.l.b16 %v1947
        %v1972 = vpack.c.b16 %v1969, %v1968
        %v1973 = vpack.c.b16 %v1971, %v1970
        %v1977 = vsel %vm807, %v1962, 0
        %v1980 = vsel %vm807, %v1963, 0
        %1982 = vmatprep.subr.bf16.mxu0 0
        %1983 = vmatpush1.bf16.msra.mxu0 0
        %1984 = vmatprep.subr.bf16.mxu0 0
        %1985 = vmatpush1.bf16.msra.mxu0 0
        %1986 = vmatprep.subr.bf16.mxu0 0
        %1987 = vmatpush1.bf16.msra.mxu0 0
        %1988 = vmatprep.subr.bf16.mxu0 0
        %1989 = vmatpush1.bf16.msra.mxu0 0
        %1990 = vmatprep.subr.bf16.mxu0 0
        %1991 = vmatpush1.bf16.msra.mxu0 0
        %1992 = vmatprep.subr.bf16.mxu0 0
        %1993 = vmatpush1.bf16.msra.mxu0 0
        %1994 = vmatprep.subr.bf16.mxu0 0
        %1995 = vmatpush1.bf16.msra.mxu0 %v1973
        %1996 = vmatprep.subr.bf16.mxu0 0
        %1997 = vmatpush1.bf16.msra.mxu0 %v1972
        %1998 = vmatprep.subr.bf16.mxu0 0
        %1999 = vmatpush2.bf16.msra.mxu0 0
        %2000 = vmatprep.subr.bf16.mxu0 0
        %2001 = vmatpush2.bf16.msra.mxu0 0
        %2002 = vmatprep.subr.bf16.mxu0 0
        %2003 = vmatpush2.bf16.msra.mxu0 0
        %2004 = vmatprep.subr.bf16.mxu0 0
        %2005 = vmatpush2.bf16.msra.mxu0 0
        %2006 = vmatprep.subr.bf16.mxu0 0
        %2007 = vmatpush2.bf16.msra.mxu0 0
        %2008 = vmatprep.subr.bf16.mxu0 0
        %2009 = vmatpush2.bf16.msra.mxu0 0
        %2010 = vmatprep.subr.bf16.mxu0 0
        %2011 = vmatpush2.bf16.msra.mxu0 0
        %2012 = vmatprep.subr.bf16.mxu0 0
        %2013 = vmatpush2.bf16.msra.mxu0 0
        %2014 = vmatprep.mubr.bf16.mxu0 0
        %2015 = vmatmul.mubr.bf16.gmra.mxu0 %v1977
        %v2016 = vpop.f32.mrf.mxu0
        %v2017 = vadd.f32 %v1952, %v2016
        %v2018 = vpop.f32.mrf.mxu0
        %v2019 = vpop.f32.mrf.mxu0
        %v2020 = vadd.f32 %v1952, %v2019
        %v2021 = vpop.f32.mrf.mxu0
        %2022 = vmatprep.mubr.bf16.mxu0 0
        %2023 = vmatmul.mubr.bf16.gmra.mxu0 %v1980
        %v2024 = vpop.f32.mrf.mxu0
        %v2025 = vadd.f32 %v1952, %v2024
        %v2026 = vpop.f32.mrf.mxu0
        %v2027 = vpop.f32.mrf.mxu0
        %v2028 = vadd.f32 %v1952, %v2027
        %v2029 = vpop.f32.mrf.mxu0
        %2030 = vdwg.mxu0
        %v2031 = vld [vmem:[%s717] sm:$0xff]
        %v2032 = vld [vmem:[%s717 + $0x8] sm:$0xff]
        %v2033 = vpack.c.bf16 %v1933, %v1933
        %v2034 = vpack.c.bf16 %v1936, %v1936
        %v2035 = vpack.c.bf16 %v2020, %v2017
        %v2036 = vpack.c.bf16 %v2028, %v2025
        %v2038 = vsel %vm859, %v2033, 0
        %v2041 = vsel %vm859, %v2035, 0
        %2043 = vmatprep.subr.bf16.mxu0 0
        %2044 = vmatpush1.bf16.xpose.msra.mxu0 0
        %2045 = vmatprep.subr.bf16.mxu0 0
        %2046 = vmatpush1.bf16.xpose.msra.mxu0 0
        %2047 = vmatprep.subr.bf16.mxu0 0
        %2048 = vmatpush1.bf16.xpose.msra.mxu0 0
        %2049 = vmatprep.subr.bf16.mxu0 0
        %2050 = vmatpush1.bf16.xpose.msra.mxu0 0
        %2051 = vmatprep.subr.bf16.mxu0 0
        %2052 = vmatpush1.bf16.xpose.msra.mxu0 0
        %2053 = vmatprep.subr.bf16.mxu0 0
        %2054 = vmatpush1.bf16.xpose.msra.mxu0 0
        %2055 = vmatprep.subr.bf16.mxu0 0
        %2056 = vmatpush1.bf16.xpose.msra.mxu0 0
        %2057 = vmatprep.subr.bf16.mxu0 0
        %2058 = vmatpush1.bf16.xpose.msra.mxu0 %v2041
        %2059 = vmatprep.subr.bf16.mxu0 0
        %2060 = vmatpush2.bf16.xpose.msra.mxu0 0
        %2061 = vmatprep.subr.bf16.mxu0 0
        %2062 = vmatpush2.bf16.xpose.msra.mxu0 0
        %2063 = vmatprep.subr.bf16.mxu0 0
        %2064 = vmatpush2.bf16.xpose.msra.mxu0 0
        %2065 = vmatprep.subr.bf16.mxu0 0
        %2066 = vmatpush2.bf16.xpose.msra.mxu0 0
        %2067 = vmatprep.subr.bf16.mxu0 0
        %2068 = vmatpush2.bf16.xpose.msra.mxu0 0
        %2069 = vmatprep.subr.bf16.mxu0 0
        %2070 = vmatpush2.bf16.xpose.msra.mxu0 0
        %2071 = vmatprep.subr.bf16.mxu0 0
        %2072 = vmatpush2.bf16.xpose.msra.mxu0 0
        %2073 = vmatprep.subr.bf16.mxu0 0
        %2074 = vmatpush2.bf16.xpose.msra.mxu0 0
        %2075 = vmatprep.mubr.bf16.mxu0 0
        %2076 = vmatmul.mubr.bf16.gmra.mxu0 %v2038
        %v2077 = vpop.f32.mrf.mxu0
        %v2078 = vadd.f32 %v2031, %v2077
        %v2079 = vpop.f32.mrf.mxu0
        %v2080 = vpop.f32.mrf.mxu0
        %v2081 = vpop.f32.mrf.mxu0
        %2082 = vdwg.mxu0
        %v2084 = vsel %vm859, %v2034, 0
        %v2087 = vsel %vm859, %v2036, 0
        %2089 = vmatprep.subr.bf16.mxu0 0
        %2090 = vmatpush1.bf16.xpose.msra.mxu0 0
        %2091 = vmatprep.subr.bf16.mxu0 0
        %2092 = vmatpush1.bf16.xpose.msra.mxu0 0
        %2093 = vmatprep.subr.bf16.mxu0 0
        %2094 = vmatpush1.bf16.xpose.msra.mxu0 0
        %2095 = vmatprep.subr.bf16.mxu0 0
        %2096 = vmatpush1.bf16.xpose.msra.mxu0 0
        %2097 = vmatprep.subr.bf16.mxu0 0
        %2098 = vmatpush1.bf16.xpose.msra.mxu0 0
        %2099 = vmatprep.subr.bf16.mxu0 0
        %2100 = vmatpush1.bf16.xpose.msra.mxu0 0
        %2101 = vmatprep.subr.bf16.mxu0 0
        %2102 = vmatpush1.bf16.xpose.msra.mxu0 0
        %2103 = vmatprep.subr.bf16.mxu0 0
        %2104 = vmatpush1.bf16.xpose.msra.mxu0 %v2087
        %2105 = vmatprep.subr.bf16.mxu0 0
        %2106 = vmatpush2.bf16.xpose.msra.mxu0 0
        %2107 = vmatprep.subr.bf16.mxu0 0
        %2108 = vmatpush2.bf16.xpose.msra.mxu0 0
        %2109 = vmatprep.subr.bf16.mxu0 0
        %2110 = vmatpush2.bf16.xpose.msra.mxu0 0
        %2111 = vmatprep.subr.bf16.mxu0 0
        %2112 = vmatpush2.bf16.xpose.msra.mxu0 0
        %2113 = vmatprep.subr.bf16.mxu0 0
        %2114 = vmatpush2.bf16.xpose.msra.mxu0 0
        %2115 = vmatprep.subr.bf16.mxu0 0
        %2116 = vmatpush2.bf16.xpose.msra.mxu0 0
        %2117 = vmatprep.subr.bf16.mxu0 0
        %2118 = vmatpush2.bf16.xpose.msra.mxu0 0
        %2119 = vmatprep.subr.bf16.mxu0 0
        %2120 = vmatpush2.bf16.xpose.msra.mxu0 0
        %2121 = vmatprep.mubr.bf16.mxu0 0
        %2122 = vmatmul.mubr.bf16.gmra.mxu0 %v2084
        %v2123 = vpop.f32.mrf.mxu0
        %v2124 = vadd.f32 %v2032, %v2123
        %v2125 = vpop.f32.mrf.mxu0
        %v2126 = vpop.f32.mrf.mxu0
        %v2127 = vpop.f32.mrf.mxu0
        %2128 = vdwg.mxu0
        %v2129 = vsel %vm1762, %v2078, -inf
        %2130 = vmax.xlane.f32.xlu0 %v2129
        %v2131 = vpop.xlane.xlu0 %2130
        %v2132 = vsel %vm1762, %v2124, -inf
        %2133 = vmax.xlane.f32.xlu0 %v2132
        %v2134 = vpop.xlane.xlu0 %2133
        %v2135 = vsub.f32 %v2078, %v2131
        %v2136 = vsub.f32 %v2124, %v2134
        %v2137 = vmul.f32 %v2135, 1.442695
        %v2138 = vpow.pop %v2137
        %v2139 = vmul.f32 %v2136, 1.442695
        %v2140 = vpow.pop %v2139
        %v2141 = vsel %vm1762, %v2138, 0.0
        %2142 = vadd.xlane.f32.xlu0 %v2141
        %v2143 = vpop.xlane.xlu0 %2142
        %v2144 = vsel %vm1762, %v2140, 0.0
        %2145 = vadd.xlane.f32.xlu0 %v2144
        %v2146 = vpop.xlane.xlu0 %2145
        %v2147 = vrcp.pop %v2143
        %v2148 = vrcp.pop %v2146
        %v2149 = vmul.f32 %v2138, %v2147
        %v2150 = vmul.f32 %v2140, %v2148
        %v2151 = vpack.c.bf16 %v2149, %v2149
        %v2152 = vpack.c.bf16 %v2150, %v2150
        %2154 = vrot.lane.b32.xlu0 %v2035, 96
        %v2155 = vpop.permute.xlu0 %2154
        %v2158 = vsel %vm1762, %v2151, 0
        %2160 = vmatprep.subr.bf16.mxu0 0
        %2161 = vmatpush1.bf16.msra.mxu0 0
        %2162 = vmatprep.subr.bf16.mxu0 0
        %2163 = vmatpush1.bf16.msra.mxu0 0
        %2164 = vmatprep.subr.bf16.mxu0 0
        %2165 = vmatpush1.bf16.msra.mxu0 0
        %2166 = vmatprep.subr.bf16.mxu0 0
        %2167 = vmatpush1.bf16.msra.mxu0 0
        %2168 = vmatprep.subr.bf16.mxu0 0
        %2169 = vmatpush1.bf16.msra.mxu0 0
        %2170 = vmatprep.subr.bf16.mxu0 0
        %2171 = vmatpush1.bf16.msra.mxu0 0
        %2172 = vmatprep.subr.bf16.mxu0 0
        %2173 = vmatpush1.bf16.msra.mxu0 0
        %2174 = vmatprep.subr.bf16.mxu0 0
        %2175 = vmatpush1.bf16.msra.mxu0 %v2155
        %2176 = vmatprep.subr.bf16.mxu0 0
        %2177 = vmatpush2.bf16.msra.mxu0 0
        %2178 = vmatprep.subr.bf16.mxu0 0
        %2179 = vmatpush2.bf16.msra.mxu0 0
        %2180 = vmatprep.subr.bf16.mxu0 0
        %2181 = vmatpush2.bf16.msra.mxu0 0
        %2182 = vmatprep.subr.bf16.mxu0 0
        %2183 = vmatpush2.bf16.msra.mxu0 0
        %2184 = vmatprep.subr.bf16.mxu0 0
        %2185 = vmatpush2.bf16.msra.mxu0 0
        %2186 = vmatprep.subr.bf16.mxu0 0
        %2187 = vmatpush2.bf16.msra.mxu0 0
        %2188 = vmatprep.subr.bf16.mxu0 0
        %2189 = vmatpush2.bf16.msra.mxu0 0
        %2190 = vmatprep.subr.bf16.mxu0 0
        %2191 = vmatpush2.bf16.msra.mxu0 0
        %2192 = vmatprep.mubr.bf16.mxu0 0
        %2193 = vmatmul.mubr.bf16.gmra.mxu0 %v2158
        %v2194 = vpop.f32.mrf.mxu0
        %v2195 = vadd.f32 0.0, %v2194
        %v2196 = vpop.f32.mrf.mxu0
        %v2197 = vpop.f32.mrf.mxu0
        %v2198 = vpop.f32.mrf.mxu0
        %2199 = vdwg.mxu0
        %2201 = vrot.lane.b32.xlu0 %v2036, 96
        %v2202 = vpop.permute.xlu0 %2201
        %v2205 = vsel %vm1762, %v2152, 0
        %2207 = vmatprep.subr.bf16.mxu0 0
        %2208 = vmatpush1.bf16.msra.mxu0 0
        %2209 = vmatprep.subr.bf16.mxu0 0
        %2210 = vmatpush1.bf16.msra.mxu0 0
        %2211 = vmatprep.subr.bf16.mxu0 0
        %2212 = vmatpush1.bf16.msra.mxu0 0
        %2213 = vmatprep.subr.bf16.mxu0 0
        %2214 = vmatpush1.bf16.msra.mxu0 0
        %2215 = vmatprep.subr.bf16.mxu0 0
        %2216 = vmatpush1.bf16.msra.mxu0 0
        %2217 = vmatprep.subr.bf16.mxu0 0
        %2218 = vmatpush1.bf16.msra.mxu0 0
        %2219 = vmatprep.subr.bf16.mxu0 0
        %2220 = vmatpush1.bf16.msra.mxu0 0
        %2221 = vmatprep.subr.bf16.mxu0 0
        %2222 = vmatpush1.bf16.msra.mxu0 %v2202
        %2223 = vmatprep.subr.bf16.mxu0 0
        %2224 = vmatpush2.bf16.msra.mxu0 0
        %2225 = vmatprep.subr.bf16.mxu0 0
        %2226 = vmatpush2.bf16.msra.mxu0 0
        %2227 = vmatprep.subr.bf16.mxu0 0
        %2228 = vmatpush2.bf16.msra.mxu0 0
        %2229 = vmatprep.subr.bf16.mxu0 0
        %2230 = vmatpush2.bf16.msra.mxu0 0
        %2231 = vmatprep.subr.bf16.mxu0 0
        %2232 = vmatpush2.bf16.msra.mxu0 0
        %2233 = vmatprep.subr.bf16.mxu0 0
        %2234 = vmatpush2.bf16.msra.mxu0 0
        %2235 = vmatprep.subr.bf16.mxu0 0
        %2236 = vmatpush2.bf16.msra.mxu0 0
        %2237 = vmatprep.subr.bf16.mxu0 0
        %2238 = vmatpush2.bf16.msra.mxu0 0
        %2239 = vmatprep.mubr.bf16.mxu0 0
        %2240 = vmatmul.mubr.bf16.gmra.mxu0 %v2205
        %v2241 = vpop.f32.mrf.mxu0
        %v2242 = vadd.f32 0.0, %v2241
        %v2243 = vpop.f32.mrf.mxu0
        %v2244 = vpop.f32.mrf.mxu0
        %v2245 = vpop.f32.mrf.mxu0
        %2246 = vdwg.mxu0
        %2248 = vrot.lane.b32.xlu0 %v2033, 120
        %v2249 = vpop.permute.xlu0 %2248
        %2250 = vrot.lane.b32.xlu0 %v2035, 120
        %v2251 = vpop.permute.xlu0 %2250
        %v2253 = vsel %vm859, %v2249, 0
        %v2256 = vsel %vm859, %v2251, 0
        %2258 = vmatprep.subr.bf16.mxu0 0
        %2259 = vmatpush1.bf16.xpose.msra.mxu0 0
        %2260 = vmatprep.subr.bf16.mxu0 0
        %2261 = vmatpush1.bf16.xpose.msra.mxu0 0
        %2262 = vmatprep.subr.bf16.mxu0 0
        %2263 = vmatpush1.bf16.xpose.msra.mxu0 0
        %2264 = vmatprep.subr.bf16.mxu0 0
        %2265 = vmatpush1.bf16.xpose.msra.mxu0 0
        %2266 = vmatprep.subr.bf16.mxu0 0
        %2267 = vmatpush1.bf16.xpose.msra.mxu0 0
        %2268 = vmatprep.subr.bf16.mxu0 0
        %2269 = vmatpush1.bf16.xpose.msra.mxu0 0
        %2270 = vmatprep.subr.bf16.mxu0 0
        %2271 = vmatpush1.bf16.xpose.msra.mxu0 0
        %2272 = vmatprep.subr.bf16.mxu0 0
        %2273 = vmatpush1.bf16.xpose.msra.mxu0 %v2256
        %2274 = vmatprep.subr.bf16.mxu0 0
        %2275 = vmatpush2.bf16.xpose.msra.mxu0 0
        %2276 = vmatprep.subr.bf16.mxu0 0
        %2277 = vmatpush2.bf16.xpose.msra.mxu0 0
        %2278 = vmatprep.subr.bf16.mxu0 0
        %2279 = vmatpush2.bf16.xpose.msra.mxu0 0
        %2280 = vmatprep.subr.bf16.mxu0 0
        %2281 = vmatpush2.bf16.xpose.msra.mxu0 0
        %2282 = vmatprep.subr.bf16.mxu0 0
        %2283 = vmatpush2.bf16.xpose.msra.mxu0 0
        %2284 = vmatprep.subr.bf16.mxu0 0
        %2285 = vmatpush2.bf16.xpose.msra.mxu0 0
        %2286 = vmatprep.subr.bf16.mxu0 0
        %2287 = vmatpush2.bf16.xpose.msra.mxu0 0
        %2288 = vmatprep.subr.bf16.mxu0 0
        %2289 = vmatpush2.bf16.xpose.msra.mxu0 0
        %2290 = vmatprep.mubr.bf16.mxu0 0
        %2291 = vmatmul.mubr.bf16.gmra.mxu0 %v2253
        %v2292 = vpop.f32.mrf.mxu0
        %v2293 = vadd.f32 %v2031, %v2292
        %v2294 = vpop.f32.mrf.mxu0
        %v2295 = vpop.f32.mrf.mxu0
        %v2296 = vpop.f32.mrf.mxu0
        %2297 = vdwg.mxu0
        %2299 = vrot.lane.b32.xlu0 %v2034, 120
        %v2300 = vpop.permute.xlu0 %2299
        %2301 = vrot.lane.b32.xlu0 %v2036, 120
        %v2302 = vpop.permute.xlu0 %2301
        %v2304 = vsel %vm859, %v2300, 0
        %v2307 = vsel %vm859, %v2302, 0
        %2309 = vmatprep.subr.bf16.mxu0 0
        %2310 = vmatpush1.bf16.xpose.msra.mxu0 0
        %2311 = vmatprep.subr.bf16.mxu0 0
        %2312 = vmatpush1.bf16.xpose.msra.mxu0 0
        %2313 = vmatprep.subr.bf16.mxu0 0
        %2314 = vmatpush1.bf16.xpose.msra.mxu0 0
        %2315 = vmatprep.subr.bf16.mxu0 0
        %2316 = vmatpush1.bf16.xpose.msra.mxu0 0
        %2317 = vmatprep.subr.bf16.mxu0 0
        %2318 = vmatpush1.bf16.xpose.msra.mxu0 0
        %2319 = vmatprep.subr.bf16.mxu0 0
        %2320 = vmatpush1.bf16.xpose.msra.mxu0 0
        %2321 = vmatprep.subr.bf16.mxu0 0
        %2322 = vmatpush1.bf16.xpose.msra.mxu0 0
        %2323 = vmatprep.subr.bf16.mxu0 0
        %2324 = vmatpush1.bf16.xpose.msra.mxu0 %v2307
        %2325 = vmatprep.subr.bf16.mxu0 0
        %2326 = vmatpush2.bf16.xpose.msra.mxu0 0
        %2327 = vmatprep.subr.bf16.mxu0 0
        %2328 = vmatpush2.bf16.xpose.msra.mxu0 0
        %2329 = vmatprep.subr.bf16.mxu0 0
        %2330 = vmatpush2.bf16.xpose.msra.mxu0 0
        %2331 = vmatprep.subr.bf16.mxu0 0
        %2332 = vmatpush2.bf16.xpose.msra.mxu0 0
        %2333 = vmatprep.subr.bf16.mxu0 0
        %2334 = vmatpush2.bf16.xpose.msra.mxu0 0
        %2335 = vmatprep.subr.bf16.mxu0 0
        %2336 = vmatpush2.bf16.xpose.msra.mxu0 0
        %2337 = vmatprep.subr.bf16.mxu0 0
        %2338 = vmatpush2.bf16.xpose.msra.mxu0 0
        %2339 = vmatprep.subr.bf16.mxu0 0
        %2340 = vmatpush2.bf16.xpose.msra.mxu0 0
        %2341 = vmatprep.mubr.bf16.mxu0 0
        %2342 = vmatmul.mubr.bf16.gmra.mxu0 %v2304
        %v2343 = vpop.f32.mrf.mxu0
        %v2344 = vadd.f32 %v2032, %v2343
        %v2345 = vpop.f32.mrf.mxu0
        %v2346 = vpop.f32.mrf.mxu0
        %v2347 = vpop.f32.mrf.mxu0
        %2348 = vdwg.mxu0
        %v2349 = vsel %vm1762, %v2293, -inf
        %2350 = vmax.xlane.f32.xlu0 %v2349
        %v2351 = vpop.xlane.xlu0 %2350
        %v2352 = vsel %vm1762, %v2344, -inf
        %2353 = vmax.xlane.f32.xlu0 %v2352
        %v2354 = vpop.xlane.xlu0 %2353
        %v2355 = vsub.f32 %v2293, %v2351
        %v2356 = vsub.f32 %v2344, %v2354
        %v2357 = vmul.f32 %v2355, 1.442695
        %v2358 = vpow.pop %v2357
        %v2359 = vmul.f32 %v2356, 1.442695
        %v2360 = vpow.pop %v2359
        %v2361 = vsel %vm1762, %v2358, 0.0
        %2362 = vadd.xlane.f32.xlu0 %v2361
        %v2363 = vpop.xlane.xlu0 %2362
        %v2364 = vsel %vm1762, %v2360, 0.0
        %2365 = vadd.xlane.f32.xlu0 %v2364
        %v2366 = vpop.xlane.xlu0 %2365
        %v2367 = vrcp.pop %v2363
        %v2368 = vrcp.pop %v2366
        %v2369 = vmul.f32 %v2358, %v2367
        %v2370 = vmul.f32 %v2360, %v2368
        %v2371 = vpack.c.bf16 %v2369, %v2369
        %v2372 = vpack.c.bf16 %v2370, %v2370
        %2373 = vrot.lane.b32.xlu0 %v2035, 88
        %v2374 = vpop.permute.xlu0 %2373
        %v2377 = vsel %vm1762, %v2371, 0
        %2379 = vmatprep.subr.bf16.mxu0 0
        %2380 = vmatpush1.bf16.msra.mxu0 0
        %2381 = vmatprep.subr.bf16.mxu0 0
        %2382 = vmatpush1.bf16.msra.mxu0 0
        %2383 = vmatprep.subr.bf16.mxu0 0
        %2384 = vmatpush1.bf16.msra.mxu0 0
        %2385 = vmatprep.subr.bf16.mxu0 0
        %2386 = vmatpush1.bf16.msra.mxu0 0
        %2387 = vmatprep.subr.bf16.mxu0 0
        %2388 = vmatpush1.bf16.msra.mxu0 0
        %2389 = vmatprep.subr.bf16.mxu0 0
        %2390 = vmatpush1.bf16.msra.mxu0 0
        %2391 = vmatprep.subr.bf16.mxu0 0
        %2392 = vmatpush1.bf16.msra.mxu0 0
        %2393 = vmatprep.subr.bf16.mxu0 0
        %2394 = vmatpush1.bf16.msra.mxu0 %v2374
        %2395 = vmatprep.subr.bf16.mxu0 0
        %2396 = vmatpush2.bf16.msra.mxu0 0
        %2397 = vmatprep.subr.bf16.mxu0 0
        %2398 = vmatpush2.bf16.msra.mxu0 0
        %2399 = vmatprep.subr.bf16.mxu0 0
        %2400 = vmatpush2.bf16.msra.mxu0 0
        %2401 = vmatprep.subr.bf16.mxu0 0
        %2402 = vmatpush2.bf16.msra.mxu0 0
        %2403 = vmatprep.subr.bf16.mxu0 0
        %2404 = vmatpush2.bf16.msra.mxu0 0
        %2405 = vmatprep.subr.bf16.mxu0 0
        %2406 = vmatpush2.bf16.msra.mxu0 0
        %2407 = vmatprep.subr.bf16.mxu0 0
        %2408 = vmatpush2.bf16.msra.mxu0 0
        %2409 = vmatprep.subr.bf16.mxu0 0
        %2410 = vmatpush2.bf16.msra.mxu0 0
        %2411 = vmatprep.mubr.bf16.mxu0 0
        %2412 = vmatmul.mubr.bf16.gmra.mxu0 %v2377
        %v2413 = vpop.f32.mrf.mxu0
        %v2414 = vadd.f32 0.0, %v2413
        %v2415 = vpop.f32.mrf.mxu0
        %v2416 = vpop.f32.mrf.mxu0
        %v2417 = vpop.f32.mrf.mxu0
        %2418 = vdwg.mxu0
        %2419 = vrot.lane.b32.xlu0 %v2036, 88
        %v2420 = vpop.permute.xlu0 %2419
        %v2423 = vsel %vm1762, %v2372, 0
        %2425 = vmatprep.subr.bf16.mxu0 0
        %2426 = vmatpush1.bf16.msra.mxu0 0
        %2427 = vmatprep.subr.bf16.mxu0 0
        %2428 = vmatpush1.bf16.msra.mxu0 0
        %2429 = vmatprep.subr.bf16.mxu0 0
        %2430 = vmatpush1.bf16.msra.mxu0 0
        %2431 = vmatprep.subr.bf16.mxu0 0
        %2432 = vmatpush1.bf16.msra.mxu0 0
        %2433 = vmatprep.subr.bf16.mxu0 0
        %2434 = vmatpush1.bf16.msra.mxu0 0
        %2435 = vmatprep.subr.bf16.mxu0 0
        %2436 = vmatpush1.bf16.msra.mxu0 0
        %2437 = vmatprep.subr.bf16.mxu0 0
        %2438 = vmatpush1.bf16.msra.mxu0 0
        %2439 = vmatprep.subr.bf16.mxu0 0
        %2440 = vmatpush1.bf16.msra.mxu0 %v2420
        %2441 = vmatprep.subr.bf16.mxu0 0
        %2442 = vmatpush2.bf16.msra.mxu0 0
        %2443 = vmatprep.subr.bf16.mxu0 0
        %2444 = vmatpush2.bf16.msra.mxu0 0
        %2445 = vmatprep.subr.bf16.mxu0 0
        %2446 = vmatpush2.bf16.msra.mxu0 0
        %2447 = vmatprep.subr.bf16.mxu0 0
        %2448 = vmatpush2.bf16.msra.mxu0 0
        %2449 = vmatprep.subr.bf16.mxu0 0
        %2450 = vmatpush2.bf16.msra.mxu0 0
        %2451 = vmatprep.subr.bf16.mxu0 0
        %2452 = vmatpush2.bf16.msra.mxu0 0
        %2453 = vmatprep.subr.bf16.mxu0 0
        %2454 = vmatpush2.bf16.msra.mxu0 0
        %2455 = vmatprep.subr.bf16.mxu0 0
        %2456 = vmatpush2.bf16.msra.mxu0 0
        %2457 = vmatprep.mubr.bf16.mxu0 0
        %2458 = vmatmul.mubr.bf16.gmra.mxu0 %v2423
        %v2459 = vpop.f32.mrf.mxu0
        %v2460 = vadd.f32 0.0, %v2459
        %v2461 = vpop.f32.mrf.mxu0
        %v2462 = vpop.f32.mrf.mxu0
        %v2463 = vpop.f32.mrf.mxu0
        %2464 = vdwg.mxu0
        %2465 = vrot.lane.b32.xlu0 %v2033, 112
        %v2466 = vpop.permute.xlu0 %2465
        %2467 = vrot.lane.b32.xlu0 %v2035, 112
        %v2468 = vpop.permute.xlu0 %2467
        %v2470 = vsel %vm859, %v2466, 0
        %v2473 = vsel %vm859, %v2468, 0
        %2475 = vmatprep.subr.bf16.mxu0 0
        %2476 = vmatpush1.bf16.xpose.msra.mxu0 0
        %2477 = vmatprep.subr.bf16.mxu0 0
        %2478 = vmatpush1.bf16.xpose.msra.mxu0 0
        %2479 = vmatprep.subr.bf16.mxu0 0
        %2480 = vmatpush1.bf16.xpose.msra.mxu0 0
        %2481 = vmatprep.subr.bf16.mxu0 0
        %2482 = vmatpush1.bf16.xpose.msra.mxu0 0
        %2483 = vmatprep.subr.bf16.mxu0 0
        %2484 = vmatpush1.bf16.xpose.msra.mxu0 0
        %2485 = vmatprep.subr.bf16.mxu0 0
        %2486 = vmatpush1.bf16.xpose.msra.mxu0 0
        %2487 = vmatprep.subr.bf16.mxu0 0
        %2488 = vmatpush1.bf16.xpose.msra.mxu0 0
        %2489 = vmatprep.subr.bf16.mxu0 0
        %2490 = vmatpush1.bf16.xpose.msra.mxu0 %v2473
        %2491 = vmatprep.subr.bf16.mxu0 0
        %2492 = vmatpush2.bf16.xpose.msra.mxu0 0
        %2493 = vmatprep.subr.bf16.mxu0 0
        %2494 = vmatpush2.bf16.xpose.msra.mxu0 0
        %2495 = vmatprep.subr.bf16.mxu0 0
        %2496 = vmatpush2.bf16.xpose.msra.mxu0 0
        %2497 = vmatprep.subr.bf16.mxu0 0
        %2498 = vmatpush2.bf16.xpose.msra.mxu0 0
        %2499 = vmatprep.subr.bf16.mxu0 0
        %2500 = vmatpush2.bf16.xpose.msra.mxu0 0
        %2501 = vmatprep.subr.bf16.mxu0 0
        %2502 = vmatpush2.bf16.xpose.msra.mxu0 0
        %2503 = vmatprep.subr.bf16.mxu0 0
        %2504 = vmatpush2.bf16.xpose.msra.mxu0 0
        %2505 = vmatprep.subr.bf16.mxu0 0
        %2506 = vmatpush2.bf16.xpose.msra.mxu0 0
        %2507 = vmatprep.mubr.bf16.mxu0 0
        %2508 = vmatmul.mubr.bf16.gmra.mxu0 %v2470
        %v2509 = vpop.f32.mrf.mxu0
        %v2510 = vadd.f32 %v2031, %v2509
        %v2511 = vpop.f32.mrf.mxu0
        %v2512 = vpop.f32.mrf.mxu0
        %v2513 = vpop.f32.mrf.mxu0
        %2514 = vdwg.mxu0
        %2515 = vrot.lane.b32.xlu0 %v2034, 112
        %v2516 = vpop.permute.xlu0 %2515
        %2517 = vrot.lane.b32.xlu0 %v2036, 112
        %v2518 = vpop.permute.xlu0 %2517
        %v2520 = vsel %vm859, %v2516, 0
        %v2523 = vsel %vm859, %v2518, 0
        %2525 = vmatprep.subr.bf16.mxu0 0
        %2526 = vmatpush1.bf16.xpose.msra.mxu0 0
        %2527 = vmatprep.subr.bf16.mxu0 0
        %2528 = vmatpush1.bf16.xpose.msra.mxu0 0
        %2529 = vmatprep.subr.bf16.mxu0 0
        %2530 = vmatpush1.bf16.xpose.msra.mxu0 0
        %2531 = vmatprep.subr.bf16.mxu0 0
        %2532 = vmatpush1.bf16.xpose.msra.mxu0 0
        %2533 = vmatprep.subr.bf16.mxu0 0
        %2534 = vmatpush1.bf16.xpose.msra.mxu0 0
        %2535 = vmatprep.subr.bf16.mxu0 0
        %2536 = vmatpush1.bf16.xpose.msra.mxu0 0
        %2537 = vmatprep.subr.bf16.mxu0 0
        %2538 = vmatpush1.bf16.xpose.msra.mxu0 0
        %2539 = vmatprep.subr.bf16.mxu0 0
        %2540 = vmatpush1.bf16.xpose.msra.mxu0 %v2523
        %2541 = vmatprep.subr.bf16.mxu0 0
        %2542 = vmatpush2.bf16.xpose.msra.mxu0 0
        %2543 = vmatprep.subr.bf16.mxu0 0
        %2544 = vmatpush2.bf16.xpose.msra.mxu0 0
        %2545 = vmatprep.subr.bf16.mxu0 0
        %2546 = vmatpush2.bf16.xpose.msra.mxu0 0
        %2547 = vmatprep.subr.bf16.mxu0 0
        %2548 = vmatpush2.bf16.xpose.msra.mxu0 0
        %2549 = vmatprep.subr.bf16.mxu0 0
        %2550 = vmatpush2.bf16.xpose.msra.mxu0 0
        %2551 = vmatprep.subr.bf16.mxu0 0
        %2552 = vmatpush2.bf16.xpose.msra.mxu0 0
        %2553 = vmatprep.subr.bf16.mxu0 0
        %2554 = vmatpush2.bf16.xpose.msra.mxu0 0
        %2555 = vmatprep.subr.bf16.mxu0 0
        %2556 = vmatpush2.bf16.xpose.msra.mxu0 0
        %2557 = vmatprep.mubr.bf16.mxu0 0
        %2558 = vmatmul.mubr.bf16.gmra.mxu0 %v2520
        %v2559 = vpop.f32.mrf.mxu0
        %v2560 = vadd.f32 %v2032, %v2559
        %v2561 = vpop.f32.mrf.mxu0
        %v2562 = vpop.f32.mrf.mxu0
        %v2563 = vpop.f32.mrf.mxu0
        %2564 = vdwg.mxu0
        %v2565 = vsel %vm1762, %v2510, -inf
        %2566 = vmax.xlane.f32.xlu0 %v2565
        %v2567 = vpop.xlane.xlu0 %2566
        %v2568 = vsel %vm1762, %v2560, -inf
        %2569 = vmax.xlane.f32.xlu0 %v2568
        %v2570 = vpop.xlane.xlu0 %2569
        %v2571 = vsub.f32 %v2510, %v2567
        %v2572 = vsub.f32 %v2560, %v2570
        %v2573 = vmul.f32 %v2571, 1.442695
        %v2574 = vpow.pop %v2573
        %v2575 = vmul.f32 %v2572, 1.442695
        %v2576 = vpow.pop %v2575
        %v2577 = vsel %vm1762, %v2574, 0.0
        %2578 = vadd.xlane.f32.xlu0 %v2577
        %v2579 = vpop.xlane.xlu0 %2578
        %v2580 = vsel %vm1762, %v2576, 0.0
        %2581 = vadd.xlane.f32.xlu0 %v2580
        %v2582 = vpop.xlane.xlu0 %2581
        %v2583 = vrcp.pop %v2579
        %v2584 = vrcp.pop %v2582
        %v2585 = vmul.f32 %v2574, %v2583
        %v2586 = vmul.f32 %v2576, %v2584
        %v2587 = vpack.c.bf16 %v2585, %v2585
        %v2588 = vpack.c.bf16 %v2586, %v2586
        %2589 = vrot.lane.b32.xlu0 %v2035, 80
        %v2590 = vpop.permute.xlu0 %2589
        %v2593 = vsel %vm1762, %v2587, 0
        %2595 = vmatprep.subr.bf16.mxu0 0
        %2596 = vmatpush1.bf16.msra.mxu0 0
        %2597 = vmatprep.subr.bf16.mxu0 0
        %2598 = vmatpush1.bf16.msra.mxu0 0
        %2599 = vmatprep.subr.bf16.mxu0 0
        %2600 = vmatpush1.bf16.msra.mxu0 0
        %2601 = vmatprep.subr.bf16.mxu0 0
        %2602 = vmatpush1.bf16.msra.mxu0 0
        %2603 = vmatprep.subr.bf16.mxu0 0
        %2604 = vmatpush1.bf16.msra.mxu0 0
        %2605 = vmatprep.subr.bf16.mxu0 0
        %2606 = vmatpush1.bf16.msra.mxu0 0
        %2607 = vmatprep.subr.bf16.mxu0 0
        %2608 = vmatpush1.bf16.msra.mxu0 0
        %2609 = vmatprep.subr.bf16.mxu0 0
        %2610 = vmatpush1.bf16.msra.mxu0 %v2590
        %2611 = vmatprep.subr.bf16.mxu0 0
        %2612 = vmatpush2.bf16.msra.mxu0 0
        %2613 = vmatprep.subr.bf16.mxu0 0
        %2614 = vmatpush2.bf16.msra.mxu0 0
        %2615 = vmatprep.subr.bf16.mxu0 0
        %2616 = vmatpush2.bf16.msra.mxu0 0
        %2617 = vmatprep.subr.bf16.mxu0 0
        %2618 = vmatpush2.bf16.msra.mxu0 0
        %2619 = vmatprep.subr.bf16.mxu0 0
        %2620 = vmatpush2.bf16.msra.mxu0 0
        %2621 = vmatprep.subr.bf16.mxu0 0
        %2622 = vmatpush2.bf16.msra.mxu0 0
        %2623 = vmatprep.subr.bf16.mxu0 0
        %2624 = vmatpush2.bf16.msra.mxu0 0
        %2625 = vmatprep.subr.bf16.mxu0 0
        %2626 = vmatpush2.bf16.msra.mxu0 0
        %2627 = vmatprep.mubr.bf16.mxu0 0
        %2628 = vmatmul.mubr.bf16.gmra.mxu0 %v2593
        %v2629 = vpop.f32.mrf.mxu0
        %v2630 = vadd.f32 0.0, %v2629
        %v2631 = vpop.f32.mrf.mxu0
        %v2632 = vpop.f32.mrf.mxu0
        %v2633 = vpop.f32.mrf.mxu0
        %2634 = vdwg.mxu0
        %2635 = vrot.lane.b32.xlu0 %v2036, 80
        %v2636 = vpop.permute.xlu0 %2635
        %v2639 = vsel %vm1762, %v2588, 0
        %2641 = vmatprep.subr.bf16.mxu0 0
        %2642 = vmatpush1.bf16.msra.mxu0 0
        %2643 = vmatprep.subr.bf16.mxu0 0
        %2644 = vmatpush1.bf16.msra.mxu0 0
        %2645 = vmatprep.subr.bf16.mxu0 0
        %2646 = vmatpush1.bf16.msra.mxu0 0
        %2647 = vmatprep.subr.bf16.mxu0 0
        %2648 = vmatpush1.bf16.msra.mxu0 0
        %2649 = vmatprep.subr.bf16.mxu0 0
        %2650 = vmatpush1.bf16.msra.mxu0 0
        %2651 = vmatprep.subr.bf16.mxu0 0
        %2652 = vmatpush1.bf16.msra.mxu0 0
        %2653 = vmatprep.subr.bf16.mxu0 0
        %2654 = vmatpush1.bf16.msra.mxu0 0
        %2655 = vmatprep.subr.bf16.mxu0 0
        %2656 = vmatpush1.bf16.msra.mxu0 %v2636
        %2657 = vmatprep.subr.bf16.mxu0 0
        %2658 = vmatpush2.bf16.msra.mxu0 0
        %2659 = vmatprep.subr.bf16.mxu0 0
        %2660 = vmatpush2.bf16.msra.mxu0 0
        %2661 = vmatprep.subr.bf16.mxu0 0
        %2662 = vmatpush2.bf16.msra.mxu0 0
        %2663 = vmatprep.subr.bf16.mxu0 0
        %2664 = vmatpush2.bf16.msra.mxu0 0
        %2665 = vmatprep.subr.bf16.mxu0 0
        %2666 = vmatpush2.bf16.msra.mxu0 0
        %2667 = vmatprep.subr.bf16.mxu0 0
        %2668 = vmatpush2.bf16.msra.mxu0 0
        %2669 = vmatprep.subr.bf16.mxu0 0
        %2670 = vmatpush2.bf16.msra.mxu0 0
        %2671 = vmatprep.subr.bf16.mxu0 0
        %2672 = vmatpush2.bf16.msra.mxu0 0
        %2673 = vmatprep.mubr.bf16.mxu0 0
        %2674 = vmatmul.mubr.bf16.gmra.mxu0 %v2639
        %v2675 = vpop.f32.mrf.mxu0
        %v2676 = vadd.f32 0.0, %v2675
        %v2677 = vpop.f32.mrf.mxu0
        %v2678 = vpop.f32.mrf.mxu0
        %v2679 = vpop.f32.mrf.mxu0
        %2680 = vdwg.mxu0
        %2681 = vrot.lane.b32.xlu0 %v2033, 104
        %v2682 = vpop.permute.xlu0 %2681
        %2683 = vrot.lane.b32.xlu0 %v2035, 104
        %v2684 = vpop.permute.xlu0 %2683
        %v2686 = vsel %vm859, %v2682, 0
        %v2689 = vsel %vm859, %v2684, 0
        %2691 = vmatprep.subr.bf16.mxu0 0
        %2692 = vmatpush1.bf16.xpose.msra.mxu0 0
        %2693 = vmatprep.subr.bf16.mxu0 0
        %2694 = vmatpush1.bf16.xpose.msra.mxu0 0
        %2695 = vmatprep.subr.bf16.mxu0 0
        %2696 = vmatpush1.bf16.xpose.msra.mxu0 0
        %2697 = vmatprep.subr.bf16.mxu0 0
        %2698 = vmatpush1.bf16.xpose.msra.mxu0 0
        %2699 = vmatprep.subr.bf16.mxu0 0
        %2700 = vmatpush1.bf16.xpose.msra.mxu0 0
        %2701 = vmatprep.subr.bf16.mxu0 0
        %2702 = vmatpush1.bf16.xpose.msra.mxu0 0
        %2703 = vmatprep.subr.bf16.mxu0 0
        %2704 = vmatpush1.bf16.xpose.msra.mxu0 0
        %2705 = vmatprep.subr.bf16.mxu0 0
        %2706 = vmatpush1.bf16.xpose.msra.mxu0 %v2689
        %2707 = vmatprep.subr.bf16.mxu0 0
        %2708 = vmatpush2.bf16.xpose.msra.mxu0 0
        %2709 = vmatprep.subr.bf16.mxu0 0
        %2710 = vmatpush2.bf16.xpose.msra.mxu0 0
        %2711 = vmatprep.subr.bf16.mxu0 0
        %2712 = vmatpush2.bf16.xpose.msra.mxu0 0
        %2713 = vmatprep.subr.bf16.mxu0 0
        %2714 = vmatpush2.bf16.xpose.msra.mxu0 0
        %2715 = vmatprep.subr.bf16.mxu0 0
        %2716 = vmatpush2.bf16.xpose.msra.mxu0 0
        %2717 = vmatprep.subr.bf16.mxu0 0
        %2718 = vmatpush2.bf16.xpose.msra.mxu0 0
        %2719 = vmatprep.subr.bf16.mxu0 0
        %2720 = vmatpush2.bf16.xpose.msra.mxu0 0
        %2721 = vmatprep.subr.bf16.mxu0 0
        %2722 = vmatpush2.bf16.xpose.msra.mxu0 0
        %2723 = vmatprep.mubr.bf16.mxu0 0
        %2724 = vmatmul.mubr.bf16.gmra.mxu0 %v2686
        %v2725 = vpop.f32.mrf.mxu0
        %v2726 = vadd.f32 %v2031, %v2725
        %v2727 = vpop.f32.mrf.mxu0
        %v2728 = vpop.f32.mrf.mxu0
        %v2729 = vpop.f32.mrf.mxu0
        %2730 = vdwg.mxu0
        %2731 = vrot.lane.b32.xlu0 %v2034, 104
        %v2732 = vpop.permute.xlu0 %2731
        %2733 = vrot.lane.b32.xlu0 %v2036, 104
        %v2734 = vpop.permute.xlu0 %2733
        %v2736 = vsel %vm859, %v2732, 0
        %v2739 = vsel %vm859, %v2734, 0
        %2741 = vmatprep.subr.bf16.mxu0 0
        %2742 = vmatpush1.bf16.xpose.msra.mxu0 0
        %2743 = vmatprep.subr.bf16.mxu0 0
        %2744 = vmatpush1.bf16.xpose.msra.mxu0 0
        %2745 = vmatprep.subr.bf16.mxu0 0
        %2746 = vmatpush1.bf16.xpose.msra.mxu0 0
        %2747 = vmatprep.subr.bf16.mxu0 0
        %2748 = vmatpush1.bf16.xpose.msra.mxu0 0
        %2749 = vmatprep.subr.bf16.mxu0 0
        %2750 = vmatpush1.bf16.xpose.msra.mxu0 0
        %2751 = vmatprep.subr.bf16.mxu0 0
        %2752 = vmatpush1.bf16.xpose.msra.mxu0 0
        %2753 = vmatprep.subr.bf16.mxu0 0
        %2754 = vmatpush1.bf16.xpose.msra.mxu0 0
        %2755 = vmatprep.subr.bf16.mxu0 0
        %2756 = vmatpush1.bf16.xpose.msra.mxu0 %v2739
        %2757 = vmatprep.subr.bf16.mxu0 0
        %2758 = vmatpush2.bf16.xpose.msra.mxu0 0
        %2759 = vmatprep.subr.bf16.mxu0 0
        %2760 = vmatpush2.bf16.xpose.msra.mxu0 0
        %2761 = vmatprep.subr.bf16.mxu0 0
        %2762 = vmatpush2.bf16.xpose.msra.mxu0 0
        %2763 = vmatprep.subr.bf16.mxu0 0
        %2764 = vmatpush2.bf16.xpose.msra.mxu0 0
        %2765 = vmatprep.subr.bf16.mxu0 0
        %2766 = vmatpush2.bf16.xpose.msra.mxu0 0
        %2767 = vmatprep.subr.bf16.mxu0 0
        %2768 = vmatpush2.bf16.xpose.msra.mxu0 0
        %2769 = vmatprep.subr.bf16.mxu0 0
        %2770 = vmatpush2.bf16.xpose.msra.mxu0 0
        %2771 = vmatprep.subr.bf16.mxu0 0
        %2772 = vmatpush2.bf16.xpose.msra.mxu0 0
        %2773 = vmatprep.mubr.bf16.mxu0 0
        %2774 = vmatmul.mubr.bf16.gmra.mxu0 %v2736
        %v2775 = vpop.f32.mrf.mxu0
        %v2776 = vadd.f32 %v2032, %v2775
        %v2777 = vpop.f32.mrf.mxu0
        %v2778 = vpop.f32.mrf.mxu0
        %v2779 = vpop.f32.mrf.mxu0
        %2780 = vdwg.mxu0
        %v2781 = vsel %vm1762, %v2726, -inf
        %2782 = vmax.xlane.f32.xlu0 %v2781
        %v2783 = vpop.xlane.xlu0 %2782
        %v2784 = vsel %vm1762, %v2776, -inf
        %2785 = vmax.xlane.f32.xlu0 %v2784
        %v2786 = vpop.xlane.xlu0 %2785
        %v2787 = vsub.f32 %v2726, %v2783
        %v2788 = vsub.f32 %v2776, %v2786
        %v2789 = vmul.f32 %v2787, 1.442695
        %v2790 = vpow.pop %v2789
        %v2791 = vmul.f32 %v2788, 1.442695
        %v2792 = vpow.pop %v2791
        %v2793 = vsel %vm1762, %v2790, 0.0
        %2794 = vadd.xlane.f32.xlu0 %v2793
        %v2795 = vpop.xlane.xlu0 %2794
        %v2796 = vsel %vm1762, %v2792, 0.0
        %2797 = vadd.xlane.f32.xlu0 %v2796
        %v2798 = vpop.xlane.xlu0 %2797
        %v2799 = vrcp.pop %v2795
        %v2800 = vrcp.pop %v2798
        %v2801 = vmul.f32 %v2790, %v2799
        %v2802 = vmul.f32 %v2792, %v2800
        %v2803 = vpack.c.bf16 %v2801, %v2801
        %v2804 = vpack.c.bf16 %v2802, %v2802
        %2805 = vrot.lane.b32.xlu0 %v2035, 72
        %v2806 = vpop.permute.xlu0 %2805
        %v2809 = vsel %vm1762, %v2803, 0
        %2811 = vmatprep.subr.bf16.mxu0 0
        %2812 = vmatpush1.bf16.msra.mxu0 0
        %2813 = vmatprep.subr.bf16.mxu0 0
        %2814 = vmatpush1.bf16.msra.mxu0 0
        %2815 = vmatprep.subr.bf16.mxu0 0
        %2816 = vmatpush1.bf16.msra.mxu0 0
        %2817 = vmatprep.subr.bf16.mxu0 0
        %2818 = vmatpush1.bf16.msra.mxu0 0
        %2819 = vmatprep.subr.bf16.mxu0 0
        %2820 = vmatpush1.bf16.msra.mxu0 0
        %2821 = vmatprep.subr.bf16.mxu0 0
        %2822 = vmatpush1.bf16.msra.mxu0 0
        %2823 = vmatprep.subr.bf16.mxu0 0
        %2824 = vmatpush1.bf16.msra.mxu0 0
        %2825 = vmatprep.subr.bf16.mxu0 0
        %2826 = vmatpush1.bf16.msra.mxu0 %v2806
        %2827 = vmatprep.subr.bf16.mxu0 0
        %2828 = vmatpush2.bf16.msra.mxu0 0
        %2829 = vmatprep.subr.bf16.mxu0 0
        %2830 = vmatpush2.bf16.msra.mxu0 0
        %2831 = vmatprep.subr.bf16.mxu0 0
        %2832 = vmatpush2.bf16.msra.mxu0 0
        %2833 = vmatprep.subr.bf16.mxu0 0
        %2834 = vmatpush2.bf16.msra.mxu0 0
        %2835 = vmatprep.subr.bf16.mxu0 0
        %2836 = vmatpush2.bf16.msra.mxu0 0
        %2837 = vmatprep.subr.bf16.mxu0 0
        %2838 = vmatpush2.bf16.msra.mxu0 0
        %2839 = vmatprep.subr.bf16.mxu0 0
        %2840 = vmatpush2.bf16.msra.mxu0 0
        %2841 = vmatprep.subr.bf16.mxu0 0
        %2842 = vmatpush2.bf16.msra.mxu0 0
        %2843 = vmatprep.mubr.bf16.mxu0 0
        %2844 = vmatmul.mubr.bf16.gmra.mxu0 %v2809
        %v2845 = vpop.f32.mrf.mxu0
        %v2846 = vadd.f32 0.0, %v2845
        %v2847 = vpop.f32.mrf.mxu0
        %v2848 = vpop.f32.mrf.mxu0
        %v2849 = vpop.f32.mrf.mxu0
        %2850 = vdwg.mxu0
        %2851 = vrot.lane.b32.xlu0 %v2036, 72
        %v2852 = vpop.permute.xlu0 %2851
        %v2855 = vsel %vm1762, %v2804, 0
        %2857 = vmatprep.subr.bf16.mxu0 0
        %2858 = vmatpush1.bf16.msra.mxu0 0
        %2859 = vmatprep.subr.bf16.mxu0 0
        %2860 = vmatpush1.bf16.msra.mxu0 0
        %2861 = vmatprep.subr.bf16.mxu0 0
        %2862 = vmatpush1.bf16.msra.mxu0 0
        %2863 = vmatprep.subr.bf16.mxu0 0
        %2864 = vmatpush1.bf16.msra.mxu0 0
        %2865 = vmatprep.subr.bf16.mxu0 0
        %2866 = vmatpush1.bf16.msra.mxu0 0
        %2867 = vmatprep.subr.bf16.mxu0 0
        %2868 = vmatpush1.bf16.msra.mxu0 0
        %2869 = vmatprep.subr.bf16.mxu0 0
        %2870 = vmatpush1.bf16.msra.mxu0 0
        %2871 = vmatprep.subr.bf16.mxu0 0
        %2872 = vmatpush1.bf16.msra.mxu0 %v2852
        %2873 = vmatprep.subr.bf16.mxu0 0
        %2874 = vmatpush2.bf16.msra.mxu0 0
        %2875 = vmatprep.subr.bf16.mxu0 0
        %2876 = vmatpush2.bf16.msra.mxu0 0
        %2877 = vmatprep.subr.bf16.mxu0 0
        %2878 = vmatpush2.bf16.msra.mxu0 0
        %2879 = vmatprep.subr.bf16.mxu0 0
        %2880 = vmatpush2.bf16.msra.mxu0 0
        %2881 = vmatprep.subr.bf16.mxu0 0
        %2882 = vmatpush2.bf16.msra.mxu0 0
        %2883 = vmatprep.subr.bf16.mxu0 0
        %2884 = vmatpush2.bf16.msra.mxu0 0
        %2885 = vmatprep.subr.bf16.mxu0 0
        %2886 = vmatpush2.bf16.msra.mxu0 0
        %2887 = vmatprep.subr.bf16.mxu0 0
        %2888 = vmatpush2.bf16.msra.mxu0 0
        %2889 = vmatprep.mubr.bf16.mxu0 0
        %2890 = vmatmul.mubr.bf16.gmra.mxu0 %v2855
        %v2891 = vpop.f32.mrf.mxu0
        %v2892 = vadd.f32 0.0, %v2891
        %v2893 = vpop.f32.mrf.mxu0
        %v2894 = vpop.f32.mrf.mxu0
        %v2895 = vpop.f32.mrf.mxu0
        %2896 = vdwg.mxu0
        %2899 = vrot.lane.b32.xlu0 %v2414, 8
        %v2900 = vpop.permute.xlu0 %2899
        %2901 = vrot.lane.b32.xlu0 %v2460, 8
        %v2902 = vpop.permute.xlu0 %2901
        %2907 = vrot.lane.b32.xlu0 %v2630, 16
        %v2908 = vpop.permute.xlu0 %2907
        %2909 = vrot.lane.b32.xlu0 %v2676, 16
        %v2910 = vpop.permute.xlu0 %2909
        %2915 = vrot.lane.b32.xlu0 %v2846, 24
        %v2916 = vpop.permute.xlu0 %2915
        %2917 = vrot.lane.b32.xlu0 %v2892, 24
        %v2918 = vpop.permute.xlu0 %2917
        %v2921 = vsel %vm859, %v2195, %v2900
        %v2922 = vsel %vm859, %v2242, %v2902
        %v2923 = vsel %vm1762, %v2921, %v2908
        %v2924 = vsel %vm1762, %v2922, %v2910
        %v2925 = vsel %vm1765, %v2923, %v2916
        %v2926 = vsel %vm1765, %v2924, %v2918
        %v2927 = vpack.c.bf16 %v2926, %v2925
        %v2928 = vld [vmem:[%s749] sm:$0xf]
        %v2929 = vld [vmem:[%s749 + $0x4] sm:$0xf]
        %v2930 = vld [vmem:[%s749 + $0x8] sm:$0xf]
        %v2931 = vld [vmem:[%s749 + $0xc] sm:$0xf]
        %v2932 = vlaneseq
        %v2933 = vshrl.u32 %v2932, 7
        %v2934 = vsub.s32 4, %v2933
        %v2935 = vrot.slane %v781, %v2934
        %v2940 = vunpack.c.l.b16 %v2928
        %v2941 = vunpack.c.l.b16 %v2929
        %v2942 = vunpack.c.l.b16 %v2930
        %v2943 = vunpack.c.l.b16 %v2931
        %v2944 = vpack.c.b16 %v2941, %v2940
        %v2945 = vpack.c.b16 %v2943, %v2942
        %v2949 = vsel %vm807, %v2927, 0
        %2951 = vmatprep.subr.bf16.mxu0 0
        %2952 = vmatpush1.bf16.msra.mxu0 0
        %2953 = vmatprep.subr.bf16.mxu0 0
        %2954 = vmatpush1.bf16.msra.mxu0 0
        %2955 = vmatprep.subr.bf16.mxu0 0
        %2956 = vmatpush1.bf16.msra.mxu0 0
        %2957 = vmatprep.subr.bf16.mxu0 0
        %2958 = vmatpush1.bf16.msra.mxu0 0
        %2959 = vmatprep.subr.bf16.mxu0 0
        %2960 = vmatpush1.bf16.msra.mxu0 0
        %2961 = vmatprep.subr.bf16.mxu0 0
        %2962 = vmatpush1.bf16.msra.mxu0 0
        %2963 = vmatprep.subr.bf16.mxu0 0
        %2964 = vmatpush1.bf16.msra.mxu0 %v2945
        %2965 = vmatprep.subr.bf16.mxu0 0
        %2966 = vmatpush1.bf16.msra.mxu0 %v2944
        %2967 = vmatprep.subr.bf16.mxu0 0
        %2968 = vmatpush2.bf16.msra.mxu0 0
        %2969 = vmatprep.subr.bf16.mxu0 0
        %2970 = vmatpush2.bf16.msra.mxu0 0
        %2971 = vmatprep.subr.bf16.mxu0 0
        %2972 = vmatpush2.bf16.msra.mxu0 0
        %2973 = vmatprep.subr.bf16.mxu0 0
        %2974 = vmatpush2.bf16.msra.mxu0 0
        %2975 = vmatprep.subr.bf16.mxu0 0
        %2976 = vmatpush2.bf16.msra.mxu0 0
        %2977 = vmatprep.subr.bf16.mxu0 0
        %2978 = vmatpush2.bf16.msra.mxu0 0
        %2979 = vmatprep.subr.bf16.mxu0 0
        %2980 = vmatpush2.bf16.msra.mxu0 0
        %2981 = vmatprep.subr.bf16.mxu0 0
        %2982 = vmatpush2.bf16.msra.mxu0 0
        %2983 = vmatprep.mubr.bf16.mxu0 0
        %2984 = vmatmul.mubr.bf16.gmra.mxu0 %v2949
        %v2985 = vpop.f32.mrf.mxu0
        %v2986 = vadd.f32 %v2935, %v2985
        %v2987 = vpop.f32.mrf.mxu0
        %v2988 = vpop.f32.mrf.mxu0
        %v2989 = vadd.f32 %v2935, %v2988
        %v2990 = vpop.f32.mrf.mxu0
        %2991 = vdwg.mxu0
        %v2992 = vadd.f32 %v2986, %v1872
        %v2993 = vadd.f32 %v2989, %v1873
        %v2994 = vsel %vm807, %v2992, 0.0
        %2995 = vadd.xlane.f32.xlu0 %v2994
        %v2996 = vpop.xlane.xlu0 %2995
        %v2997 = vsel %vm807, %v2993, 0.0
        %2998 = vadd.xlane.f32.xlu0 %v2997
        %v2999 = vpop.xlane.xlu0 %2998
        %v3000 = vmul.f32 %v2996, %v1841
        %v3001 = vmul.f32 %v2999, %v1841
        %v3002 = vsub.f32 %v2992, %v3000
        %v3003 = vsub.f32 %v2993, %v3001
        %v3004 = vmul.f32 %v3002, %v3002
        %v3005 = vmul.f32 %v3003, %v3003
        %v3006 = vsel %vm807, %v3004, 0.0
        %3007 = vadd.xlane.f32.xlu0 %v3006
        %v3008 = vpop.xlane.xlu0 %3007
        %v3009 = vsel %vm807, %v3005, 0.0
        %3010 = vadd.xlane.f32.xlu0 %v3009
        %v3011 = vpop.xlane.xlu0 %3010
        %v3012 = vmul.f32 %v3008, %v1841
        %v3013 = vmul.f32 %v3011, %v1841
        %v3014 = vadd.f32 %v3012, 1e-05
        %v3015 = vadd.f32 %v3013, 1e-05
        %v3016 = vrsqrt.pop %v3014
        %v3017 = vrsqrt.pop %v3015
        %v3018 = vmul.f32 %v3002, %v3016
        %v3019 = vmul.f32 %v3003, %v3017
        %v3020 = vlaneseq
        %v3021 = vshrl.u32 %v3020, 7
        %v3022 = vsub.s32 5, %v3021
        %v3023 = vrot.slane %v781, %v3022
        %v3024 = vmul.f32 %v3018, %v3023
        %v3025 = vmul.f32 %v3019, %v3023
        %v3026 = vlaneseq
        %v3027 = vshrl.u32 %v3026, 7
        %v3028 = vsub.s32 6, %v3027
        %v3029 = vrot.slane %v781, %v3028
        %v3030 = vadd.f32 %v3024, %v3029
        %v3031 = vadd.f32 %v3025, %v3029
        %v3032 = vpack.c.bf16 %v3031, %v3030
        %v3033 = vld [vmem:[%s757] sm:$0x1]
        %v3034 = vld [vmem:[%s754] sm:$0xf]
        %v3035 = vld [vmem:[%s754 + $0x4] sm:$0xf]
        %v3036 = vld [vmem:[%s754 + $0x8] sm:$0xf]
        %v3037 = vld [vmem:[%s754 + $0xc] sm:$0xf]
        %v3039 = vlaneseq
        %v3040 = vshrl.u32 %v3039, 7
        %v3041 = vsub.s32 0, %v3040
        %v3042 = vrot.slane %v3033, %v3041
        %v3048 = vunpack.c.l.b16 %v3034
        %v3049 = vunpack.c.l.b16 %v3035
        %v3050 = vunpack.c.l.b16 %v3036
        %v3051 = vunpack.c.l.b16 %v3037
        %v3052 = vpack.c.b16 %v3049, %v3048
        %v3053 = vpack.c.b16 %v3051, %v3050
        %v3057 = vsel %vm807, %v3032, 0
        %3059 = vmatprep.subr.bf16.mxu0 0
        %3060 = vmatpush1.bf16.msra.mxu0 0
        %3061 = vmatprep.subr.bf16.mxu0 0
        %3062 = vmatpush1.bf16.msra.mxu0 0
        %3063 = vmatprep.subr.bf16.mxu0 0
        %3064 = vmatpush1.bf16.msra.mxu0 0
        %3065 = vmatprep.subr.bf16.mxu0 0
        %3066 = vmatpush1.bf16.msra.mxu0 0
        %3067 = vmatprep.subr.bf16.mxu0 0
        %3068 = vmatpush1.bf16.msra.mxu0 0
        %3069 = vmatprep.subr.bf16.mxu0 0
        %3070 = vmatpush1.bf16.msra.mxu0 0
        %3071 = vmatprep.subr.bf16.mxu0 0
        %3072 = vmatpush1.bf16.msra.mxu0 %v3053
        %3073 = vmatprep.subr.bf16.mxu0 0
        %3074 = vmatpush1.bf16.msra.mxu0 %v3052
        %3075 = vmatprep.subr.bf16.mxu0 0
        %3076 = vmatpush2.bf16.msra.mxu0 0
        %3077 = vmatprep.subr.bf16.mxu0 0
        %3078 = vmatpush2.bf16.msra.mxu0 0
        %3079 = vmatprep.subr.bf16.mxu0 0
        %3080 = vmatpush2.bf16.msra.mxu0 0
        %3081 = vmatprep.subr.bf16.mxu0 0
        %3082 = vmatpush2.bf16.msra.mxu0 0
        %3083 = vmatprep.subr.bf16.mxu0 0
        %3084 = vmatpush2.bf16.msra.mxu0 0
        %3085 = vmatprep.subr.bf16.mxu0 0
        %3086 = vmatpush2.bf16.msra.mxu0 0
        %3087 = vmatprep.subr.bf16.mxu0 0
        %3088 = vmatpush2.bf16.msra.mxu0 0
        %3089 = vmatprep.subr.bf16.mxu0 0
        %3090 = vmatpush2.bf16.msra.mxu0 0
        %3091 = vmatprep.mubr.bf16.mxu0 0
        %3092 = vmatmul.mubr.bf16.gmra.mxu0 %v3057
        %v3093 = vpop.f32.mrf.mxu0
        %v3094 = vadd.f32 %v3042, %v3093
        %v3095 = vpop.f32.mrf.mxu0
        %v3096 = vpop.f32.mrf.mxu0
        %v3097 = vadd.f32 %v3042, %v3096
        %v3098 = vpop.f32.mrf.mxu0
        %3099 = vdwg.mxu0
        %v3100 = vmax.f32 %v3094, 0.0
        %v3101 = vmax.f32 %v3097, 0.0
        %v3102 = vpack.c.bf16 %v3101, %v3100
        %v3103 = vld [vmem:[%s762] sm:$0xf]
        %v3104 = vld [vmem:[%s762 + $0x4] sm:$0xf]
        %v3105 = vld [vmem:[%s762 + $0x8] sm:$0xf]
        %v3106 = vld [vmem:[%s762 + $0xc] sm:$0xf]
        %v3107 = vld [vmem:[%s762 + $0x10] sm:$0xf]
        %v3108 = vld [vmem:[%s762 + $0x14] sm:$0xf]
        %v3109 = vld [vmem:[%s762 + $0x18] sm:$0xf]
        %v3110 = vld [vmem:[%s762 + $0x1c] sm:$0xf]
        %v3111 = vlaneseq
        %v3112 = vshrl.u32 %v3111, 7
        %v3113 = vsub.s32 7, %v3112
        %v3114 = vrot.slane %v781, %v3113
        %v3123 = vunpack.c.l.b16 %v3103
        %v3124 = vunpack.c.l.b16 %v3104
        %v3125 = vunpack.c.l.b16 %v3105
        %v3126 = vunpack.c.l.b16 %v3106
        %v3127 = vunpack.c.l.b16 %v3107
        %v3128 = vunpack.c.l.b16 %v3108
        %v3129 = vunpack.c.l.b16 %v3109
        %v3130 = vunpack.c.l.b16 %v3110
        %v3131 = vpack.c.b16 %v3124, %v3123
        %v3132 = vpack.c.b16 %v3126, %v3125
        %v3133 = vpack.c.b16 %v3128, %v3127
        %v3134 = vpack.c.b16 %v3130, %v3129
        %vm3139 = vcmask 523264
        %v3141 = vsel %vm3139, %v3102, 0
        %3143 = vmatprep.subr.bf16.mxu0 0
        %3144 = vmatpush1.bf16.msra.mxu0 0
        %3145 = vmatprep.subr.bf16.mxu0 0
        %3146 = vmatpush1.bf16.msra.mxu0 0
        %3147 = vmatprep.subr.bf16.mxu0 0
        %3148 = vmatpush1.bf16.msra.mxu0 0
        %3149 = vmatprep.subr.bf16.mxu0 0
        %3150 = vmatpush1.bf16.msra.mxu0 0
        %3151 = vmatprep.subr.bf16.mxu0 0
        %3152 = vmatpush1.bf16.msra.mxu0 %v3134
        %3153 = vmatprep.subr.bf16.mxu0 0
        %3154 = vmatpush1.bf16.msra.mxu0 %v3133
        %3155 = vmatprep.subr.bf16.mxu0 0
        %3156 = vmatpush1.bf16.msra.mxu0 %v3132
        %3157 = vmatprep.subr.bf16.mxu0 0
        %3158 = vmatpush1.bf16.msra.mxu0 %v3131
        %3159 = vmatprep.subr.bf16.mxu0 0
        %3160 = vmatpush2.bf16.msra.mxu0 0
        %3161 = vmatprep.subr.bf16.mxu0 0
        %3162 = vmatpush2.bf16.msra.mxu0 0
        %3163 = vmatprep.subr.bf16.mxu0 0
        %3164 = vmatpush2.bf16.msra.mxu0 0
        %3165 = vmatprep.subr.bf16.mxu0 0
        %3166 = vmatpush2.bf16.msra.mxu0 0
        %3167 = vmatprep.subr.bf16.mxu0 0
        %3168 = vmatpush2.bf16.msra.mxu0 0
        %3169 = vmatprep.subr.bf16.mxu0 0
        %3170 = vmatpush2.bf16.msra.mxu0 0
        %3171 = vmatprep.subr.bf16.mxu0 0
        %3172 = vmatpush2.bf16.msra.mxu0 0
        %3173 = vmatprep.subr.bf16.mxu0 0
        %3174 = vmatpush2.bf16.msra.mxu0 0
        %3175 = vmatprep.mubr.bf16.mxu0 0
        %3176 = vmatmul.mubr.bf16.gmra.mxu0 %v3141
        %v3177 = vpop.f32.mrf.mxu0
        %v3178 = vadd.f32 %v3114, %v3177
        %v3179 = vpop.f32.mrf.mxu0
        %v3180 = vpop.f32.mrf.mxu0
        %v3181 = vadd.f32 %v3114, %v3180
        %v3182 = vpop.f32.mrf.mxu0
        %3183 = vdwg.mxu0
        %v3184 = vadd.f32 %v3178, %v3030
        %v3185 = vadd.f32 %v3181, %v3031
        %v3186 = vsel %vm807, %v3184, 0.0
        %3187 = vadd.xlane.f32.xlu0 %v3186
        %v3188 = vpop.xlane.xlu0 %3187
        %v3189 = vsel %vm807, %v3185, 0.0
        %3190 = vadd.xlane.f32.xlu0 %v3189
        %v3191 = vpop.xlane.xlu0 %3190
        %v3192 = vmul.f32 %v3188, %v1841
        %v3193 = vmul.f32 %v3191, %v1841
        %v3194 = vsub.f32 %v3184, %v3192
        %v3195 = vsub.f32 %v3185, %v3193
        %v3196 = vmul.f32 %v3194, %v3194
        %v3197 = vmul.f32 %v3195, %v3195
        %v3198 = vsel %vm807, %v3196, 0.0
        %3199 = vadd.xlane.f32.xlu0 %v3198
        %v3200 = vpop.xlane.xlu0 %3199
        %v3201 = vsel %vm807, %v3197, 0.0
        %3202 = vadd.xlane.f32.xlu0 %v3201
        %v3203 = vpop.xlane.xlu0 %3202
        %v3204 = vmul.f32 %v3200, %v1841
        %v3205 = vmul.f32 %v3203, %v1841
        %v3206 = vadd.f32 %v3204, 1e-05
        %v3207 = vadd.f32 %v3205, 1e-05
        %v3208 = vrsqrt.pop %v3206
        %v3209 = vrsqrt.pop %v3207
        %v3210 = vmul.f32 %v3194, %v3208
        %v3211 = vmul.f32 %v3195, %v3209
        %v3212 = vlaneseq
        %v3213 = vshrl.u32 %v3212, 7
        %v3214 = vsub.s32 0, %v3213
        %v3215 = vrot.slane %v782, %v3214
        %v3216 = vmul.f32 %v3210, %v3215
        %v3217 = vmul.f32 %v3211, %v3215
        %v3218 = vlaneseq
        %v3219 = vshrl.u32 %v3218, 7
        %v3220 = vsub.s32 1, %v3219
        %v3221 = vrot.slane %v782, %v3220
        %v3222 = vadd.f32 %v3216, %v3221
        %v3223 = vadd.f32 %v3217, %v3221
        %3224 = vst.msk [vmem:[#allocation2] sm:$0xff] %vm807, %v3222
        %3225 = vst.msk [vmem:[#allocation2 + $0x8] sm:$0xff] %vm807, %v3223
        // Predicated region
        $region85: #{decoder_forward.1} parent=79 // pred_check
          %p3226 = pneg %p447
        $region86: #{decoder_forward.1} parent=79 // pred_check_branch
          %3228 = sbr.rel (%p3226) target = $region88
        $region87: #{decoder_forward.1} parent=79 // pred_region
          %s3229 = smul.u32 2, %s31
          %s3231 = ssub.s32 256, 256
          %3232 = vsyncadd [#allocation3], %s3231
          %s3233 = smul.addr %s3229, 128
          %s3234 = scalar_lea.hbm %s15, %s3233
          %s3235 = sshll.u32 [#allocation2], 4
          %s3236 = int_to_ptr.vmem [resolvable:$true] %s3235
          %3241 = dma.vmem_to_hbm [thread:$0]  %s3236, 256, %s3234, [#allocation3], 128, 128, 8
        $region88: #{decoder_forward.1} parent=79 // pred_fallthru
          _
        // Predicated region
        $region89: #{decoder_forward.1} parent=79 // pred_check
          %p3242 = pneg %p447
        $region90: #{decoder_forward.1} parent=79 // pred_check_branch
          %3244 = sbr.rel (%p3242) target = $region92
        $region91: #{decoder_forward.1} parent=79 // pred_region
          %3245 = dma.done [#allocation3], 256
        $region92: #{decoder_forward.1} parent=79 // pred_fallthru
          _
      $region80: #{decoder_forward.1} parent=5 // pred_fallthru
        _
      %p3246 = scmp.le.s32.totalorder 2, %s22
      // Predicated region
      $region93: #{decoder_forward.1} parent=5 // pred_check
        %p3247 = pneg %p3246
      $region94: #{decoder_forward.1} parent=5 // pred_check_branch
        %3249 = sbr.rel (%p3247) target = $region96
      $region95: #{decoder_forward.1} parent=5 // pred_region
        %s3250 = ssub.s32 %s22, 2
      $region96: #{decoder_forward.1} parent=5 // pred_fallthru
        _
    $region6: #{decoder_forward.1} parent=1 // loop_footer
      %s26 = sadd.s32 1, %s22
    $region7: #{decoder_forward.1} parent=1 // loop_footer_branch
      %21 = sbr.rel target = $region3
    $region8: #{decoder_forward.1} parent=1 // loop_exit
      _
    %3251 = vsyncpa [#allocation3], 1
    %s3252 = scalar_lea.sflag [#allocation3], 1
    %3253 = vsyncpa %s3252, 1

</llo_original>
